<compile_context>
chip_gen: v6e
topology: v6e:2x2x1
jax: 0.10.0
libtpu: 0.0.40
codegen_flags: <defaults>
</compile_context>

<pallas_src>
import jax
import jax.numpy as jnp
from jax import lax
from jax.experimental import pallas as pl
from jax.experimental.pallas import tpu as pltpu
import numpy as np


# ----------------------------------------------------------------------------
# Fused kernel: 3 GEMMs + elementwise + one cross-sublane reduce per batch tile.
# ----------------------------------------------------------------------------
def big2cnn_kernel(x_ref, wa_ref, wconv_ref, bconv_ref, wcat_ref,
                   bf1_ref, wf2_ref, bf2_ref, out_ref):
    """Big2CNN forward for one batch tile (batch on the lane axis).

    x_ref    : (260, TB)   bf16, row = h*65 + w*5 + c
    wa_ref   : (128, 260)  bf16, fc1 weight cols permuted to x row order
    wconv_ref: (1568, 260) bf16, block-structured conv1+conv2 weight
               (rows 0..415 = conv1 (w, out_ch); rows 416..1567 = conv2 (pos, out_ch))
    bconv_ref: (1568, 1)   f32, per-row conv bias
    wcat_ref : (128, 1568) bf16, fc1 weight cols permuted to the conv row order
    bf1/wf2/bf2 : f32 fc1 bias, fc2 weight, fc2 bias
    out_ref  : (1, TB)     f32 (lane-dense; wrapper transposes to (B, 1))
    """
    x = x_ref[...]                                                         # bf16
    # Stage 1: fc1's x-term and every conv pre-activation as dense GEMMs.
    hpre_x = jnp.dot(wa_ref[...], x, preferred_element_type=jnp.float32)   # (128, TB)
    conv_pre = jnp.dot(wconv_ref[...], x,
                       preferred_element_type=jnp.float32)                 # (1568, TB)
    conv_act = jnp.maximum(conv_pre + bconv_ref[...], 0.0).astype(jnp.bfloat16)
    # Stage 2: fc1's conv-term, then bias + ReLU (f32 on the VPU).
    hpre = hpre_x + jnp.dot(wcat_ref[...], conv_act,
                            preferred_element_type=jnp.float32)            # (128, TB)
    hidden = jnp.maximum(hpre + bf1_ref[...], 0.0)
    # fc2 (128 -> 1): VPU multiply + XLU cross-sublane reduce, lane-dense store.
    out_ref[...] = (jnp.sum(hidden * wf2_ref[...], axis=0, keepdims=True)
                    + bf2_ref[...])


# ----------------------------------------------------------------------------
# One-time weight re-layout (cacheable): fold both convs and PyTorch's
# flatten/concat ordering into dense, pre-permuted GEMM weights.
# ----------------------------------------------------------------------------
def _prepare_params(params):
    w_c1, b_c1, w_c2, b_c2, w_f1, b_f1, w_f2, b_f2 = params
    f32, bf16 = jnp.float32, jnp.bfloat16

    # conv1 weight: one (32, 5) (out, in) slab per kernel-height tap.
    w1s = jnp.transpose(w_c1.astype(f32).reshape(32, 5, 4), (2, 0, 1))      # (4,32,5)
    # conv2 weight with taps in (kw, c) order.
    w2t = jnp.transpose(w_c2.astype(f32).reshape(32, 5, 5), (0, 2, 1)).reshape(32, 25)

    # Block-structured conv weight acting on x rows (row = h*65 + w*5 + c):
    #   rows    0..415 : conv1 outputs, row = w*32 + o        (13 width positions)
    #   rows 416..1567 : conv2 outputs, row = 416 + p*32 + o  (p = h*9 + wo)
    wconv = jnp.zeros((1568, 260), f32)
    for w in range(13):                       # conv1: kernel (4,1)
        for h in range(4):
            wconv = wconv.at[w * 32:(w + 1) * 32,
                             h * 65 + w * 5: h * 65 + w * 5 + 5].set(w1s[h])
    for h in range(4):                        # conv2: kernel (1,5)
        for wo in range(9):
            p = h * 9 + wo
            c0 = (h * 13 + wo) * 5
            wconv = wconv.at[416 + p * 32: 416 + (p + 1) * 32, c0:c0 + 25].set(w2t)
    bconv = jnp.concatenate([jnp.tile(b_c1.astype(f32), 13),
                             jnp.tile(b_c2.astype(f32), 36)]).reshape(1568, 1)

    # fc1 weight split into the three concat pieces, columns permuted to the
    # kernel's row orders:
    #   x rows     : (h, w, c)       PyTorch flatten: (c, h, w)
    #   conv1 rows : (w, out_ch)     PyTorch flatten: (out_ch, w)
    #   conv2 rows : (p, out_ch)     PyTorch flatten: (out_ch, p)
    wf1 = w_f1.astype(f32)
    wa = jnp.transpose(wf1[:, :260].reshape(128, 5, 4, 13),
                       (0, 2, 3, 1)).reshape(128, 260)
    wb = jnp.transpose(wf1[:, 260:676].reshape(128, 32, 13),
                       (0, 2, 1)).reshape(128, 416)
    wc = jnp.transpose(wf1[:, 676:1828].reshape(128, 32, 36),
                       (0, 2, 1)).reshape(128, 1152)
    wcat = jnp.concatenate([wb, wc], axis=1)                                # (128, 1568)

    return (wa.astype(bf16), wconv.astype(bf16), bconv, wcat.astype(bf16),
            b_f1.astype(f32).reshape(128, 1),
            w_f2.astype(f32).reshape(128, 1),
            b_f2.astype(f32).reshape(1, 1))


def _choose_tile(batch):
    """Lane tile (multiple of 128): big enough to amortize per-step overhead,
    small enough that B >= 256 gives >= 2 grid tiles (both v7x TensorCores)."""
    if batch <= 128:
        return 128
    half = -(-batch // 2)
    return min(512, ((half + 127) // 128) * 128)


def big2cnn_forward(x, params):
    if x.ndim == 3:                  # mirrors `if x.shape == (5,4,13): unsqueeze(0)`
        x = x[None]
    x = x.astype(jnp.float32)
    B = x.shape[0]
    assert x.shape[1:] == (5, 4, 13)

    wa, wconv, bconv, wcat, bf1, wf2, bf2 = _prepare_params(params)

    TB = _choose_tile(B)
    n_tiles = -(-B // TB)
    B_pad = n_tiles * TB

    # x re-layout: (B,5,4,13) -> rows in (h,w,c) order, batch on lanes, one
    # contiguous (260, TB) slab per grid tile; MXU operand in bf16.
    x_t = jnp.transpose(x, (2, 3, 1, 0)).reshape(260, B)
    x_t = jnp.pad(x_t, ((0, 0), (0, B_pad - B)))
    x_t = jnp.transpose(x_t.reshape(260, n_tiles, TB), (1, 0, 2)).astype(jnp.bfloat16)

    def const(shape):                # resident weights: same block every step
        return pl.BlockSpec(shape, lambda *_: (0,) * len(shape))

    out_t = pl.pallas_call(
        big2cnn_kernel,
        out_shape=jax.ShapeDtypeStruct((1, B_pad), jnp.float32),
        grid=(n_tiles,),
        in_specs=[
            pl.BlockSpec((None, 260, TB), lambda i: (i, 0, 0)),   # x batch tile
            const((128, 260)),                                    # wa   (fc1 | x)
            const((1568, 260)), const((1568, 1)),                 # conv weight / bias
            const((128, 1568)),                                   # wcat (fc1 | convs)
            const((128, 1)),                                      # fc1 bias
            const((128, 1)), const((1, 1)),                       # fc2 weight / bias
        ],
        out_specs=pl.BlockSpec((1, TB), lambda i: (0, i)),
        compiler_params=pltpu.CompilerParams(
            dimension_semantics=("parallel",)),
    )(x_t, wa, wconv, bconv, wcat, bf1, wf2, bf2)

    return out_t[:, :B].T                                          # (B, 1)


# ----------------------------------------------------------------------------
# Pure-JAX reference (mirrors the PyTorch forward exactly, f32 throughout).
# ----------------------------------------------------------------------------
def big2cnn_reference(x, params):
    if x.ndim == 3:
        x = x[None]
    B = x.shape[0]
    w_c1, b_c1, w_c2, b_c2, w_f1, b_f1, w_f2, b_f2 = params
    dn = ('NCHW', 'OIHW', 'NCHW')
    c1 = lax.conv_general_dilated(x, w_c1, (1, 1), 'VALID', dimension_numbers=dn)
    c1 = jnp.maximum(c1 + b_c1[None, :, None, None], 0.0).reshape(B, -1)
    c2 = lax.conv_general_dilated(x, w_c2, (1, 1), 'VALID', dimension_numbers=dn)
    c2 = jnp.maximum(c2 + b_c2[None, :, None, None], 0.0).reshape(B, -1)
    feat = jnp.concatenate([x.reshape(B, -1), c1, c2], axis=1)
    h = jnp.maximum(feat @ w_f1.T + b_f1, 0.0)
    return h @ w_f2.T + b_f2


# ----------------------------------------------------------------------------
def init_params(key):
    ks = jax.random.split(key, 8)
    s = 0.1
    w_c1 = jax.random.normal(ks[0], (32, 5, 4, 1), jnp.float32) * s
    b_c1 = jax.random.normal(ks[1], (32,), jnp.float32) * s
    w_c2 = jax.random.normal(ks[2], (32, 5, 1, 5), jnp.float32) * s
    b_c2 = jax.random.normal(ks[3], (32,), jnp.float32) * s
    in_f = 32 * 1 * 13 + 32 * 4 * 9 + 5 * 4 * 13                    # 1828
    w_f1 = jax.random.normal(ks[4], (128, in_f), jnp.float32) * s * 0.1
    b_f1 = jax.random.normal(ks[5], (128,), jnp.float32) * s
    w_f2 = jax.random.normal(ks[6], (1, 128), jnp.float32) * s
    b_f2 = jax.random.normal(ks[7], (1,), jnp.float32) * s
    return (w_c1, b_c1, w_c2, b_c2, w_f1, b_f1, w_f2, b_f2)


if __name__ == "__main__":
    key = jax.random.PRNGKey(0)
    pkey, xkey = jax.random.split(key)
    params = init_params(pkey)
    # Input fixed by the architecture: (batch, 5 channels, 4, 13).
    x = jax.random.normal(xkey, (2, 5, 4, 13), jnp.float32)

    out = jax.block_until_ready(big2cnn_forward(x, params))
    ref = jax.block_until_ready(big2cnn_reference(x, params))

    assert out.shape == (2, 1), out.shape
    # bf16 MXU operands (f32 accumulate) -> looser tolerance than pure-f32.
    np.testing.assert_allclose(np.asarray(out), np.asarray(ref),
                               rtol=2e-2, atol=2e-2)
    print("KERNEL_OK")
</pallas_src>

<mosaic_0001>
module attributes {stable_mosaic.version = 11 : i64} {
  func.func @big2cnn_kernel(%arg0: i32, %arg1: memref<1x260x128xbf16, #tpu.memory_space<vmem>>, %arg2: memref<128x260xbf16, #tpu.memory_space<vmem>>, %arg3: memref<1568x260xbf16, #tpu.memory_space<vmem>>, %arg4: memref<1568x1xf32, #tpu.memory_space<vmem>>, %arg5: memref<128x1568xbf16, #tpu.memory_space<vmem>>, %arg6: memref<128x1xf32, #tpu.memory_space<vmem>>, %arg7: memref<128x1xf32, #tpu.memory_space<vmem>>, %arg8: memref<1x1xf32, #tpu.memory_space<vmem>>, %arg9: memref<1x128xf32, #tpu.memory_space<vmem>>) attributes {dimension_semantics = [#tpu.dimension_semantics<parallel>], iteration_bounds = array<i64: 1>, scalar_prefetch = 0 : i64, scratch_operands = 0 : i64, tpu.core_type = #tpu.core_type<tc>, window_params = [{transform_indices = @transform_0, window_bounds = array<i64: 1, 260, 128>}, {pipeline_mode = #tpu.pipeline_mode<synchronous>, transform_indices = @transform_1, window_bounds = array<i64: 128, 260>}, {pipeline_mode = #tpu.pipeline_mode<synchronous>, transform_indices = @transform_2, window_bounds = array<i64: 1568, 260>}, {pipeline_mode = #tpu.pipeline_mode<synchronous>, transform_indices = @transform_3, window_bounds = array<i64: 1568, 1>}, {pipeline_mode = #tpu.pipeline_mode<synchronous>, transform_indices = @transform_4, window_bounds = array<i64: 128, 1568>}, {pipeline_mode = #tpu.pipeline_mode<synchronous>, transform_indices = @transform_5, window_bounds = array<i64: 128, 1>}, {pipeline_mode = #tpu.pipeline_mode<synchronous>, transform_indices = @transform_6, window_bounds = array<i64: 128, 1>}, {pipeline_mode = #tpu.pipeline_mode<synchronous>, transform_indices = @transform_7, window_bounds = array<i64: 1, 1>}, {transform_indices = @transform_8, window_bounds = array<i64: 1, 128>}]} {
    %c0 = arith.constant 0 : index
    %c0_0 = arith.constant 0 : index
    %c0_1 = arith.constant 0 : index
    %0 = vector.load %arg1[%c0, %c0_0, %c0_1] : memref<1x260x128xbf16, #tpu.memory_space<vmem>>, vector<1x260x128xbf16>
    %1 = vector.shape_cast %0 : vector<1x260x128xbf16> to vector<260x128xbf16>
    %c0_2 = arith.constant 0 : index
    %c0_3 = arith.constant 0 : index
    %2 = vector.load %arg2[%c0_2, %c0_3] : memref<128x260xbf16, #tpu.memory_space<vmem>>, vector<128x260xbf16>
    %cst = arith.constant dense<0.000000e+00> : vector<128x128xf32>
    %3 = tpu.matmul %2, %1, %cst {dimension_numbers = #tpu.dot_dimension_numbers<[1], [0], [0], [1], [0, 0, 1, 1], [], []>} : vector<128x260xbf16>, vector<260x128xbf16>, vector<128x128xf32> -> vector<128x128xf32>
    %c0_4 = arith.constant 0 : index
    %c0_5 = arith.constant 0 : index
    %4 = vector.load %arg3[%c0_4, %c0_5] : memref<1568x260xbf16, #tpu.memory_space<vmem>>, vector<1568x260xbf16>
    %cst_6 = arith.constant dense<0.000000e+00> : vector<1568x128xf32>
    %5 = tpu.matmul %4, %1, %cst_6 {dimension_numbers = #tpu.dot_dimension_numbers<[1], [0], [0], [1], [0, 0, 1, 1], [], []>} : vector<1568x260xbf16>, vector<260x128xbf16>, vector<1568x128xf32> -> vector<1568x128xf32>
    %c0_7 = arith.constant 0 : index
    %c0_8 = arith.constant 0 : index
    %6 = vector.load %arg4[%c0_7, %c0_8] : memref<1568x1xf32, #tpu.memory_space<vmem>>, vector<1568x1xf32>
    %7 = vector.broadcast %6 : vector<1568x1xf32> to vector<1568x128xf32>
    %8 = arith.addf %5, %7 : vector<1568x128xf32>
    %cst_9 = arith.constant 0.000000e+00 : f32
    %9 = vector.broadcast %cst_9 : f32 to vector<1568x128xf32>
    %10 = arith.maximumf %8, %9 : vector<1568x128xf32>
    %11 = arith.truncf %10 : vector<1568x128xf32> to vector<1568x128xbf16>
    %c0_10 = arith.constant 0 : index
    %c0_11 = arith.constant 0 : index
    %12 = vector.load %arg5[%c0_10, %c0_11] : memref<128x1568xbf16, #tpu.memory_space<vmem>>, vector<128x1568xbf16>
    %cst_12 = arith.constant dense<0.000000e+00> : vector<128x128xf32>
    %13 = tpu.matmul %12, %11, %cst_12 {dimension_numbers = #tpu.dot_dimension_numbers<[1], [0], [0], [1], [0, 0, 1, 1], [], []>} : vector<128x1568xbf16>, vector<1568x128xbf16>, vector<128x128xf32> -> vector<128x128xf32>
    %14 = arith.addf %3, %13 : vector<128x128xf32>
    %c0_13 = arith.constant 0 : index
    %c0_14 = arith.constant 0 : index
    %15 = vector.load %arg6[%c0_13, %c0_14] : memref<128x1xf32, #tpu.memory_space<vmem>>, vector<128x1xf32>
    %16 = vector.broadcast %15 : vector<128x1xf32> to vector<128x128xf32>
    %17 = arith.addf %14, %16 : vector<128x128xf32>
    %cst_15 = arith.constant 0.000000e+00 : f32
    %18 = vector.broadcast %cst_15 : f32 to vector<128x128xf32>
    %19 = arith.maximumf %17, %18 : vector<128x128xf32>
    %c0_16 = arith.constant 0 : index
    %c0_17 = arith.constant 0 : index
    %20 = vector.load %arg7[%c0_16, %c0_17] : memref<128x1xf32, #tpu.memory_space<vmem>>, vector<128x1xf32>
    %21 = vector.broadcast %20 : vector<128x1xf32> to vector<128x128xf32>
    %22 = arith.mulf %19, %21 : vector<128x128xf32>
    %cst_18 = arith.constant dense<0.000000e+00> : vector<128xf32>
    %23 = vector.multi_reduction <add>, %22, %cst_18 [0] : vector<128x128xf32> to vector<128xf32>
    %24 = vector.shape_cast %23 : vector<128xf32> to vector<1x128xf32>
    %c0_19 = arith.constant 0 : index
    %c0_20 = arith.constant 0 : index
    %25 = vector.load %arg8[%c0_19, %c0_20] : memref<1x1xf32, #tpu.memory_space<vmem>>, vector<1x1xf32>
    %26 = vector.broadcast %25 : vector<1x1xf32> to vector<1x128xf32>
    %27 = arith.addf %24, %26 : vector<1x128xf32>
    %c0_21 = arith.constant 0 : index
    %c0_22 = arith.constant 0 : index
    %28 = vector.load %arg9[%c0_21, %c0_22] : memref<1x128xf32, #tpu.memory_space<vmem>>, vector<1x128xf32>
    tpu.vector_store %arg9[%c0_21, %c0_22], %27 {strides = array<i32>} : memref<1x128xf32, #tpu.memory_space<vmem>>, vector<1x128xf32>,
    return
  }
  func.func @transform_0(%arg0: i32) -> (i32, i32, i32) {
    %c0_i32 = arith.constant 0 : i32
    %c0_i32_0 = arith.constant 0 : i32
    %c0_i32_1 = arith.constant 0 : i32
    return %arg0, %c0_i32, %c0_i32_0 : i32, i32, i32
  }
  func.func @transform_1(%arg0: i32) -> (i32, i32) {
    %c0_i32 = arith.constant 0 : i32
    %c0_i32_0 = arith.constant 0 : i32
    %c0_i32_1 = arith.constant 0 : i32
    return %c0_i32, %c0_i32_0 : i32, i32
  }
  func.func @transform_2(%arg0: i32) -> (i32, i32) {
    %c0_i32 = arith.constant 0 : i32
    %c0_i32_0 = arith.constant 0 : i32
    %c0_i32_1 = arith.constant 0 : i32
    return %c0_i32, %c0_i32_0 : i32, i32
  }
  func.func @transform_3(%arg0: i32) -> (i32, i32) {
    %c0_i32 = arith.constant 0 : i32
    %c0_i32_0 = arith.constant 0 : i32
    %c0_i32_1 = arith.constant 0 : i32
    return %c0_i32, %c0_i32_0 : i32, i32
  }
  func.func @transform_4(%arg0: i32) -> (i32, i32) {
    %c0_i32 = arith.constant 0 : i32
    %c0_i32_0 = arith.constant 0 : i32
    %c0_i32_1 = arith.constant 0 : i32
    return %c0_i32, %c0_i32_0 : i32, i32
  }
  func.func @transform_5(%arg0: i32) -> (i32, i32) {
    %c0_i32 = arith.constant 0 : i32
    %c0_i32_0 = arith.constant 0 : i32
    %c0_i32_1 = arith.constant 0 : i32
    return %c0_i32, %c0_i32_0 : i32, i32
  }
  func.func @transform_6(%arg0: i32) -> (i32, i32) {
    %c0_i32 = arith.constant 0 : i32
    %c0_i32_0 = arith.constant 0 : i32
    %c0_i32_1 = arith.constant 0 : i32
    return %c0_i32, %c0_i32_0 : i32, i32
  }
  func.func @transform_7(%arg0: i32) -> (i32, i32) {
    %c0_i32 = arith.constant 0 : i32
    %c0_i32_0 = arith.constant 0 : i32
    %c0_i32_1 = arith.constant 0 : i32
    return %c0_i32, %c0_i32_0 : i32, i32
  }
  func.func @transform_8(%arg0: i32) -> (i32, i32) {
    %c0_i32 = arith.constant 0 : i32
    %c0_i32_0 = arith.constant 0 : i32
    return %c0_i32, %arg0 : i32, i32
  }
}

</mosaic_0001>

<llo_original>
// kernel: tpu_custom_call.1
$region0: #{tpu_custom_call.1}
  #allocation0 [shape = 'u32[]', space=smem, size = 0x4, offset = 0x4, fixed_abs, tag = 'smem constant byte address 0x4 - core index']
  #allocation1 [shape = 'u32[144,128]{1,0:T(1,128)}', space=vmem, size = 0x12000, scoped, tag = 'internal scratch']
  #allocation2 [shape = 'f32[1,1]{1,0:T(1,128)S(1)}', space=vmem, size = 0x200, scoped, tag = 'scoped memory for tpu_custom_call.1']
  %s0 = inlined_call_operand.vmem [shape: bf16[1,260,128], index: 0, kind: input, shape index: {}]
  %s1 = inlined_call_operand.vmem [shape: bf16[128,260], index: 1, kind: input, shape index: {}]
  %s2 = inlined_call_operand.vmem [shape: bf16[1568,260], index: 2, kind: input, shape index: {}]
  %s3 = inlined_call_operand.vmem [shape: f32[1568,1], index: 3, kind: input, shape index: {}]
  %s4 = inlined_call_operand.vmem [shape: bf16[128,1568], index: 4, kind: input, shape index: {}]
  %s5 = inlined_call_operand.vmem [shape: f32[128,1], index: 5, kind: input, shape index: {}]
  %s6 = inlined_call_operand.vmem [shape: f32[128,1], index: 6, kind: input, shape index: {}]
  %s7 = inlined_call_operand.<no memory space> [shape: f32[1,1], index: 7, kind: input, shape index: {}]
  %s8 = inlined_call_operand.hbm [shape: f32[1,128], index: 8, kind: output, shape index: {}]
  %s9 = sld [smem:[#allocation0]]
  $region42: #{tpu_custom_call.1} parent=0
    _
  %s11 = ssub.s32 1, %s9
  %s12 = scalar_select 0, %s11, %s9
  %v13 = vstv %s7
  %14 = vst [vmem:[#allocation2] sm:$0x1] %v13
  $region1: #{tpu_custom_call.1} parent=0
    #allocation3 [shape = 'u8[512]{0}', space=vmem, size = 0x400, scoped, tag = 'output window, operand 0, single buffered']
    #allocation4 [shape = 's32[1]{0}', space=sflag, size = 0x4, scoped, tag = 'scoped memory for tpu_custom_call.1']
    %15 = vsyncpa [#allocation4], 0
    // Predicated region
    $region2: #{tpu_custom_call.1} parent=1 // pred_check
      _
    $region3: #{tpu_custom_call.1} parent=1 // pred_check_branch
      %17 = sbr.rel (0) target = $region5
    $region4: #{tpu_custom_call.1} parent=1 // pred_region
      _
    $region5: #{tpu_custom_call.1} parent=1 // pred_fallthru
      _
    // Predicated region
    $region6: #{tpu_custom_call.1} parent=1 // pred_check
      _
    $region7: #{tpu_custom_call.1} parent=1 // pred_check_branch
      %19 = sbr.rel (0) target = $region9
    $region8: #{tpu_custom_call.1} parent=1 // pred_region
      _
    $region9: #{tpu_custom_call.1} parent=1 // pred_fallthru
      _
    // Predicated region
    $region10: #{tpu_custom_call.1} parent=1 // pred_check
      _
    $region11: #{tpu_custom_call.1} parent=1 // pred_check_branch
      %21 = sbr.rel (0) target = $region13
    $region12: #{tpu_custom_call.1} parent=1 // pred_region
      _
    $region13: #{tpu_custom_call.1} parent=1 // pred_fallthru
      _
    // Predicated region
    $region14: #{tpu_custom_call.1} parent=1 // pred_check
      _
    $region15: #{tpu_custom_call.1} parent=1 // pred_check_branch
      %23 = sbr.rel (0) target = $region17
    $region16: #{tpu_custom_call.1} parent=1 // pred_region
      _
    $region17: #{tpu_custom_call.1} parent=1 // pred_fallthru
      _
    // Predicated region
    $region18: #{tpu_custom_call.1} parent=1 // pred_check
      _
    $region19: #{tpu_custom_call.1} parent=1 // pred_check_branch
      %25 = sbr.rel (0) target = $region21
    $region20: #{tpu_custom_call.1} parent=1 // pred_region
      _
    $region21: #{tpu_custom_call.1} parent=1 // pred_fallthru
      _
    // Predicated region
    $region22: #{tpu_custom_call.1} parent=1 // pred_check
      _
    $region23: #{tpu_custom_call.1} parent=1 // pred_check_branch
      %27 = sbr.rel (0) target = $region25
    $region24: #{tpu_custom_call.1} parent=1 // pred_region
      _
    $region25: #{tpu_custom_call.1} parent=1 // pred_fallthru
      _
    // Predicated region
    $region26: #{tpu_custom_call.1} parent=1 // pred_check
      _
    $region27: #{tpu_custom_call.1} parent=1 // pred_check_branch
      %29 = sbr.rel (0) target = $region29
    $region28: #{tpu_custom_call.1} parent=1 // pred_region
      _
    $region29: #{tpu_custom_call.1} parent=1 // pred_fallthru
      _
    // Predicated region
    $region30: #{tpu_custom_call.1} parent=1 // pred_check
      _
    $region31: #{tpu_custom_call.1} parent=1 // pred_check_branch
      %31 = sbr.rel (0) target = $region33
    $region32: #{tpu_custom_call.1} parent=1 // pred_region
      _
    $region33: #{tpu_custom_call.1} parent=1 // pred_fallthru
      _
    %v33 = vld [vmem:[%s0] sm:$0xf]
    %v34 = vld [vmem:[%s0 + $0x4] sm:$0xf]
    %v35 = vld [vmem:[%s0 + $0x8] sm:$0xf]
    %v36 = vld [vmem:[%s0 + $0xc] sm:$0xf]
    %v37 = vld [vmem:[%s0 + $0x10] sm:$0xf]
    %v38 = vld [vmem:[%s0 + $0x14] sm:$0xf]
    %v39 = vld [vmem:[%s0 + $0x18] sm:$0xf]
    %v40 = vld [vmem:[%s0 + $0x1c] sm:$0xf]
    %v41 = vld [vmem:[%s0 + $0x20] sm:$0xf]
    %v42 = vld [vmem:[%s0 + $0x24] sm:$0xf]
    %v43 = vld [vmem:[%s0 + $0x28] sm:$0xf]
    %v44 = vld [vmem:[%s0 + $0x2c] sm:$0xf]
    %v45 = vld [vmem:[%s0 + $0x30] sm:$0xf]
    %v46 = vld [vmem:[%s0 + $0x34] sm:$0xf]
    %v47 = vld [vmem:[%s0 + $0x38] sm:$0xf]
    %v48 = vld [vmem:[%s0 + $0x3c] sm:$0xf]
    %v49 = vld [vmem:[%s0 + $0x40] sm:$0xf]
    %v50 = vld [vmem:[%s0 + $0x44] sm:$0xf]
    %v51 = vld [vmem:[%s0 + $0x48] sm:$0xf]
    %v52 = vld [vmem:[%s0 + $0x4c] sm:$0xf]
    %v53 = vld [vmem:[%s0 + $0x50] sm:$0xf]
    %v54 = vld [vmem:[%s0 + $0x54] sm:$0xf]
    %v55 = vld [vmem:[%s0 + $0x58] sm:$0xf]
    %v56 = vld [vmem:[%s0 + $0x5c] sm:$0xf]
    %v57 = vld [vmem:[%s0 + $0x60] sm:$0xf]
    %v58 = vld [vmem:[%s0 + $0x64] sm:$0xf]
    %v59 = vld [vmem:[%s0 + $0x68] sm:$0xf]
    %v60 = vld [vmem:[%s0 + $0x6c] sm:$0xf]
    %v61 = vld [vmem:[%s0 + $0x70] sm:$0xf]
    %v62 = vld [vmem:[%s0 + $0x74] sm:$0xf]
    %v63 = vld [vmem:[%s0 + $0x78] sm:$0xf]
    %v64 = vld [vmem:[%s0 + $0x7c] sm:$0xf]
    %v65 = vld [vmem:[%s0 + $0x80] sm:$0x3]
    %v66 = vld [vmem:[%s1] sm:$0xff]
    %v67 = vld [vmem:[%s1 + $0x8] sm:$0xf]
    %v68 = vld [vmem:[%s1 + $0xc] sm:$0xff]
    %v69 = vld [vmem:[%s1 + $0x14] sm:$0xf]
    %v70 = vld [vmem:[%s1 + $0x18] sm:$0xff]
    %v71 = vld [vmem:[%s1 + $0x20] sm:$0xf]
    %v72 = vld [vmem:[%s1 + $0x24] sm:$0xff]
    %v73 = vld [vmem:[%s1 + $0x2c] sm:$0xf]
    %v74 = vld [vmem:[%s1 + $0x30] sm:$0xff]
    %v75 = vld [vmem:[%s1 + $0x38] sm:$0xf]
    %v76 = vld [vmem:[%s1 + $0x3c] sm:$0xff]
    %v77 = vld [vmem:[%s1 + $0x44] sm:$0xf]
    %v78 = vld [vmem:[%s1 + $0x48] sm:$0xff]
    %v79 = vld [vmem:[%s1 + $0x50] sm:$0xf]
    %v80 = vld [vmem:[%s1 + $0x54] sm:$0xff]
    %v81 = vld [vmem:[%s1 + $0x5c] sm:$0xf]
    %v82 = vld [vmem:[%s1 + $0x60] sm:$0xff]
    %v83 = vld [vmem:[%s1 + $0x68] sm:$0xf]
    %v84 = vld [vmem:[%s1 + $0x6c] sm:$0xff]
    %v85 = vld [vmem:[%s1 + $0x74] sm:$0xf]
    %v86 = vld [vmem:[%s1 + $0x78] sm:$0xff]
    %v87 = vld [vmem:[%s1 + $0x80] sm:$0xf]
    %v88 = vld [vmem:[%s1 + $0x84] sm:$0xff]
    %v89 = vld [vmem:[%s1 + $0x8c] sm:$0xf]
    %v90 = vld [vmem:[%s1 + $0x90] sm:$0xff]
    %v91 = vld [vmem:[%s1 + $0x98] sm:$0xf]
    %v92 = vld [vmem:[%s1 + $0x9c] sm:$0xff]
    %v93 = vld [vmem:[%s1 + $0xa4] sm:$0xf]
    %v94 = vld [vmem:[%s1 + $0xa8] sm:$0xff]
    %v95 = vld [vmem:[%s1 + $0xb0] sm:$0xf]
    %v96 = vld [vmem:[%s1 + $0xb4] sm:$0xff]
    %v97 = vld [vmem:[%s1 + $0xbc] sm:$0xf]
    %v98 = vld [vmem:[%s2] sm:$0xff]
    %v99 = vld [vmem:[%s2 + $0x8] sm:$0xf]
    %v100 = vld [vmem:[%s2 + $0xc] sm:$0xff]
    %v101 = vld [vmem:[%s2 + $0x14] sm:$0xf]
    %v102 = vld [vmem:[%s2 + $0x18] sm:$0xff]
    %v103 = vld [vmem:[%s2 + $0x20] sm:$0xf]
    %v104 = vld [vmem:[%s2 + $0x24] sm:$0xff]
    %v105 = vld [vmem:[%s2 + $0x2c] sm:$0xf]
    %v106 = vld [vmem:[%s2 + $0x30] sm:$0xff]
    %v107 = vld [vmem:[%s2 + $0x38] sm:$0xf]
    %v108 = vld [vmem:[%s2 + $0x3c] sm:$0xff]
    %v109 = vld [vmem:[%s2 + $0x44] sm:$0xf]
    %v110 = vld [vmem:[%s2 + $0x48] sm:$0xff]
    %v111 = vld [vmem:[%s2 + $0x50] sm:$0xf]
    %v112 = vld [vmem:[%s2 + $0x54] sm:$0xff]
    %v113 = vld [vmem:[%s2 + $0x5c] sm:$0xf]
    %v114 = vld [vmem:[%s2 + $0x60] sm:$0xff]
    %v115 = vld [vmem:[%s2 + $0x68] sm:$0xf]
    %v116 = vld [vmem:[%s2 + $0x6c] sm:$0xff]
    %v117 = vld [vmem:[%s2 + $0x74] sm:$0xf]
    %v118 = vld [vmem:[%s2 + $0x78] sm:$0xff]
    %v119 = vld [vmem:[%s2 + $0x80] sm:$0xf]
    %v120 = vld [vmem:[%s2 + $0x84] sm:$0xff]
    %v121 = vld [vmem:[%s2 + $0x8c] sm:$0xf]
    %v122 = vld [vmem:[%s2 + $0x90] sm:$0xff]
    %v123 = vld [vmem:[%s2 + $0x98] sm:$0xf]
    %v124 = vld [vmem:[%s2 + $0x9c] sm:$0xff]
    %v125 = vld [vmem:[%s2 + $0xa4] sm:$0xf]
    %v126 = vld [vmem:[%s2 + $0xa8] sm:$0xff]
    %v127 = vld [vmem:[%s2 + $0xb0] sm:$0xf]
    %v128 = vld [vmem:[%s2 + $0xb4] sm:$0xff]
    %v129 = vld [vmem:[%s2 + $0xbc] sm:$0xf]
    %v130 = vld [vmem:[%s2 + $0xc0] sm:$0xff]
    %v131 = vld [vmem:[%s2 + $0xc8] sm:$0xf]
    %v132 = vld [vmem:[%s2 + $0xcc] sm:$0xff]
    %v133 = vld [vmem:[%s2 + $0xd4] sm:$0xf]
    %v134 = vld [vmem:[%s2 + $0xd8] sm:$0xff]
    %v135 = vld [vmem:[%s2 + $0xe0] sm:$0xf]
    %v136 = vld [vmem:[%s2 + $0xe4] sm:$0xff]
    %v137 = vld [vmem:[%s2 + $0xec] sm:$0xf]
    %v138 = vld [vmem:[%s2 + $0xf0] sm:$0xff]
    %v139 = vld [vmem:[%s2 + $0xf8] sm:$0xf]
    %v140 = vld [vmem:[%s2 + $0xfc] sm:$0xff]
    %v141 = vld [vmem:[%s2 + $0x104] sm:$0xf]
    %v142 = vld [vmem:[%s2 + $0x108] sm:$0xff]
    %v143 = vld [vmem:[%s2 + $0x110] sm:$0xf]
    %v144 = vld [vmem:[%s2 + $0x114] sm:$0xff]
    %v145 = vld [vmem:[%s2 + $0x11c] sm:$0xf]
    %v146 = vld [vmem:[%s2 + $0x120] sm:$0xff]
    %v147 = vld [vmem:[%s2 + $0x128] sm:$0xf]
    %v148 = vld [vmem:[%s2 + $0x12c] sm:$0xff]
    %v149 = vld [vmem:[%s2 + $0x134] sm:$0xf]
    %v150 = vld [vmem:[%s2 + $0x138] sm:$0xff]
    %v151 = vld [vmem:[%s2 + $0x140] sm:$0xf]
    %v152 = vld [vmem:[%s2 + $0x144] sm:$0xff]
    %v153 = vld [vmem:[%s2 + $0x14c] sm:$0xf]
    %v154 = vld [vmem:[%s2 + $0x150] sm:$0xff]
    %v155 = vld [vmem:[%s2 + $0x158] sm:$0xf]
    %v156 = vld [vmem:[%s2 + $0x15c] sm:$0xff]
    %v157 = vld [vmem:[%s2 + $0x164] sm:$0xf]
    %v158 = vld [vmem:[%s2 + $0x168] sm:$0xff]
    %v159 = vld [vmem:[%s2 + $0x170] sm:$0xf]
    %v160 = vld [vmem:[%s2 + $0x174] sm:$0xff]
    %v161 = vld [vmem:[%s2 + $0x17c] sm:$0xf]
    %v162 = vld [vmem:[%s2 + $0x180] sm:$0xff]
    %v163 = vld [vmem:[%s2 + $0x188] sm:$0xf]
    %v164 = vld [vmem:[%s2 + $0x18c] sm:$0xff]
    %v165 = vld [vmem:[%s2 + $0x194] sm:$0xf]
    %v166 = vld [vmem:[%s2 + $0x198] sm:$0xff]
    %v167 = vld [vmem:[%s2 + $0x1a0] sm:$0xf]
    %v168 = vld [vmem:[%s2 + $0x1a4] sm:$0xff]
    %v169 = vld [vmem:[%s2 + $0x1ac] sm:$0xf]
    %v170 = vld [vmem:[%s2 + $0x1b0] sm:$0xff]
    %v171 = vld [vmem:[%s2 + $0x1b8] sm:$0xf]
    %v172 = vld [vmem:[%s2 + $0x1bc] sm:$0xff]
    %v173 = vld [vmem:[%s2 + $0x1c4] sm:$0xf]
    %v174 = vld [vmem:[%s2 + $0x1c8] sm:$0xff]
    %v175 = vld [vmem:[%s2 + $0x1d0] sm:$0xf]
    %v176 = vld [vmem:[%s2 + $0x1d4] sm:$0xff]
    %v177 = vld [vmem:[%s2 + $0x1dc] sm:$0xf]
    %v178 = vld [vmem:[%s2 + $0x1e0] sm:$0xff]
    %v179 = vld [vmem:[%s2 + $0x1e8] sm:$0xf]
    %v180 = vld [vmem:[%s2 + $0x1ec] sm:$0xff]
    %v181 = vld [vmem:[%s2 + $0x1f4] sm:$0xf]
    %v182 = vld [vmem:[%s2 + $0x1f8] sm:$0xff]
    %v183 = vld [vmem:[%s2 + $0x200] sm:$0xf]
    %v184 = vld [vmem:[%s2 + $0x204] sm:$0xff]
    %v185 = vld [vmem:[%s2 + $0x20c] sm:$0xf]
    %v186 = vld [vmem:[%s2 + $0x210] sm:$0xff]
    %v187 = vld [vmem:[%s2 + $0x218] sm:$0xf]
    %v188 = vld [vmem:[%s2 + $0x21c] sm:$0xff]
    %v189 = vld [vmem:[%s2 + $0x224] sm:$0xf]
    %v190 = vld [vmem:[%s2 + $0x228] sm:$0xff]
    %v191 = vld [vmem:[%s2 + $0x230] sm:$0xf]
    %v192 = vld [vmem:[%s2 + $0x234] sm:$0xff]
    %v193 = vld [vmem:[%s2 + $0x23c] sm:$0xf]
    %v194 = vld [vmem:[%s2 + $0x240] sm:$0xff]
    %v195 = vld [vmem:[%s2 + $0x248] sm:$0xf]
    %v196 = vld [vmem:[%s2 + $0x24c] sm:$0xff]
    %v197 = vld [vmem:[%s2 + $0x254] sm:$0xf]
    %v198 = vld [vmem:[%s2 + $0x258] sm:$0xff]
    %v199 = vld [vmem:[%s2 + $0x260] sm:$0xf]
    %v200 = vld [vmem:[%s2 + $0x264] sm:$0xff]
    %v201 = vld [vmem:[%s2 + $0x26c] sm:$0xf]
    %v202 = vld [vmem:[%s2 + $0x270] sm:$0xff]
    %v203 = vld [vmem:[%s2 + $0x278] sm:$0xf]
    %v204 = vld [vmem:[%s2 + $0x27c] sm:$0xff]
    %v205 = vld [vmem:[%s2 + $0x284] sm:$0xf]
    %v206 = vld [vmem:[%s2 + $0x288] sm:$0xff]
    %v207 = vld [vmem:[%s2 + $0x290] sm:$0xf]
    %v208 = vld [vmem:[%s2 + $0x294] sm:$0xff]
    %v209 = vld [vmem:[%s2 + $0x29c] sm:$0xf]
    %v210 = vld [vmem:[%s2 + $0x2a0] sm:$0xff]
    %v211 = vld [vmem:[%s2 + $0x2a8] sm:$0xf]
    %v212 = vld [vmem:[%s2 + $0x2ac] sm:$0xff]
    %v213 = vld [vmem:[%s2 + $0x2b4] sm:$0xf]
    %v214 = vld [vmem:[%s2 + $0x2b8] sm:$0xff]
    %v215 = vld [vmem:[%s2 + $0x2c0] sm:$0xf]
    %v216 = vld [vmem:[%s2 + $0x2c4] sm:$0xff]
    %v217 = vld [vmem:[%s2 + $0x2cc] sm:$0xf]
    %v218 = vld [vmem:[%s2 + $0x2d0] sm:$0xff]
    %v219 = vld [vmem:[%s2 + $0x2d8] sm:$0xf]
    %v220 = vld [vmem:[%s2 + $0x2dc] sm:$0xff]
    %v221 = vld [vmem:[%s2 + $0x2e4] sm:$0xf]
    %v222 = vld [vmem:[%s2 + $0x2e8] sm:$0xff]
    %v223 = vld [vmem:[%s2 + $0x2f0] sm:$0xf]
    %v224 = vld [vmem:[%s2 + $0x2f4] sm:$0xff]
    %v225 = vld [vmem:[%s2 + $0x2fc] sm:$0xf]
    %v226 = vld [vmem:[%s2 + $0x300] sm:$0xff]
    %v227 = vld [vmem:[%s2 + $0x308] sm:$0xf]
    %v228 = vld [vmem:[%s2 + $0x30c] sm:$0xff]
    %v229 = vld [vmem:[%s2 + $0x314] sm:$0xf]
    %v230 = vld [vmem:[%s2 + $0x318] sm:$0xff]
    %v231 = vld [vmem:[%s2 + $0x320] sm:$0xf]
    %v232 = vld [vmem:[%s2 + $0x324] sm:$0xff]
    %v233 = vld [vmem:[%s2 + $0x32c] sm:$0xf]
    %v234 = vld [vmem:[%s2 + $0x330] sm:$0xff]
    %v235 = vld [vmem:[%s2 + $0x338] sm:$0xf]
    %v236 = vld [vmem:[%s2 + $0x33c] sm:$0xff]
    %v237 = vld [vmem:[%s2 + $0x344] sm:$0xf]
    %v238 = vld [vmem:[%s2 + $0x348] sm:$0xff]
    %v239 = vld [vmem:[%s2 + $0x350] sm:$0xf]
    %v240 = vld [vmem:[%s2 + $0x354] sm:$0xff]
    %v241 = vld [vmem:[%s2 + $0x35c] sm:$0xf]
    %v242 = vld [vmem:[%s2 + $0x360] sm:$0xff]
    %v243 = vld [vmem:[%s2 + $0x368] sm:$0xf]
    %v244 = vld [vmem:[%s2 + $0x36c] sm:$0xff]
    %v245 = vld [vmem:[%s2 + $0x374] sm:$0xf]
    %v246 = vld [vmem:[%s2 + $0x378] sm:$0xff]
    %v247 = vld [vmem:[%s2 + $0x380] sm:$0xf]
    %v248 = vld [vmem:[%s2 + $0x384] sm:$0xff]
    %v249 = vld [vmem:[%s2 + $0x38c] sm:$0xf]
    %v250 = vld [vmem:[%s2 + $0x390] sm:$0xff]
    %v251 = vld [vmem:[%s2 + $0x398] sm:$0xf]
    %v252 = vld [vmem:[%s2 + $0x39c] sm:$0xff]
    %v253 = vld [vmem:[%s2 + $0x3a4] sm:$0xf]
    %v254 = vld [vmem:[%s2 + $0x3a8] sm:$0xff]
    %v255 = vld [vmem:[%s2 + $0x3b0] sm:$0xf]
    %v256 = vld [vmem:[%s2 + $0x3b4] sm:$0xff]
    %v257 = vld [vmem:[%s2 + $0x3bc] sm:$0xf]
    %v258 = vld [vmem:[%s2 + $0x3c0] sm:$0xff]
    %v259 = vld [vmem:[%s2 + $0x3c8] sm:$0xf]
    %v260 = vld [vmem:[%s2 + $0x3cc] sm:$0xff]
    %v261 = vld [vmem:[%s2 + $0x3d4] sm:$0xf]
    %v262 = vld [vmem:[%s2 + $0x3d8] sm:$0xff]
    %v263 = vld [vmem:[%s2 + $0x3e0] sm:$0xf]
    %v264 = vld [vmem:[%s2 + $0x3e4] sm:$0xff]
    %v265 = vld [vmem:[%s2 + $0x3ec] sm:$0xf]
    %v266 = vld [vmem:[%s2 + $0x3f0] sm:$0xff]
    %v267 = vld [vmem:[%s2 + $0x3f8] sm:$0xf]
    %v268 = vld [vmem:[%s2 + $0x3fc] sm:$0xff]
    %v269 = vld [vmem:[%s2 + $0x404] sm:$0xf]
    %v270 = vld [vmem:[%s2 + $0x408] sm:$0xff]
    %v271 = vld [vmem:[%s2 + $0x410] sm:$0xf]
    %v272 = vld [vmem:[%s2 + $0x414] sm:$0xff]
    %v273 = vld [vmem:[%s2 + $0x41c] sm:$0xf]
    %v274 = vld [vmem:[%s2 + $0x420] sm:$0xff]
    %v275 = vld [vmem:[%s2 + $0x428] sm:$0xf]
    %v276 = vld [vmem:[%s2 + $0x42c] sm:$0xff]
    %v277 = vld [vmem:[%s2 + $0x434] sm:$0xf]
    %v278 = vld [vmem:[%s2 + $0x438] sm:$0xff]
    %v279 = vld [vmem:[%s2 + $0x440] sm:$0xf]
    %v280 = vld [vmem:[%s2 + $0x444] sm:$0xff]
    %v281 = vld [vmem:[%s2 + $0x44c] sm:$0xf]
    %v282 = vld [vmem:[%s2 + $0x450] sm:$0xff]
    %v283 = vld [vmem:[%s2 + $0x458] sm:$0xf]
    %v284 = vld [vmem:[%s2 + $0x45c] sm:$0xff]
    %v285 = vld [vmem:[%s2 + $0x464] sm:$0xf]
    %v286 = vld [vmem:[%s2 + $0x468] sm:$0xff]
    %v287 = vld [vmem:[%s2 + $0x470] sm:$0xf]
    %v288 = vld [vmem:[%s2 + $0x474] sm:$0xff]
    %v289 = vld [vmem:[%s2 + $0x47c] sm:$0xf]
    %v290 = vld [vmem:[%s2 + $0x480] sm:$0xff]
    %v291 = vld [vmem:[%s2 + $0x488] sm:$0xf]
    %v292 = vld [vmem:[%s2 + $0x48c] sm:$0xff]
    %v293 = vld [vmem:[%s2 + $0x494] sm:$0xf]
    %v294 = vld [vmem:[%s2 + $0x498] sm:$0xff]
    %v295 = vld [vmem:[%s2 + $0x4a0] sm:$0xf]
    %v296 = vld [vmem:[%s2 + $0x4a4] sm:$0xff]
    %v297 = vld [vmem:[%s2 + $0x4ac] sm:$0xf]
    %v298 = vld [vmem:[%s2 + $0x4b0] sm:$0xff]
    %v299 = vld [vmem:[%s2 + $0x4b8] sm:$0xf]
    %v300 = vld [vmem:[%s2 + $0x4bc] sm:$0xff]
    %v301 = vld [vmem:[%s2 + $0x4c4] sm:$0xf]
    %v302 = vld [vmem:[%s2 + $0x4c8] sm:$0xff]
    %v303 = vld [vmem:[%s2 + $0x4d0] sm:$0xf]
    %v304 = vld [vmem:[%s2 + $0x4d4] sm:$0xff]
    %v305 = vld [vmem:[%s2 + $0x4dc] sm:$0xf]
    %v306 = vld [vmem:[%s2 + $0x4e0] sm:$0xff]
    %v307 = vld [vmem:[%s2 + $0x4e8] sm:$0xf]
    %v308 = vld [vmem:[%s2 + $0x4ec] sm:$0xff]
    %v309 = vld [vmem:[%s2 + $0x4f4] sm:$0xf]
    %v310 = vld [vmem:[%s2 + $0x4f8] sm:$0xff]
    %v311 = vld [vmem:[%s2 + $0x500] sm:$0xf]
    %v312 = vld [vmem:[%s2 + $0x504] sm:$0xff]
    %v313 = vld [vmem:[%s2 + $0x50c] sm:$0xf]
    %v314 = vld [vmem:[%s2 + $0x510] sm:$0xff]
    %v315 = vld [vmem:[%s2 + $0x518] sm:$0xf]
    %v316 = vld [vmem:[%s2 + $0x51c] sm:$0xff]
    %v317 = vld [vmem:[%s2 + $0x524] sm:$0xf]
    %v318 = vld [vmem:[%s2 + $0x528] sm:$0xff]
    %v319 = vld [vmem:[%s2 + $0x530] sm:$0xf]
    %v320 = vld [vmem:[%s2 + $0x534] sm:$0xff]
    %v321 = vld [vmem:[%s2 + $0x53c] sm:$0xf]
    %v322 = vld [vmem:[%s2 + $0x540] sm:$0xff]
    %v323 = vld [vmem:[%s2 + $0x548] sm:$0xf]
    %v324 = vld [vmem:[%s2 + $0x54c] sm:$0xff]
    %v325 = vld [vmem:[%s2 + $0x554] sm:$0xf]
    %v326 = vld [vmem:[%s2 + $0x558] sm:$0xff]
    %v327 = vld [vmem:[%s2 + $0x560] sm:$0xf]
    %v328 = vld [vmem:[%s2 + $0x564] sm:$0xff]
    %v329 = vld [vmem:[%s2 + $0x56c] sm:$0xf]
    %v330 = vld [vmem:[%s2 + $0x570] sm:$0xff]
    %v331 = vld [vmem:[%s2 + $0x578] sm:$0xf]
    %v332 = vld [vmem:[%s2 + $0x57c] sm:$0xff]
    %v333 = vld [vmem:[%s2 + $0x584] sm:$0xf]
    %v334 = vld [vmem:[%s2 + $0x588] sm:$0xff]
    %v335 = vld [vmem:[%s2 + $0x590] sm:$0xf]
    %v336 = vld [vmem:[%s2 + $0x594] sm:$0xff]
    %v337 = vld [vmem:[%s2 + $0x59c] sm:$0xf]
    %v338 = vld [vmem:[%s2 + $0x5a0] sm:$0xff]
    %v339 = vld [vmem:[%s2 + $0x5a8] sm:$0xf]
    %v340 = vld [vmem:[%s2 + $0x5ac] sm:$0xff]
    %v341 = vld [vmem:[%s2 + $0x5b4] sm:$0xf]
    %v342 = vld [vmem:[%s2 + $0x5b8] sm:$0xff]
    %v343 = vld [vmem:[%s2 + $0x5c0] sm:$0xf]
    %v344 = vld [vmem:[%s2 + $0x5c4] sm:$0xff]
    %v345 = vld [vmem:[%s2 + $0x5cc] sm:$0xf]
    %v346 = vld [vmem:[%s2 + $0x5d0] sm:$0xff]
    %v347 = vld [vmem:[%s2 + $0x5d8] sm:$0xf]
    %v348 = vld [vmem:[%s2 + $0x5dc] sm:$0xff]
    %v349 = vld [vmem:[%s2 + $0x5e4] sm:$0xf]
    %v350 = vld [vmem:[%s2 + $0x5e8] sm:$0xff]
    %v351 = vld [vmem:[%s2 + $0x5f0] sm:$0xf]
    %v352 = vld [vmem:[%s2 + $0x5f4] sm:$0xff]
    %v353 = vld [vmem:[%s2 + $0x5fc] sm:$0xf]
    %v354 = vld [vmem:[%s2 + $0x600] sm:$0xff]
    %v355 = vld [vmem:[%s2 + $0x608] sm:$0xf]
    %v356 = vld [vmem:[%s2 + $0x60c] sm:$0xff]
    %v357 = vld [vmem:[%s2 + $0x614] sm:$0xf]
    %v358 = vld [vmem:[%s2 + $0x618] sm:$0xff]
    %v359 = vld [vmem:[%s2 + $0x620] sm:$0xf]
    %v360 = vld [vmem:[%s2 + $0x624] sm:$0xff]
    %v361 = vld [vmem:[%s2 + $0x62c] sm:$0xf]
    %v362 = vld [vmem:[%s2 + $0x630] sm:$0xff]
    %v363 = vld [vmem:[%s2 + $0x638] sm:$0xf]
    %v364 = vld [vmem:[%s2 + $0x63c] sm:$0xff]
    %v365 = vld [vmem:[%s2 + $0x644] sm:$0xf]
    %v366 = vld [vmem:[%s2 + $0x648] sm:$0xff]
    %v367 = vld [vmem:[%s2 + $0x650] sm:$0xf]
    %v368 = vld [vmem:[%s2 + $0x654] sm:$0xff]
    %v369 = vld [vmem:[%s2 + $0x65c] sm:$0xf]
    %v370 = vld [vmem:[%s2 + $0x660] sm:$0xff]
    %v371 = vld [vmem:[%s2 + $0x668] sm:$0xf]
    %v372 = vld [vmem:[%s2 + $0x66c] sm:$0xff]
    %v373 = vld [vmem:[%s2 + $0x674] sm:$0xf]
    %v374 = vld [vmem:[%s2 + $0x678] sm:$0xff]
    %v375 = vld [vmem:[%s2 + $0x680] sm:$0xf]
    %v376 = vld [vmem:[%s2 + $0x684] sm:$0xff]
    %v377 = vld [vmem:[%s2 + $0x68c] sm:$0xf]
    %v378 = vld [vmem:[%s2 + $0x690] sm:$0xff]
    %v379 = vld [vmem:[%s2 + $0x698] sm:$0xf]
    %v380 = vld [vmem:[%s2 + $0x69c] sm:$0xff]
    %v381 = vld [vmem:[%s2 + $0x6a4] sm:$0xf]
    %v382 = vld [vmem:[%s2 + $0x6a8] sm:$0xff]
    %v383 = vld [vmem:[%s2 + $0x6b0] sm:$0xf]
    %v384 = vld [vmem:[%s2 + $0x6b4] sm:$0xff]
    %v385 = vld [vmem:[%s2 + $0x6bc] sm:$0xf]
    %v386 = vld [vmem:[%s2 + $0x6c0] sm:$0xff]
    %v387 = vld [vmem:[%s2 + $0x6c8] sm:$0xf]
    %v388 = vld [vmem:[%s2 + $0x6cc] sm:$0xff]
    %v389 = vld [vmem:[%s2 + $0x6d4] sm:$0xf]
    %v390 = vld [vmem:[%s2 + $0x6d8] sm:$0xff]
    %v391 = vld [vmem:[%s2 + $0x6e0] sm:$0xf]
    %v392 = vld [vmem:[%s2 + $0x6e4] sm:$0xff]
    %v393 = vld [vmem:[%s2 + $0x6ec] sm:$0xf]
    %v394 = vld [vmem:[%s2 + $0x6f0] sm:$0xff]
    %v395 = vld [vmem:[%s2 + $0x6f8] sm:$0xf]
    %v396 = vld [vmem:[%s2 + $0x6fc] sm:$0xff]
    %v397 = vld [vmem:[%s2 + $0x704] sm:$0xf]
    %v398 = vld [vmem:[%s2 + $0x708] sm:$0xff]
    %v399 = vld [vmem:[%s2 + $0x710] sm:$0xf]
    %v400 = vld [vmem:[%s2 + $0x714] sm:$0xff]
    %v401 = vld [vmem:[%s2 + $0x71c] sm:$0xf]
    %v402 = vld [vmem:[%s2 + $0x720] sm:$0xff]
    %v403 = vld [vmem:[%s2 + $0x728] sm:$0xf]
    %v404 = vld [vmem:[%s2 + $0x72c] sm:$0xff]
    %v405 = vld [vmem:[%s2 + $0x734] sm:$0xf]
    %v406 = vld [vmem:[%s2 + $0x738] sm:$0xff]
    %v407 = vld [vmem:[%s2 + $0x740] sm:$0xf]
    %v408 = vld [vmem:[%s2 + $0x744] sm:$0xff]
    %v409 = vld [vmem:[%s2 + $0x74c] sm:$0xf]
    %v410 = vld [vmem:[%s2 + $0x750] sm:$0xff]
    %v411 = vld [vmem:[%s2 + $0x758] sm:$0xf]
    %v412 = vld [vmem:[%s2 + $0x75c] sm:$0xff]
    %v413 = vld [vmem:[%s2 + $0x764] sm:$0xf]
    %v414 = vld [vmem:[%s2 + $0x768] sm:$0xff]
    %v415 = vld [vmem:[%s2 + $0x770] sm:$0xf]
    %v416 = vld [vmem:[%s2 + $0x774] sm:$0xff]
    %v417 = vld [vmem:[%s2 + $0x77c] sm:$0xf]
    %v418 = vld [vmem:[%s2 + $0x780] sm:$0xff]
    %v419 = vld [vmem:[%s2 + $0x788] sm:$0xf]
    %v420 = vld [vmem:[%s2 + $0x78c] sm:$0xff]
    %v421 = vld [vmem:[%s2 + $0x794] sm:$0xf]
    %v422 = vld [vmem:[%s2 + $0x798] sm:$0xff]
    %v423 = vld [vmem:[%s2 + $0x7a0] sm:$0xf]
    %v424 = vld [vmem:[%s2 + $0x7a4] sm:$0xff]
    %v425 = vld [vmem:[%s2 + $0x7ac] sm:$0xf]
    %v426 = vld [vmem:[%s2 + $0x7b0] sm:$0xff]
    %v427 = vld [vmem:[%s2 + $0x7b8] sm:$0xf]
    %v428 = vld [vmem:[%s2 + $0x7bc] sm:$0xff]
    %v429 = vld [vmem:[%s2 + $0x7c4] sm:$0xf]
    %v430 = vld [vmem:[%s2 + $0x7c8] sm:$0xff]
    %v431 = vld [vmem:[%s2 + $0x7d0] sm:$0xf]
    %v432 = vld [vmem:[%s2 + $0x7d4] sm:$0xff]
    %v433 = vld [vmem:[%s2 + $0x7dc] sm:$0xf]
    %v434 = vld [vmem:[%s2 + $0x7e0] sm:$0xff]
    %v435 = vld [vmem:[%s2 + $0x7e8] sm:$0xf]
    %v436 = vld [vmem:[%s2 + $0x7ec] sm:$0xff]
    %v437 = vld [vmem:[%s2 + $0x7f4] sm:$0xf]
    %v438 = vld [vmem:[%s2 + $0x7f8] sm:$0xff]
    %v439 = vld [vmem:[%s2 + $0x800] sm:$0xf]
    %v440 = vld [vmem:[%s2 + $0x804] sm:$0xff]
    %v441 = vld [vmem:[%s2 + $0x80c] sm:$0xf]
    %v442 = vld [vmem:[%s2 + $0x810] sm:$0xff]
    %v443 = vld [vmem:[%s2 + $0x818] sm:$0xf]
    %v444 = vld [vmem:[%s2 + $0x81c] sm:$0xff]
    %v445 = vld [vmem:[%s2 + $0x824] sm:$0xf]
    %v446 = vld [vmem:[%s2 + $0x828] sm:$0xff]
    %v447 = vld [vmem:[%s2 + $0x830] sm:$0xf]
    %v448 = vld [vmem:[%s2 + $0x834] sm:$0xff]
    %v449 = vld [vmem:[%s2 + $0x83c] sm:$0xf]
    %v450 = vld [vmem:[%s2 + $0x840] sm:$0xff]
    %v451 = vld [vmem:[%s2 + $0x848] sm:$0xf]
    %v452 = vld [vmem:[%s2 + $0x84c] sm:$0xff]
    %v453 = vld [vmem:[%s2 + $0x854] sm:$0xf]
    %v454 = vld [vmem:[%s2 + $0x858] sm:$0xff]
    %v455 = vld [vmem:[%s2 + $0x860] sm:$0xf]
    %v456 = vld [vmem:[%s2 + $0x864] sm:$0xff]
    %v457 = vld [vmem:[%s2 + $0x86c] sm:$0xf]
    %v458 = vld [vmem:[%s2 + $0x870] sm:$0xff]
    %v459 = vld [vmem:[%s2 + $0x878] sm:$0xf]
    %v460 = vld [vmem:[%s2 + $0x87c] sm:$0xff]
    %v461 = vld [vmem:[%s2 + $0x884] sm:$0xf]
    %v462 = vld [vmem:[%s2 + $0x888] sm:$0xff]
    %v463 = vld [vmem:[%s2 + $0x890] sm:$0xf]
    %v464 = vld [vmem:[%s2 + $0x894] sm:$0xff]
    %v465 = vld [vmem:[%s2 + $0x89c] sm:$0xf]
    %v466 = vld [vmem:[%s2 + $0x8a0] sm:$0xff]
    %v467 = vld [vmem:[%s2 + $0x8a8] sm:$0xf]
    %v468 = vld [vmem:[%s2 + $0x8ac] sm:$0xff]
    %v469 = vld [vmem:[%s2 + $0x8b4] sm:$0xf]
    %v470 = vld [vmem:[%s2 + $0x8b8] sm:$0xff]
    %v471 = vld [vmem:[%s2 + $0x8c0] sm:$0xf]
    %v472 = vld [vmem:[%s2 + $0x8c4] sm:$0xff]
    %v473 = vld [vmem:[%s2 + $0x8cc] sm:$0xf]
    %v474 = vld [vmem:[%s2 + $0x8d0] sm:$0xff]
    %v475 = vld [vmem:[%s2 + $0x8d8] sm:$0xf]
    %v476 = vld [vmem:[%s2 + $0x8dc] sm:$0xff]
    %v477 = vld [vmem:[%s2 + $0x8e4] sm:$0xf]
    %v478 = vld [vmem:[%s2 + $0x8e8] sm:$0xff]
    %v479 = vld [vmem:[%s2 + $0x8f0] sm:$0xf]
    %v480 = vld [vmem:[%s2 + $0x8f4] sm:$0xff]
    %v481 = vld [vmem:[%s2 + $0x8fc] sm:$0xf]
    %v482 = vld [vmem:[%s2 + $0x900] sm:$0xff]
    %v483 = vld [vmem:[%s2 + $0x908] sm:$0xf]
    %v484 = vld [vmem:[%s2 + $0x90c] sm:$0xff]
    %v485 = vld [vmem:[%s2 + $0x914] sm:$0xf]
    %v486 = vld [vmem:[%s2 + $0x918] sm:$0xff]
    %v487 = vld [vmem:[%s2 + $0x920] sm:$0xf]
    %v488 = vld [vmem:[%s2 + $0x924] sm:$0xff]
    %v489 = vld [vmem:[%s2 + $0x92c] sm:$0xf]
    %v490 = vld [vmem:[%s3] sm:$0xff]
    %v491 = vld [vmem:[%s3 + $0x8] sm:$0xff]
    %v492 = vld [vmem:[%s3 + $0x10] sm:$0xff]
    %v493 = vld [vmem:[%s3 + $0x18] sm:$0xff]
    %v494 = vld [vmem:[%s3 + $0x20] sm:$0xff]
    %v495 = vld [vmem:[%s3 + $0x28] sm:$0xff]
    %v496 = vld [vmem:[%s3 + $0x30] sm:$0xff]
    %v497 = vld [vmem:[%s3 + $0x38] sm:$0xff]
    %v498 = vld [vmem:[%s3 + $0x40] sm:$0xff]
    %v499 = vld [vmem:[%s3 + $0x48] sm:$0xff]
    %v500 = vld [vmem:[%s3 + $0x50] sm:$0xff]
    %v501 = vld [vmem:[%s3 + $0x58] sm:$0xff]
    %v502 = vld [vmem:[%s3 + $0x60] sm:$0xff]
    %v503 = vld [vmem:[%s3 + $0x68] sm:$0xff]
    %v504 = vld [vmem:[%s3 + $0x70] sm:$0xff]
    %v505 = vld [vmem:[%s3 + $0x78] sm:$0xff]
    %v506 = vld [vmem:[%s3 + $0x80] sm:$0xff]
    %v507 = vld [vmem:[%s3 + $0x88] sm:$0xff]
    %v508 = vld [vmem:[%s3 + $0x90] sm:$0xff]
    %v509 = vld [vmem:[%s3 + $0x98] sm:$0xff]
    %v510 = vld [vmem:[%s3 + $0xa0] sm:$0xff]
    %v511 = vld [vmem:[%s3 + $0xa8] sm:$0xff]
    %v512 = vld [vmem:[%s3 + $0xb0] sm:$0xff]
    %v513 = vld [vmem:[%s3 + $0xb8] sm:$0xff]
    %v514 = vld [vmem:[%s3 + $0xc0] sm:$0xff]
    %v515 = vld [vmem:[%s3 + $0xc8] sm:$0xff]
    %v516 = vld [vmem:[%s3 + $0xd0] sm:$0xff]
    %v517 = vld [vmem:[%s3 + $0xd8] sm:$0xff]
    %v518 = vld [vmem:[%s3 + $0xe0] sm:$0xff]
    %v519 = vld [vmem:[%s3 + $0xe8] sm:$0xff]
    %v520 = vld [vmem:[%s3 + $0xf0] sm:$0xff]
    %v521 = vld [vmem:[%s3 + $0xf8] sm:$0xff]
    %v522 = vld [vmem:[%s3 + $0x100] sm:$0xff]
    %v523 = vld [vmem:[%s3 + $0x108] sm:$0xff]
    %v524 = vld [vmem:[%s3 + $0x110] sm:$0xff]
    %v525 = vld [vmem:[%s3 + $0x118] sm:$0xff]
    %v526 = vld [vmem:[%s3 + $0x120] sm:$0xff]
    %v527 = vld [vmem:[%s3 + $0x128] sm:$0xff]
    %v528 = vld [vmem:[%s3 + $0x130] sm:$0xff]
    %v529 = vld [vmem:[%s3 + $0x138] sm:$0xff]
    %v530 = vld [vmem:[%s3 + $0x140] sm:$0xff]
    %v531 = vld [vmem:[%s3 + $0x148] sm:$0xff]
    %v532 = vld [vmem:[%s3 + $0x150] sm:$0xff]
    %v533 = vld [vmem:[%s3 + $0x158] sm:$0xff]
    %v534 = vld [vmem:[%s3 + $0x160] sm:$0xff]
    %v535 = vld [vmem:[%s3 + $0x168] sm:$0xff]
    %v536 = vld [vmem:[%s3 + $0x170] sm:$0xff]
    %v537 = vld [vmem:[%s3 + $0x178] sm:$0xff]
    %v538 = vld [vmem:[%s3 + $0x180] sm:$0xff]
    %v539 = vld [vmem:[%s3 + $0x188] sm:$0xff]
    %v540 = vld [vmem:[%s3 + $0x190] sm:$0xff]
    %v541 = vld [vmem:[%s3 + $0x198] sm:$0xff]
    %v542 = vld [vmem:[%s3 + $0x1a0] sm:$0xff]
    %v543 = vld [vmem:[%s3 + $0x1a8] sm:$0xff]
    %v544 = vld [vmem:[%s3 + $0x1b0] sm:$0xff]
    %v545 = vld [vmem:[%s3 + $0x1b8] sm:$0xff]
    %v546 = vld [vmem:[%s3 + $0x1c0] sm:$0xff]
    %v547 = vld [vmem:[%s3 + $0x1c8] sm:$0xff]
    %v548 = vld [vmem:[%s3 + $0x1d0] sm:$0xff]
    %v549 = vld [vmem:[%s3 + $0x1d8] sm:$0xff]
    %v550 = vld [vmem:[%s3 + $0x1e0] sm:$0xff]
    %v551 = vld [vmem:[%s3 + $0x1e8] sm:$0xff]
    %v552 = vld [vmem:[%s3 + $0x1f0] sm:$0xff]
    %v553 = vld [vmem:[%s3 + $0x1f8] sm:$0xff]
    %v554 = vld [vmem:[%s3 + $0x200] sm:$0xff]
    %v555 = vld [vmem:[%s3 + $0x208] sm:$0xff]
    %v556 = vld [vmem:[%s3 + $0x210] sm:$0xff]
    %v557 = vld [vmem:[%s3 + $0x218] sm:$0xff]
    %v558 = vld [vmem:[%s3 + $0x220] sm:$0xff]
    %v559 = vld [vmem:[%s3 + $0x228] sm:$0xff]
    %v560 = vld [vmem:[%s3 + $0x230] sm:$0xff]
    %v561 = vld [vmem:[%s3 + $0x238] sm:$0xff]
    %v562 = vld [vmem:[%s3 + $0x240] sm:$0xff]
    %v563 = vld [vmem:[%s3 + $0x248] sm:$0xff]
    %v564 = vld [vmem:[%s3 + $0x250] sm:$0xff]
    %v565 = vld [vmem:[%s3 + $0x258] sm:$0xff]
    %v566 = vld [vmem:[%s3 + $0x260] sm:$0xff]
    %v567 = vld [vmem:[%s3 + $0x268] sm:$0xff]
    %v568 = vld [vmem:[%s3 + $0x270] sm:$0xff]
    %v569 = vld [vmem:[%s3 + $0x278] sm:$0xff]
    %v570 = vld [vmem:[%s3 + $0x280] sm:$0xff]
    %v571 = vld [vmem:[%s3 + $0x288] sm:$0xff]
    %v572 = vld [vmem:[%s3 + $0x290] sm:$0xff]
    %v573 = vld [vmem:[%s3 + $0x298] sm:$0xff]
    %v574 = vld [vmem:[%s3 + $0x2a0] sm:$0xff]
    %v575 = vld [vmem:[%s3 + $0x2a8] sm:$0xff]
    %v576 = vld [vmem:[%s3 + $0x2b0] sm:$0xff]
    %v577 = vld [vmem:[%s3 + $0x2b8] sm:$0xff]
    %v578 = vld [vmem:[%s3 + $0x2c0] sm:$0xff]
    %v579 = vld [vmem:[%s3 + $0x2c8] sm:$0xff]
    %v580 = vld [vmem:[%s3 + $0x2d0] sm:$0xff]
    %v581 = vld [vmem:[%s3 + $0x2d8] sm:$0xff]
    %v582 = vld [vmem:[%s3 + $0x2e0] sm:$0xff]
    %v583 = vld [vmem:[%s3 + $0x2e8] sm:$0xff]
    %v584 = vld [vmem:[%s3 + $0x2f0] sm:$0xff]
    %v585 = vld [vmem:[%s3 + $0x2f8] sm:$0xff]
    %v586 = vld [vmem:[%s3 + $0x300] sm:$0xff]
    %v587 = vld [vmem:[%s3 + $0x308] sm:$0xff]
    %v588 = vld [vmem:[%s3 + $0x310] sm:$0xff]
    %v589 = vld [vmem:[%s3 + $0x318] sm:$0xff]
    %v590 = vld [vmem:[%s3 + $0x320] sm:$0xff]
    %v591 = vld [vmem:[%s3 + $0x328] sm:$0xff]
    %v592 = vld [vmem:[%s3 + $0x330] sm:$0xff]
    %v593 = vld [vmem:[%s3 + $0x338] sm:$0xff]
    %v594 = vld [vmem:[%s3 + $0x340] sm:$0xff]
    %v595 = vld [vmem:[%s3 + $0x348] sm:$0xff]
    %v596 = vld [vmem:[%s3 + $0x350] sm:$0xff]
    %v597 = vld [vmem:[%s3 + $0x358] sm:$0xff]
    %v598 = vld [vmem:[%s3 + $0x360] sm:$0xff]
    %v599 = vld [vmem:[%s3 + $0x368] sm:$0xff]
    %v600 = vld [vmem:[%s3 + $0x370] sm:$0xff]
    %v601 = vld [vmem:[%s3 + $0x378] sm:$0xff]
    %v602 = vld [vmem:[%s3 + $0x380] sm:$0xff]
    %v603 = vld [vmem:[%s3 + $0x388] sm:$0xff]
    %v604 = vld [vmem:[%s3 + $0x390] sm:$0xff]
    %v605 = vld [vmem:[%s3 + $0x398] sm:$0xff]
    %v606 = vld [vmem:[%s3 + $0x3a0] sm:$0xff]
    %v607 = vld [vmem:[%s3 + $0x3a8] sm:$0xff]
    %v608 = vld [vmem:[%s3 + $0x3b0] sm:$0xff]
    %v609 = vld [vmem:[%s3 + $0x3b8] sm:$0xff]
    %v610 = vld [vmem:[%s3 + $0x3c0] sm:$0xff]
    %v611 = vld [vmem:[%s3 + $0x3c8] sm:$0xff]
    %v612 = vld [vmem:[%s3 + $0x3d0] sm:$0xff]
    %v613 = vld [vmem:[%s3 + $0x3d8] sm:$0xff]
    %v614 = vld [vmem:[%s3 + $0x3e0] sm:$0xff]
    %v615 = vld [vmem:[%s3 + $0x3e8] sm:$0xff]
    %v616 = vld [vmem:[%s3 + $0x3f0] sm:$0xff]
    %v617 = vld [vmem:[%s3 + $0x3f8] sm:$0xff]
    %v618 = vld [vmem:[%s3 + $0x400] sm:$0xff]
    %v619 = vld [vmem:[%s3 + $0x408] sm:$0xff]
    %v620 = vld [vmem:[%s3 + $0x410] sm:$0xff]
    %v621 = vld [vmem:[%s3 + $0x418] sm:$0xff]
    %v622 = vld [vmem:[%s3 + $0x420] sm:$0xff]
    %v623 = vld [vmem:[%s3 + $0x428] sm:$0xff]
    %v624 = vld [vmem:[%s3 + $0x430] sm:$0xff]
    %v625 = vld [vmem:[%s3 + $0x438] sm:$0xff]
    %v626 = vld [vmem:[%s3 + $0x440] sm:$0xff]
    %v627 = vld [vmem:[%s3 + $0x448] sm:$0xff]
    %v628 = vld [vmem:[%s3 + $0x450] sm:$0xff]
    %v629 = vld [vmem:[%s3 + $0x458] sm:$0xff]
    %v630 = vld [vmem:[%s3 + $0x460] sm:$0xff]
    %v631 = vld [vmem:[%s3 + $0x468] sm:$0xff]
    %v632 = vld [vmem:[%s3 + $0x470] sm:$0xff]
    %v633 = vld [vmem:[%s3 + $0x478] sm:$0xff]
    %v634 = vld [vmem:[%s3 + $0x480] sm:$0xff]
    %v635 = vld [vmem:[%s3 + $0x488] sm:$0xff]
    %v636 = vld [vmem:[%s3 + $0x490] sm:$0xff]
    %v637 = vld [vmem:[%s3 + $0x498] sm:$0xff]
    %v638 = vld [vmem:[%s3 + $0x4a0] sm:$0xff]
    %v639 = vld [vmem:[%s3 + $0x4a8] sm:$0xff]
    %v640 = vld [vmem:[%s3 + $0x4b0] sm:$0xff]
    %v641 = vld [vmem:[%s3 + $0x4b8] sm:$0xff]
    %v642 = vld [vmem:[%s3 + $0x4c0] sm:$0xff]
    %v643 = vld [vmem:[%s3 + $0x4c8] sm:$0xff]
    %v644 = vld [vmem:[%s3 + $0x4d0] sm:$0xff]
    %v645 = vld [vmem:[%s3 + $0x4d8] sm:$0xff]
    %v646 = vld [vmem:[%s3 + $0x4e0] sm:$0xff]
    %v647 = vld [vmem:[%s3 + $0x4e8] sm:$0xff]
    %v648 = vld [vmem:[%s3 + $0x4f0] sm:$0xff]
    %v649 = vld [vmem:[%s3 + $0x4f8] sm:$0xff]
    %v650 = vld [vmem:[%s3 + $0x500] sm:$0xff]
    %v651 = vld [vmem:[%s3 + $0x508] sm:$0xff]
    %v652 = vld [vmem:[%s3 + $0x510] sm:$0xff]
    %v653 = vld [vmem:[%s3 + $0x518] sm:$0xff]
    %v654 = vld [vmem:[%s3 + $0x520] sm:$0xff]
    %v655 = vld [vmem:[%s3 + $0x528] sm:$0xff]
    %v656 = vld [vmem:[%s3 + $0x530] sm:$0xff]
    %v657 = vld [vmem:[%s3 + $0x538] sm:$0xff]
    %v658 = vld [vmem:[%s3 + $0x540] sm:$0xff]
    %v659 = vld [vmem:[%s3 + $0x548] sm:$0xff]
    %v660 = vld [vmem:[%s3 + $0x550] sm:$0xff]
    %v661 = vld [vmem:[%s3 + $0x558] sm:$0xff]
    %v662 = vld [vmem:[%s3 + $0x560] sm:$0xff]
    %v663 = vld [vmem:[%s3 + $0x568] sm:$0xff]
    %v664 = vld [vmem:[%s3 + $0x570] sm:$0xff]
    %v665 = vld [vmem:[%s3 + $0x578] sm:$0xff]
    %v666 = vld [vmem:[%s3 + $0x580] sm:$0xff]
    %v667 = vld [vmem:[%s3 + $0x588] sm:$0xff]
    %v668 = vld [vmem:[%s3 + $0x590] sm:$0xff]
    %v669 = vld [vmem:[%s3 + $0x598] sm:$0xff]
    %v670 = vld [vmem:[%s3 + $0x5a0] sm:$0xff]
    %v671 = vld [vmem:[%s3 + $0x5a8] sm:$0xff]
    %v672 = vld [vmem:[%s3 + $0x5b0] sm:$0xff]
    %v673 = vld [vmem:[%s3 + $0x5b8] sm:$0xff]
    %v674 = vld [vmem:[%s3 + $0x5c0] sm:$0xff]
    %v675 = vld [vmem:[%s3 + $0x5c8] sm:$0xff]
    %v676 = vld [vmem:[%s3 + $0x5d0] sm:$0xff]
    %v677 = vld [vmem:[%s3 + $0x5d8] sm:$0xff]
    %v678 = vld [vmem:[%s3 + $0x5e0] sm:$0xff]
    %v679 = vld [vmem:[%s3 + $0x5e8] sm:$0xff]
    %v680 = vld [vmem:[%s3 + $0x5f0] sm:$0xff]
    %v681 = vld [vmem:[%s3 + $0x5f8] sm:$0xff]
    %v682 = vld [vmem:[%s3 + $0x600] sm:$0xff]
    %v683 = vld [vmem:[%s3 + $0x608] sm:$0xff]
    %v684 = vld [vmem:[%s3 + $0x610] sm:$0xff]
    %v685 = vld [vmem:[%s3 + $0x618] sm:$0xff]
    %687 = vset.pattern.permute.xlu0 0
    %688 = vperm.xlu0 %687, %v490
    %v689 = vpop.permute.xlu0 %688
    %692 = vset.pattern.permute.xlu0 0
    %693 = vperm.xlu0 %692, %v491
    %v694 = vpop.permute.xlu0 %693
    %697 = vset.pattern.permute.xlu0 0
    %698 = vperm.xlu0 %697, %v492
    %v699 = vpop.permute.xlu0 %698
    %702 = vset.pattern.permute.xlu0 0
    %703 = vperm.xlu0 %702, %v493
    %v704 = vpop.permute.xlu0 %703
    %707 = vset.pattern.permute.xlu0 0
    %708 = vperm.xlu0 %707, %v494
    %v709 = vpop.permute.xlu0 %708
    %712 = vset.pattern.permute.xlu0 0
    %713 = vperm.xlu0 %712, %v495
    %v714 = vpop.permute.xlu0 %713
    %717 = vset.pattern.permute.xlu0 0
    %718 = vperm.xlu0 %717, %v496
    %v719 = vpop.permute.xlu0 %718
    %722 = vset.pattern.permute.xlu0 0
    %723 = vperm.xlu0 %722, %v497
    %v724 = vpop.permute.xlu0 %723
    %727 = vset.pattern.permute.xlu0 0
    %728 = vperm.xlu0 %727, %v498
    %v729 = vpop.permute.xlu0 %728
    %732 = vset.pattern.permute.xlu0 0
    %733 = vperm.xlu0 %732, %v499
    %v734 = vpop.permute.xlu0 %733
    %737 = vset.pattern.permute.xlu0 0
    %738 = vperm.xlu0 %737, %v500
    %v739 = vpop.permute.xlu0 %738
    %742 = vset.pattern.permute.xlu0 0
    %743 = vperm.xlu0 %742, %v501
    %v744 = vpop.permute.xlu0 %743
    %747 = vset.pattern.permute.xlu0 0
    %748 = vperm.xlu0 %747, %v502
    %v749 = vpop.permute.xlu0 %748
    %752 = vset.pattern.permute.xlu0 0
    %753 = vperm.xlu0 %752, %v503
    %v754 = vpop.permute.xlu0 %753
    %757 = vset.pattern.permute.xlu0 0
    %758 = vperm.xlu0 %757, %v504
    %v759 = vpop.permute.xlu0 %758
    %762 = vset.pattern.permute.xlu0 0
    %763 = vperm.xlu0 %762, %v505
    %v764 = vpop.permute.xlu0 %763
    %767 = vset.pattern.permute.xlu0 0
    %768 = vperm.xlu0 %767, %v506
    %v769 = vpop.permute.xlu0 %768
    %772 = vset.pattern.permute.xlu0 0
    %773 = vperm.xlu0 %772, %v507
    %v774 = vpop.permute.xlu0 %773
    %777 = vset.pattern.permute.xlu0 0
    %778 = vperm.xlu0 %777, %v508
    %v779 = vpop.permute.xlu0 %778
    %782 = vset.pattern.permute.xlu0 0
    %783 = vperm.xlu0 %782, %v509
    %v784 = vpop.permute.xlu0 %783
    %787 = vset.pattern.permute.xlu0 0
    %788 = vperm.xlu0 %787, %v510
    %v789 = vpop.permute.xlu0 %788
    %792 = vset.pattern.permute.xlu0 0
    %793 = vperm.xlu0 %792, %v511
    %v794 = vpop.permute.xlu0 %793
    %797 = vset.pattern.permute.xlu0 0
    %798 = vperm.xlu0 %797, %v512
    %v799 = vpop.permute.xlu0 %798
    %802 = vset.pattern.permute.xlu0 0
    %803 = vperm.xlu0 %802, %v513
    %v804 = vpop.permute.xlu0 %803
    %807 = vset.pattern.permute.xlu0 0
    %808 = vperm.xlu0 %807, %v514
    %v809 = vpop.permute.xlu0 %808
    %812 = vset.pattern.permute.xlu0 0
    %813 = vperm.xlu0 %812, %v515
    %v814 = vpop.permute.xlu0 %813
    %817 = vset.pattern.permute.xlu0 0
    %818 = vperm.xlu0 %817, %v516
    %v819 = vpop.permute.xlu0 %818
    %822 = vset.pattern.permute.xlu0 0
    %823 = vperm.xlu0 %822, %v517
    %v824 = vpop.permute.xlu0 %823
    %827 = vset.pattern.permute.xlu0 0
    %828 = vperm.xlu0 %827, %v518
    %v829 = vpop.permute.xlu0 %828
    %832 = vset.pattern.permute.xlu0 0
    %833 = vperm.xlu0 %832, %v519
    %v834 = vpop.permute.xlu0 %833
    %837 = vset.pattern.permute.xlu0 0
    %838 = vperm.xlu0 %837, %v520
    %v839 = vpop.permute.xlu0 %838
    %842 = vset.pattern.permute.xlu0 0
    %843 = vperm.xlu0 %842, %v521
    %v844 = vpop.permute.xlu0 %843
    %847 = vset.pattern.permute.xlu0 0
    %848 = vperm.xlu0 %847, %v522
    %v849 = vpop.permute.xlu0 %848
    %852 = vset.pattern.permute.xlu0 0
    %853 = vperm.xlu0 %852, %v523
    %v854 = vpop.permute.xlu0 %853
    %857 = vset.pattern.permute.xlu0 0
    %858 = vperm.xlu0 %857, %v524
    %v859 = vpop.permute.xlu0 %858
    %862 = vset.pattern.permute.xlu0 0
    %863 = vperm.xlu0 %862, %v525
    %v864 = vpop.permute.xlu0 %863
    %867 = vset.pattern.permute.xlu0 0
    %868 = vperm.xlu0 %867, %v526
    %v869 = vpop.permute.xlu0 %868
    %872 = vset.pattern.permute.xlu0 0
    %873 = vperm.xlu0 %872, %v527
    %v874 = vpop.permute.xlu0 %873
    %877 = vset.pattern.permute.xlu0 0
    %878 = vperm.xlu0 %877, %v528
    %v879 = vpop.permute.xlu0 %878
    %882 = vset.pattern.permute.xlu0 0
    %883 = vperm.xlu0 %882, %v529
    %v884 = vpop.permute.xlu0 %883
    %887 = vset.pattern.permute.xlu0 0
    %888 = vperm.xlu0 %887, %v530
    %v889 = vpop.permute.xlu0 %888
    %892 = vset.pattern.permute.xlu0 0
    %893 = vperm.xlu0 %892, %v531
    %v894 = vpop.permute.xlu0 %893
    %897 = vset.pattern.permute.xlu0 0
    %898 = vperm.xlu0 %897, %v532
    %v899 = vpop.permute.xlu0 %898
    %902 = vset.pattern.permute.xlu0 0
    %903 = vperm.xlu0 %902, %v533
    %v904 = vpop.permute.xlu0 %903
    %907 = vset.pattern.permute.xlu0 0
    %908 = vperm.xlu0 %907, %v534
    %v909 = vpop.permute.xlu0 %908
    %912 = vset.pattern.permute.xlu0 0
    %913 = vperm.xlu0 %912, %v535
    %v914 = vpop.permute.xlu0 %913
    %917 = vset.pattern.permute.xlu0 0
    %918 = vperm.xlu0 %917, %v536
    %v919 = vpop.permute.xlu0 %918
    %922 = vset.pattern.permute.xlu0 0
    %923 = vperm.xlu0 %922, %v537
    %v924 = vpop.permute.xlu0 %923
    %927 = vset.pattern.permute.xlu0 0
    %928 = vperm.xlu0 %927, %v538
    %v929 = vpop.permute.xlu0 %928
    %932 = vset.pattern.permute.xlu0 0
    %933 = vperm.xlu0 %932, %v539
    %v934 = vpop.permute.xlu0 %933
    %937 = vset.pattern.permute.xlu0 0
    %938 = vperm.xlu0 %937, %v540
    %v939 = vpop.permute.xlu0 %938
    %942 = vset.pattern.permute.xlu0 0
    %943 = vperm.xlu0 %942, %v541
    %v944 = vpop.permute.xlu0 %943
    %947 = vset.pattern.permute.xlu0 0
    %948 = vperm.xlu0 %947, %v542
    %v949 = vpop.permute.xlu0 %948
    %952 = vset.pattern.permute.xlu0 0
    %953 = vperm.xlu0 %952, %v543
    %v954 = vpop.permute.xlu0 %953
    %957 = vset.pattern.permute.xlu0 0
    %958 = vperm.xlu0 %957, %v544
    %v959 = vpop.permute.xlu0 %958
    %962 = vset.pattern.permute.xlu0 0
    %963 = vperm.xlu0 %962, %v545
    %v964 = vpop.permute.xlu0 %963
    %967 = vset.pattern.permute.xlu0 0
    %968 = vperm.xlu0 %967, %v546
    %v969 = vpop.permute.xlu0 %968
    %972 = vset.pattern.permute.xlu0 0
    %973 = vperm.xlu0 %972, %v547
    %v974 = vpop.permute.xlu0 %973
    %977 = vset.pattern.permute.xlu0 0
    %978 = vperm.xlu0 %977, %v548
    %v979 = vpop.permute.xlu0 %978
    %982 = vset.pattern.permute.xlu0 0
    %983 = vperm.xlu0 %982, %v549
    %v984 = vpop.permute.xlu0 %983
    %987 = vset.pattern.permute.xlu0 0
    %988 = vperm.xlu0 %987, %v550
    %v989 = vpop.permute.xlu0 %988
    %992 = vset.pattern.permute.xlu0 0
    %993 = vperm.xlu0 %992, %v551
    %v994 = vpop.permute.xlu0 %993
    %997 = vset.pattern.permute.xlu0 0
    %998 = vperm.xlu0 %997, %v552
    %v999 = vpop.permute.xlu0 %998
    %1002 = vset.pattern.permute.xlu0 0
    %1003 = vperm.xlu0 %1002, %v553
    %v1004 = vpop.permute.xlu0 %1003
    %1007 = vset.pattern.permute.xlu0 0
    %1008 = vperm.xlu0 %1007, %v554
    %v1009 = vpop.permute.xlu0 %1008
    %1012 = vset.pattern.permute.xlu0 0
    %1013 = vperm.xlu0 %1012, %v555
    %v1014 = vpop.permute.xlu0 %1013
    %1017 = vset.pattern.permute.xlu0 0
    %1018 = vperm.xlu0 %1017, %v556
    %v1019 = vpop.permute.xlu0 %1018
    %1022 = vset.pattern.permute.xlu0 0
    %1023 = vperm.xlu0 %1022, %v557
    %v1024 = vpop.permute.xlu0 %1023
    %1027 = vset.pattern.permute.xlu0 0
    %1028 = vperm.xlu0 %1027, %v558
    %v1029 = vpop.permute.xlu0 %1028
    %1032 = vset.pattern.permute.xlu0 0
    %1033 = vperm.xlu0 %1032, %v559
    %v1034 = vpop.permute.xlu0 %1033
    %1037 = vset.pattern.permute.xlu0 0
    %1038 = vperm.xlu0 %1037, %v560
    %v1039 = vpop.permute.xlu0 %1038
    %1042 = vset.pattern.permute.xlu0 0
    %1043 = vperm.xlu0 %1042, %v561
    %v1044 = vpop.permute.xlu0 %1043
    %1047 = vset.pattern.permute.xlu0 0
    %1048 = vperm.xlu0 %1047, %v562
    %v1049 = vpop.permute.xlu0 %1048
    %1052 = vset.pattern.permute.xlu0 0
    %1053 = vperm.xlu0 %1052, %v563
    %v1054 = vpop.permute.xlu0 %1053
    %1057 = vset.pattern.permute.xlu0 0
    %1058 = vperm.xlu0 %1057, %v564
    %v1059 = vpop.permute.xlu0 %1058
    %1062 = vset.pattern.permute.xlu0 0
    %1063 = vperm.xlu0 %1062, %v565
    %v1064 = vpop.permute.xlu0 %1063
    %1067 = vset.pattern.permute.xlu0 0
    %1068 = vperm.xlu0 %1067, %v566
    %v1069 = vpop.permute.xlu0 %1068
    %1072 = vset.pattern.permute.xlu0 0
    %1073 = vperm.xlu0 %1072, %v567
    %v1074 = vpop.permute.xlu0 %1073
    %1077 = vset.pattern.permute.xlu0 0
    %1078 = vperm.xlu0 %1077, %v568
    %v1079 = vpop.permute.xlu0 %1078
    %1082 = vset.pattern.permute.xlu0 0
    %1083 = vperm.xlu0 %1082, %v569
    %v1084 = vpop.permute.xlu0 %1083
    %1087 = vset.pattern.permute.xlu0 0
    %1088 = vperm.xlu0 %1087, %v570
    %v1089 = vpop.permute.xlu0 %1088
    %1092 = vset.pattern.permute.xlu0 0
    %1093 = vperm.xlu0 %1092, %v571
    %v1094 = vpop.permute.xlu0 %1093
    %1097 = vset.pattern.permute.xlu0 0
    %1098 = vperm.xlu0 %1097, %v572
    %v1099 = vpop.permute.xlu0 %1098
    %1102 = vset.pattern.permute.xlu0 0
    %1103 = vperm.xlu0 %1102, %v573
    %v1104 = vpop.permute.xlu0 %1103
    %1107 = vset.pattern.permute.xlu0 0
    %1108 = vperm.xlu0 %1107, %v574
    %v1109 = vpop.permute.xlu0 %1108
    %1112 = vset.pattern.permute.xlu0 0
    %1113 = vperm.xlu0 %1112, %v575
    %v1114 = vpop.permute.xlu0 %1113
    %1117 = vset.pattern.permute.xlu0 0
    %1118 = vperm.xlu0 %1117, %v576
    %v1119 = vpop.permute.xlu0 %1118
    %1122 = vset.pattern.permute.xlu0 0
    %1123 = vperm.xlu0 %1122, %v577
    %v1124 = vpop.permute.xlu0 %1123
    %1127 = vset.pattern.permute.xlu0 0
    %1128 = vperm.xlu0 %1127, %v578
    %v1129 = vpop.permute.xlu0 %1128
    %1132 = vset.pattern.permute.xlu0 0
    %1133 = vperm.xlu0 %1132, %v579
    %v1134 = vpop.permute.xlu0 %1133
    %1137 = vset.pattern.permute.xlu0 0
    %1138 = vperm.xlu0 %1137, %v580
    %v1139 = vpop.permute.xlu0 %1138
    %1142 = vset.pattern.permute.xlu0 0
    %1143 = vperm.xlu0 %1142, %v581
    %v1144 = vpop.permute.xlu0 %1143
    %1147 = vset.pattern.permute.xlu0 0
    %1148 = vperm.xlu0 %1147, %v582
    %v1149 = vpop.permute.xlu0 %1148
    %1152 = vset.pattern.permute.xlu0 0
    %1153 = vperm.xlu0 %1152, %v583
    %v1154 = vpop.permute.xlu0 %1153
    %1157 = vset.pattern.permute.xlu0 0
    %1158 = vperm.xlu0 %1157, %v584
    %v1159 = vpop.permute.xlu0 %1158
    %1162 = vset.pattern.permute.xlu0 0
    %1163 = vperm.xlu0 %1162, %v585
    %v1164 = vpop.permute.xlu0 %1163
    %1167 = vset.pattern.permute.xlu0 0
    %1168 = vperm.xlu0 %1167, %v586
    %v1169 = vpop.permute.xlu0 %1168
    %1172 = vset.pattern.permute.xlu0 0
    %1173 = vperm.xlu0 %1172, %v587
    %v1174 = vpop.permute.xlu0 %1173
    %1177 = vset.pattern.permute.xlu0 0
    %1178 = vperm.xlu0 %1177, %v588
    %v1179 = vpop.permute.xlu0 %1178
    %1182 = vset.pattern.permute.xlu0 0
    %1183 = vperm.xlu0 %1182, %v589
    %v1184 = vpop.permute.xlu0 %1183
    %1187 = vset.pattern.permute.xlu0 0
    %1188 = vperm.xlu0 %1187, %v590
    %v1189 = vpop.permute.xlu0 %1188
    %1192 = vset.pattern.permute.xlu0 0
    %1193 = vperm.xlu0 %1192, %v591
    %v1194 = vpop.permute.xlu0 %1193
    %1197 = vset.pattern.permute.xlu0 0
    %1198 = vperm.xlu0 %1197, %v592
    %v1199 = vpop.permute.xlu0 %1198
    %1202 = vset.pattern.permute.xlu0 0
    %1203 = vperm.xlu0 %1202, %v593
    %v1204 = vpop.permute.xlu0 %1203
    %1207 = vset.pattern.permute.xlu0 0
    %1208 = vperm.xlu0 %1207, %v594
    %v1209 = vpop.permute.xlu0 %1208
    %1212 = vset.pattern.permute.xlu0 0
    %1213 = vperm.xlu0 %1212, %v595
    %v1214 = vpop.permute.xlu0 %1213
    %1217 = vset.pattern.permute.xlu0 0
    %1218 = vperm.xlu0 %1217, %v596
    %v1219 = vpop.permute.xlu0 %1218
    %1222 = vset.pattern.permute.xlu0 0
    %1223 = vperm.xlu0 %1222, %v597
    %v1224 = vpop.permute.xlu0 %1223
    %1227 = vset.pattern.permute.xlu0 0
    %1228 = vperm.xlu0 %1227, %v598
    %v1229 = vpop.permute.xlu0 %1228
    %1232 = vset.pattern.permute.xlu0 0
    %1233 = vperm.xlu0 %1232, %v599
    %v1234 = vpop.permute.xlu0 %1233
    %1237 = vset.pattern.permute.xlu0 0
    %1238 = vperm.xlu0 %1237, %v600
    %v1239 = vpop.permute.xlu0 %1238
    %1242 = vset.pattern.permute.xlu0 0
    %1243 = vperm.xlu0 %1242, %v601
    %v1244 = vpop.permute.xlu0 %1243
    %1247 = vset.pattern.permute.xlu0 0
    %1248 = vperm.xlu0 %1247, %v602
    %v1249 = vpop.permute.xlu0 %1248
    %1252 = vset.pattern.permute.xlu0 0
    %1253 = vperm.xlu0 %1252, %v603
    %v1254 = vpop.permute.xlu0 %1253
    %1257 = vset.pattern.permute.xlu0 0
    %1258 = vperm.xlu0 %1257, %v604
    %v1259 = vpop.permute.xlu0 %1258
    %1262 = vset.pattern.permute.xlu0 0
    %1263 = vperm.xlu0 %1262, %v605
    %v1264 = vpop.permute.xlu0 %1263
    %1267 = vset.pattern.permute.xlu0 0
    %1268 = vperm.xlu0 %1267, %v606
    %v1269 = vpop.permute.xlu0 %1268
    %1272 = vset.pattern.permute.xlu0 0
    %1273 = vperm.xlu0 %1272, %v607
    %v1274 = vpop.permute.xlu0 %1273
    %1277 = vset.pattern.permute.xlu0 0
    %1278 = vperm.xlu0 %1277, %v608
    %v1279 = vpop.permute.xlu0 %1278
    %1282 = vset.pattern.permute.xlu0 0
    %1283 = vperm.xlu0 %1282, %v609
    %v1284 = vpop.permute.xlu0 %1283
    %1287 = vset.pattern.permute.xlu0 0
    %1288 = vperm.xlu0 %1287, %v610
    %v1289 = vpop.permute.xlu0 %1288
    %1292 = vset.pattern.permute.xlu0 0
    %1293 = vperm.xlu0 %1292, %v611
    %v1294 = vpop.permute.xlu0 %1293
    %1297 = vset.pattern.permute.xlu0 0
    %1298 = vperm.xlu0 %1297, %v612
    %v1299 = vpop.permute.xlu0 %1298
    %1302 = vset.pattern.permute.xlu0 0
    %1303 = vperm.xlu0 %1302, %v613
    %v1304 = vpop.permute.xlu0 %1303
    %1307 = vset.pattern.permute.xlu0 0
    %1308 = vperm.xlu0 %1307, %v614
    %v1309 = vpop.permute.xlu0 %1308
    %1312 = vset.pattern.permute.xlu0 0
    %1313 = vperm.xlu0 %1312, %v615
    %v1314 = vpop.permute.xlu0 %1313
    %1317 = vset.pattern.permute.xlu0 0
    %1318 = vperm.xlu0 %1317, %v616
    %v1319 = vpop.permute.xlu0 %1318
    %1322 = vset.pattern.permute.xlu0 0
    %1323 = vperm.xlu0 %1322, %v617
    %v1324 = vpop.permute.xlu0 %1323
    %1327 = vset.pattern.permute.xlu0 0
    %1328 = vperm.xlu0 %1327, %v618
    %v1329 = vpop.permute.xlu0 %1328
    %1332 = vset.pattern.permute.xlu0 0
    %1333 = vperm.xlu0 %1332, %v619
    %v1334 = vpop.permute.xlu0 %1333
    %1337 = vset.pattern.permute.xlu0 0
    %1338 = vperm.xlu0 %1337, %v620
    %v1339 = vpop.permute.xlu0 %1338
    %1342 = vset.pattern.permute.xlu0 0
    %1343 = vperm.xlu0 %1342, %v621
    %v1344 = vpop.permute.xlu0 %1343
    %1347 = vset.pattern.permute.xlu0 0
    %1348 = vperm.xlu0 %1347, %v622
    %v1349 = vpop.permute.xlu0 %1348
    %1352 = vset.pattern.permute.xlu0 0
    %1353 = vperm.xlu0 %1352, %v623
    %v1354 = vpop.permute.xlu0 %1353
    %1357 = vset.pattern.permute.xlu0 0
    %1358 = vperm.xlu0 %1357, %v624
    %v1359 = vpop.permute.xlu0 %1358
    %1362 = vset.pattern.permute.xlu0 0
    %1363 = vperm.xlu0 %1362, %v625
    %v1364 = vpop.permute.xlu0 %1363
    %1367 = vset.pattern.permute.xlu0 0
    %1368 = vperm.xlu0 %1367, %v626
    %v1369 = vpop.permute.xlu0 %1368
    %1372 = vset.pattern.permute.xlu0 0
    %1373 = vperm.xlu0 %1372, %v627
    %v1374 = vpop.permute.xlu0 %1373
    %1377 = vset.pattern.permute.xlu0 0
    %1378 = vperm.xlu0 %1377, %v628
    %v1379 = vpop.permute.xlu0 %1378
    %1382 = vset.pattern.permute.xlu0 0
    %1383 = vperm.xlu0 %1382, %v629
    %v1384 = vpop.permute.xlu0 %1383
    %1387 = vset.pattern.permute.xlu0 0
    %1388 = vperm.xlu0 %1387, %v630
    %v1389 = vpop.permute.xlu0 %1388
    %1392 = vset.pattern.permute.xlu0 0
    %1393 = vperm.xlu0 %1392, %v631
    %v1394 = vpop.permute.xlu0 %1393
    %1397 = vset.pattern.permute.xlu0 0
    %1398 = vperm.xlu0 %1397, %v632
    %v1399 = vpop.permute.xlu0 %1398
    %1402 = vset.pattern.permute.xlu0 0
    %1403 = vperm.xlu0 %1402, %v633
    %v1404 = vpop.permute.xlu0 %1403
    %1407 = vset.pattern.permute.xlu0 0
    %1408 = vperm.xlu0 %1407, %v634
    %v1409 = vpop.permute.xlu0 %1408
    %1412 = vset.pattern.permute.xlu0 0
    %1413 = vperm.xlu0 %1412, %v635
    %v1414 = vpop.permute.xlu0 %1413
    %1417 = vset.pattern.permute.xlu0 0
    %1418 = vperm.xlu0 %1417, %v636
    %v1419 = vpop.permute.xlu0 %1418
    %1422 = vset.pattern.permute.xlu0 0
    %1423 = vperm.xlu0 %1422, %v637
    %v1424 = vpop.permute.xlu0 %1423
    %1427 = vset.pattern.permute.xlu0 0
    %1428 = vperm.xlu0 %1427, %v638
    %v1429 = vpop.permute.xlu0 %1428
    %1432 = vset.pattern.permute.xlu0 0
    %1433 = vperm.xlu0 %1432, %v639
    %v1434 = vpop.permute.xlu0 %1433
    %1437 = vset.pattern.permute.xlu0 0
    %1438 = vperm.xlu0 %1437, %v640
    %v1439 = vpop.permute.xlu0 %1438
    %1442 = vset.pattern.permute.xlu0 0
    %1443 = vperm.xlu0 %1442, %v641
    %v1444 = vpop.permute.xlu0 %1443
    %1447 = vset.pattern.permute.xlu0 0
    %1448 = vperm.xlu0 %1447, %v642
    %v1449 = vpop.permute.xlu0 %1448
    %1452 = vset.pattern.permute.xlu0 0
    %1453 = vperm.xlu0 %1452, %v643
    %v1454 = vpop.permute.xlu0 %1453
    %1457 = vset.pattern.permute.xlu0 0
    %1458 = vperm.xlu0 %1457, %v644
    %v1459 = vpop.permute.xlu0 %1458
    %1462 = vset.pattern.permute.xlu0 0
    %1463 = vperm.xlu0 %1462, %v645
    %v1464 = vpop.permute.xlu0 %1463
    %1467 = vset.pattern.permute.xlu0 0
    %1468 = vperm.xlu0 %1467, %v646
    %v1469 = vpop.permute.xlu0 %1468
    %1472 = vset.pattern.permute.xlu0 0
    %1473 = vperm.xlu0 %1472, %v647
    %v1474 = vpop.permute.xlu0 %1473
    %1477 = vset.pattern.permute.xlu0 0
    %1478 = vperm.xlu0 %1477, %v648
    %v1479 = vpop.permute.xlu0 %1478
    %1482 = vset.pattern.permute.xlu0 0
    %1483 = vperm.xlu0 %1482, %v649
    %v1484 = vpop.permute.xlu0 %1483
    %1487 = vset.pattern.permute.xlu0 0
    %1488 = vperm.xlu0 %1487, %v650
    %v1489 = vpop.permute.xlu0 %1488
    %1492 = vset.pattern.permute.xlu0 0
    %1493 = vperm.xlu0 %1492, %v651
    %v1494 = vpop.permute.xlu0 %1493
    %1497 = vset.pattern.permute.xlu0 0
    %1498 = vperm.xlu0 %1497, %v652
    %v1499 = vpop.permute.xlu0 %1498
    %1502 = vset.pattern.permute.xlu0 0
    %1503 = vperm.xlu0 %1502, %v653
    %v1504 = vpop.permute.xlu0 %1503
    %1507 = vset.pattern.permute.xlu0 0
    %1508 = vperm.xlu0 %1507, %v654
    %v1509 = vpop.permute.xlu0 %1508
    %1512 = vset.pattern.permute.xlu0 0
    %1513 = vperm.xlu0 %1512, %v655
    %v1514 = vpop.permute.xlu0 %1513
    %1517 = vset.pattern.permute.xlu0 0
    %1518 = vperm.xlu0 %1517, %v656
    %v1519 = vpop.permute.xlu0 %1518
    %1522 = vset.pattern.permute.xlu0 0
    %1523 = vperm.xlu0 %1522, %v657
    %v1524 = vpop.permute.xlu0 %1523
    %1527 = vset.pattern.permute.xlu0 0
    %1528 = vperm.xlu0 %1527, %v658
    %v1529 = vpop.permute.xlu0 %1528
    %1532 = vset.pattern.permute.xlu0 0
    %1533 = vperm.xlu0 %1532, %v659
    %v1534 = vpop.permute.xlu0 %1533
    %1537 = vset.pattern.permute.xlu0 0
    %1538 = vperm.xlu0 %1537, %v660
    %v1539 = vpop.permute.xlu0 %1538
    %1542 = vset.pattern.permute.xlu0 0
    %1543 = vperm.xlu0 %1542, %v661
    %v1544 = vpop.permute.xlu0 %1543
    %1547 = vset.pattern.permute.xlu0 0
    %1548 = vperm.xlu0 %1547, %v662
    %v1549 = vpop.permute.xlu0 %1548
    %1552 = vset.pattern.permute.xlu0 0
    %1553 = vperm.xlu0 %1552, %v663
    %v1554 = vpop.permute.xlu0 %1553
    %1557 = vset.pattern.permute.xlu0 0
    %1558 = vperm.xlu0 %1557, %v664
    %v1559 = vpop.permute.xlu0 %1558
    %1562 = vset.pattern.permute.xlu0 0
    %1563 = vperm.xlu0 %1562, %v665
    %v1564 = vpop.permute.xlu0 %1563
    %1567 = vset.pattern.permute.xlu0 0
    %1568 = vperm.xlu0 %1567, %v666
    %v1569 = vpop.permute.xlu0 %1568
    %1572 = vset.pattern.permute.xlu0 0
    %1573 = vperm.xlu0 %1572, %v667
    %v1574 = vpop.permute.xlu0 %1573
    %1577 = vset.pattern.permute.xlu0 0
    %1578 = vperm.xlu0 %1577, %v668
    %v1579 = vpop.permute.xlu0 %1578
    %1582 = vset.pattern.permute.xlu0 0
    %1583 = vperm.xlu0 %1582, %v669
    %v1584 = vpop.permute.xlu0 %1583
    %1587 = vset.pattern.permute.xlu0 0
    %1588 = vperm.xlu0 %1587, %v670
    %v1589 = vpop.permute.xlu0 %1588
    %1592 = vset.pattern.permute.xlu0 0
    %1593 = vperm.xlu0 %1592, %v671
    %v1594 = vpop.permute.xlu0 %1593
    %1597 = vset.pattern.permute.xlu0 0
    %1598 = vperm.xlu0 %1597, %v672
    %v1599 = vpop.permute.xlu0 %1598
    %1602 = vset.pattern.permute.xlu0 0
    %1603 = vperm.xlu0 %1602, %v673
    %v1604 = vpop.permute.xlu0 %1603
    %1607 = vset.pattern.permute.xlu0 0
    %1608 = vperm.xlu0 %1607, %v674
    %v1609 = vpop.permute.xlu0 %1608
    %1612 = vset.pattern.permute.xlu0 0
    %1613 = vperm.xlu0 %1612, %v675
    %v1614 = vpop.permute.xlu0 %1613
    %1617 = vset.pattern.permute.xlu0 0
    %1618 = vperm.xlu0 %1617, %v676
    %v1619 = vpop.permute.xlu0 %1618
    %1622 = vset.pattern.permute.xlu0 0
    %1623 = vperm.xlu0 %1622, %v677
    %v1624 = vpop.permute.xlu0 %1623
    %1627 = vset.pattern.permute.xlu0 0
    %1628 = vperm.xlu0 %1627, %v678
    %v1629 = vpop.permute.xlu0 %1628
    %1632 = vset.pattern.permute.xlu0 0
    %1633 = vperm.xlu0 %1632, %v679
    %v1634 = vpop.permute.xlu0 %1633
    %1637 = vset.pattern.permute.xlu0 0
    %1638 = vperm.xlu0 %1637, %v680
    %v1639 = vpop.permute.xlu0 %1638
    %1642 = vset.pattern.permute.xlu0 0
    %1643 = vperm.xlu0 %1642, %v681
    %v1644 = vpop.permute.xlu0 %1643
    %1647 = vset.pattern.permute.xlu0 0
    %1648 = vperm.xlu0 %1647, %v682
    %v1649 = vpop.permute.xlu0 %1648
    %1652 = vset.pattern.permute.xlu0 0
    %1653 = vperm.xlu0 %1652, %v683
    %v1654 = vpop.permute.xlu0 %1653
    %1657 = vset.pattern.permute.xlu0 0
    %1658 = vperm.xlu0 %1657, %v684
    %v1659 = vpop.permute.xlu0 %1658
    %1662 = vset.pattern.permute.xlu0 0
    %1663 = vperm.xlu0 %1662, %v685
    %v1664 = vpop.permute.xlu0 %1663
    %v2058 = vunpack.c.l.b16 %v98
    %v2059 = vunpack.c.h.b16 %v98
    %v2060 = vunpack.c.l.b16 %v99
    %v2061 = vunpack.c.l.b16 %v100
    %v2062 = vunpack.c.h.b16 %v100
    %v2063 = vunpack.c.l.b16 %v101
    %v2064 = vunpack.c.l.b16 %v102
    %v2065 = vunpack.c.h.b16 %v102
    %v2066 = vunpack.c.l.b16 %v103
    %v2067 = vunpack.c.l.b16 %v104
    %v2068 = vunpack.c.h.b16 %v104
    %v2069 = vunpack.c.l.b16 %v105
    %v2070 = vunpack.c.l.b16 %v106
    %v2071 = vunpack.c.h.b16 %v106
    %v2072 = vunpack.c.l.b16 %v107
    %v2073 = vunpack.c.l.b16 %v108
    %v2074 = vunpack.c.h.b16 %v108
    %v2075 = vunpack.c.l.b16 %v109
    %v2076 = vunpack.c.l.b16 %v110
    %v2077 = vunpack.c.h.b16 %v110
    %v2078 = vunpack.c.l.b16 %v111
    %v2079 = vunpack.c.l.b16 %v112
    %v2080 = vunpack.c.h.b16 %v112
    %v2081 = vunpack.c.l.b16 %v113
    %v2082 = vunpack.c.l.b16 %v114
    %v2083 = vunpack.c.h.b16 %v114
    %v2084 = vunpack.c.l.b16 %v115
    %v2085 = vunpack.c.l.b16 %v116
    %v2086 = vunpack.c.h.b16 %v116
    %v2087 = vunpack.c.l.b16 %v117
    %v2088 = vunpack.c.l.b16 %v118
    %v2089 = vunpack.c.h.b16 %v118
    %v2090 = vunpack.c.l.b16 %v119
    %v2091 = vunpack.c.l.b16 %v120
    %v2092 = vunpack.c.h.b16 %v120
    %v2093 = vunpack.c.l.b16 %v121
    %v2094 = vunpack.c.l.b16 %v122
    %v2095 = vunpack.c.h.b16 %v122
    %v2096 = vunpack.c.l.b16 %v123
    %v2097 = vunpack.c.l.b16 %v124
    %v2098 = vunpack.c.h.b16 %v124
    %v2099 = vunpack.c.l.b16 %v125
    %v2100 = vunpack.c.l.b16 %v126
    %v2101 = vunpack.c.h.b16 %v126
    %v2102 = vunpack.c.l.b16 %v127
    %v2103 = vunpack.c.l.b16 %v128
    %v2104 = vunpack.c.h.b16 %v128
    %v2105 = vunpack.c.l.b16 %v129
    %v2106 = vunpack.c.l.b16 %v130
    %v2107 = vunpack.c.h.b16 %v130
    %v2108 = vunpack.c.l.b16 %v131
    %v2109 = vunpack.c.l.b16 %v132
    %v2110 = vunpack.c.h.b16 %v132
    %v2111 = vunpack.c.l.b16 %v133
    %v2112 = vunpack.c.l.b16 %v134
    %v2113 = vunpack.c.h.b16 %v134
    %v2114 = vunpack.c.l.b16 %v135
    %v2115 = vunpack.c.l.b16 %v136
    %v2116 = vunpack.c.h.b16 %v136
    %v2117 = vunpack.c.l.b16 %v137
    %v2118 = vunpack.c.l.b16 %v138
    %v2119 = vunpack.c.h.b16 %v138
    %v2120 = vunpack.c.l.b16 %v139
    %v2121 = vunpack.c.l.b16 %v140
    %v2122 = vunpack.c.h.b16 %v140
    %v2123 = vunpack.c.l.b16 %v141
    %v2124 = vunpack.c.l.b16 %v142
    %v2125 = vunpack.c.h.b16 %v142
    %v2126 = vunpack.c.l.b16 %v143
    %v2127 = vunpack.c.l.b16 %v144
    %v2128 = vunpack.c.h.b16 %v144
    %v2129 = vunpack.c.l.b16 %v145
    %v2130 = vunpack.c.l.b16 %v146
    %v2131 = vunpack.c.h.b16 %v146
    %v2132 = vunpack.c.l.b16 %v147
    %v2133 = vunpack.c.l.b16 %v148
    %v2134 = vunpack.c.h.b16 %v148
    %v2135 = vunpack.c.l.b16 %v149
    %v2136 = vunpack.c.l.b16 %v150
    %v2137 = vunpack.c.h.b16 %v150
    %v2138 = vunpack.c.l.b16 %v151
    %v2139 = vunpack.c.l.b16 %v152
    %v2140 = vunpack.c.h.b16 %v152
    %v2141 = vunpack.c.l.b16 %v153
    %v2142 = vunpack.c.l.b16 %v154
    %v2143 = vunpack.c.h.b16 %v154
    %v2144 = vunpack.c.l.b16 %v155
    %v2145 = vunpack.c.l.b16 %v156
    %v2146 = vunpack.c.h.b16 %v156
    %v2147 = vunpack.c.l.b16 %v157
    %v2148 = vunpack.c.l.b16 %v158
    %v2149 = vunpack.c.h.b16 %v158
    %v2150 = vunpack.c.l.b16 %v159
    %v2151 = vunpack.c.l.b16 %v160
    %v2152 = vunpack.c.h.b16 %v160
    %v2153 = vunpack.c.l.b16 %v161
    %v2154 = vunpack.c.l.b16 %v162
    %v2155 = vunpack.c.h.b16 %v162
    %v2156 = vunpack.c.l.b16 %v163
    %v2157 = vunpack.c.l.b16 %v164
    %v2158 = vunpack.c.h.b16 %v164
    %v2159 = vunpack.c.l.b16 %v165
    %v2160 = vunpack.c.l.b16 %v166
    %v2161 = vunpack.c.h.b16 %v166
    %v2162 = vunpack.c.l.b16 %v167
    %v2163 = vunpack.c.l.b16 %v168
    %v2164 = vunpack.c.h.b16 %v168
    %v2165 = vunpack.c.l.b16 %v169
    %v2166 = vunpack.c.l.b16 %v170
    %v2167 = vunpack.c.h.b16 %v170
    %v2168 = vunpack.c.l.b16 %v171
    %v2169 = vunpack.c.l.b16 %v172
    %v2170 = vunpack.c.h.b16 %v172
    %v2171 = vunpack.c.l.b16 %v173
    %v2172 = vunpack.c.l.b16 %v174
    %v2173 = vunpack.c.h.b16 %v174
    %v2174 = vunpack.c.l.b16 %v175
    %v2175 = vunpack.c.l.b16 %v176
    %v2176 = vunpack.c.h.b16 %v176
    %v2177 = vunpack.c.l.b16 %v177
    %v2178 = vunpack.c.l.b16 %v178
    %v2179 = vunpack.c.h.b16 %v178
    %v2180 = vunpack.c.l.b16 %v179
    %v2181 = vunpack.c.l.b16 %v180
    %v2182 = vunpack.c.h.b16 %v180
    %v2183 = vunpack.c.l.b16 %v181
    %v2184 = vunpack.c.l.b16 %v182
    %v2185 = vunpack.c.h.b16 %v182
    %v2186 = vunpack.c.l.b16 %v183
    %v2187 = vunpack.c.l.b16 %v184
    %v2188 = vunpack.c.h.b16 %v184
    %v2189 = vunpack.c.l.b16 %v185
    %v2190 = vunpack.c.l.b16 %v186
    %v2191 = vunpack.c.h.b16 %v186
    %v2192 = vunpack.c.l.b16 %v187
    %v2193 = vunpack.c.l.b16 %v188
    %v2194 = vunpack.c.h.b16 %v188
    %v2195 = vunpack.c.l.b16 %v189
    %v2196 = vunpack.c.l.b16 %v190
    %v2197 = vunpack.c.h.b16 %v190
    %v2198 = vunpack.c.l.b16 %v191
    %v2199 = vunpack.c.l.b16 %v192
    %v2200 = vunpack.c.h.b16 %v192
    %v2201 = vunpack.c.l.b16 %v193
    %v2202 = vunpack.c.l.b16 %v194
    %v2203 = vunpack.c.h.b16 %v194
    %v2204 = vunpack.c.l.b16 %v195
    %v2205 = vunpack.c.l.b16 %v196
    %v2206 = vunpack.c.h.b16 %v196
    %v2207 = vunpack.c.l.b16 %v197
    %v2208 = vunpack.c.l.b16 %v198
    %v2209 = vunpack.c.h.b16 %v198
    %v2210 = vunpack.c.l.b16 %v199
    %v2211 = vunpack.c.l.b16 %v200
    %v2212 = vunpack.c.h.b16 %v200
    %v2213 = vunpack.c.l.b16 %v201
    %v2214 = vunpack.c.l.b16 %v202
    %v2215 = vunpack.c.h.b16 %v202
    %v2216 = vunpack.c.l.b16 %v203
    %v2217 = vunpack.c.l.b16 %v204
    %v2218 = vunpack.c.h.b16 %v204
    %v2219 = vunpack.c.l.b16 %v205
    %v2220 = vunpack.c.l.b16 %v206
    %v2221 = vunpack.c.h.b16 %v206
    %v2222 = vunpack.c.l.b16 %v207
    %v2223 = vunpack.c.l.b16 %v208
    %v2224 = vunpack.c.h.b16 %v208
    %v2225 = vunpack.c.l.b16 %v209
    %v2226 = vunpack.c.l.b16 %v210
    %v2227 = vunpack.c.h.b16 %v210
    %v2228 = vunpack.c.l.b16 %v211
    %v2229 = vunpack.c.l.b16 %v212
    %v2230 = vunpack.c.h.b16 %v212
    %v2231 = vunpack.c.l.b16 %v213
    %v2232 = vunpack.c.l.b16 %v214
    %v2233 = vunpack.c.h.b16 %v214
    %v2234 = vunpack.c.l.b16 %v215
    %v2235 = vunpack.c.l.b16 %v216
    %v2236 = vunpack.c.h.b16 %v216
    %v2237 = vunpack.c.l.b16 %v217
    %v2238 = vunpack.c.l.b16 %v218
    %v2239 = vunpack.c.h.b16 %v218
    %v2240 = vunpack.c.l.b16 %v219
    %v2241 = vunpack.c.l.b16 %v220
    %v2242 = vunpack.c.h.b16 %v220
    %v2243 = vunpack.c.l.b16 %v221
    %v2244 = vunpack.c.l.b16 %v222
    %v2245 = vunpack.c.h.b16 %v222
    %v2246 = vunpack.c.l.b16 %v223
    %v2247 = vunpack.c.l.b16 %v224
    %v2248 = vunpack.c.h.b16 %v224
    %v2249 = vunpack.c.l.b16 %v225
    %v2250 = vunpack.c.l.b16 %v226
    %v2251 = vunpack.c.h.b16 %v226
    %v2252 = vunpack.c.l.b16 %v227
    %v2253 = vunpack.c.l.b16 %v228
    %v2254 = vunpack.c.h.b16 %v228
    %v2255 = vunpack.c.l.b16 %v229
    %v2256 = vunpack.c.l.b16 %v230
    %v2257 = vunpack.c.h.b16 %v230
    %v2258 = vunpack.c.l.b16 %v231
    %v2259 = vunpack.c.l.b16 %v232
    %v2260 = vunpack.c.h.b16 %v232
    %v2261 = vunpack.c.l.b16 %v233
    %v2262 = vunpack.c.l.b16 %v234
    %v2263 = vunpack.c.h.b16 %v234
    %v2264 = vunpack.c.l.b16 %v235
    %v2265 = vunpack.c.l.b16 %v236
    %v2266 = vunpack.c.h.b16 %v236
    %v2267 = vunpack.c.l.b16 %v237
    %v2268 = vunpack.c.l.b16 %v238
    %v2269 = vunpack.c.h.b16 %v238
    %v2270 = vunpack.c.l.b16 %v239
    %v2271 = vunpack.c.l.b16 %v240
    %v2272 = vunpack.c.h.b16 %v240
    %v2273 = vunpack.c.l.b16 %v241
    %v2274 = vunpack.c.l.b16 %v242
    %v2275 = vunpack.c.h.b16 %v242
    %v2276 = vunpack.c.l.b16 %v243
    %v2277 = vunpack.c.l.b16 %v244
    %v2278 = vunpack.c.h.b16 %v244
    %v2279 = vunpack.c.l.b16 %v245
    %v2280 = vunpack.c.l.b16 %v246
    %v2281 = vunpack.c.h.b16 %v246
    %v2282 = vunpack.c.l.b16 %v247
    %v2283 = vunpack.c.l.b16 %v248
    %v2284 = vunpack.c.h.b16 %v248
    %v2285 = vunpack.c.l.b16 %v249
    %v2286 = vunpack.c.l.b16 %v250
    %v2287 = vunpack.c.h.b16 %v250
    %v2288 = vunpack.c.l.b16 %v251
    %v2289 = vunpack.c.l.b16 %v252
    %v2290 = vunpack.c.h.b16 %v252
    %v2291 = vunpack.c.l.b16 %v253
    %v2292 = vunpack.c.l.b16 %v254
    %v2293 = vunpack.c.h.b16 %v254
    %v2294 = vunpack.c.l.b16 %v255
    %v2295 = vunpack.c.l.b16 %v256
    %v2296 = vunpack.c.h.b16 %v256
    %v2297 = vunpack.c.l.b16 %v257
    %v2298 = vunpack.c.l.b16 %v258
    %v2299 = vunpack.c.h.b16 %v258
    %v2300 = vunpack.c.l.b16 %v259
    %v2301 = vunpack.c.l.b16 %v260
    %v2302 = vunpack.c.h.b16 %v260
    %v2303 = vunpack.c.l.b16 %v261
    %v2304 = vunpack.c.l.b16 %v262
    %v2305 = vunpack.c.h.b16 %v262
    %v2306 = vunpack.c.l.b16 %v263
    %v2307 = vunpack.c.l.b16 %v264
    %v2308 = vunpack.c.h.b16 %v264
    %v2309 = vunpack.c.l.b16 %v265
    %v2310 = vunpack.c.l.b16 %v266
    %v2311 = vunpack.c.h.b16 %v266
    %v2312 = vunpack.c.l.b16 %v267
    %v2313 = vunpack.c.l.b16 %v268
    %v2314 = vunpack.c.h.b16 %v268
    %v2315 = vunpack.c.l.b16 %v269
    %v2316 = vunpack.c.l.b16 %v270
    %v2317 = vunpack.c.h.b16 %v270
    %v2318 = vunpack.c.l.b16 %v271
    %v2319 = vunpack.c.l.b16 %v272
    %v2320 = vunpack.c.h.b16 %v272
    %v2321 = vunpack.c.l.b16 %v273
    %v2322 = vunpack.c.l.b16 %v274
    %v2323 = vunpack.c.h.b16 %v274
    %v2324 = vunpack.c.l.b16 %v275
    %v2325 = vunpack.c.l.b16 %v276
    %v2326 = vunpack.c.h.b16 %v276
    %v2327 = vunpack.c.l.b16 %v277
    %v2328 = vunpack.c.l.b16 %v278
    %v2329 = vunpack.c.h.b16 %v278
    %v2330 = vunpack.c.l.b16 %v279
    %v2331 = vunpack.c.l.b16 %v280
    %v2332 = vunpack.c.h.b16 %v280
    %v2333 = vunpack.c.l.b16 %v281
    %v2334 = vunpack.c.l.b16 %v282
    %v2335 = vunpack.c.h.b16 %v282
    %v2336 = vunpack.c.l.b16 %v283
    %v2337 = vunpack.c.l.b16 %v284
    %v2338 = vunpack.c.h.b16 %v284
    %v2339 = vunpack.c.l.b16 %v285
    %v2340 = vunpack.c.l.b16 %v286
    %v2341 = vunpack.c.h.b16 %v286
    %v2342 = vunpack.c.l.b16 %v287
    %v2343 = vunpack.c.l.b16 %v288
    %v2344 = vunpack.c.h.b16 %v288
    %v2345 = vunpack.c.l.b16 %v289
    %v2346 = vunpack.c.l.b16 %v290
    %v2347 = vunpack.c.h.b16 %v290
    %v2348 = vunpack.c.l.b16 %v291
    %v2349 = vunpack.c.l.b16 %v292
    %v2350 = vunpack.c.h.b16 %v292
    %v2351 = vunpack.c.l.b16 %v293
    %v2352 = vunpack.c.l.b16 %v294
    %v2353 = vunpack.c.h.b16 %v294
    %v2354 = vunpack.c.l.b16 %v295
    %v2355 = vunpack.c.l.b16 %v296
    %v2356 = vunpack.c.h.b16 %v296
    %v2357 = vunpack.c.l.b16 %v297
    %v2358 = vunpack.c.l.b16 %v298
    %v2359 = vunpack.c.h.b16 %v298
    %v2360 = vunpack.c.l.b16 %v299
    %v2361 = vunpack.c.l.b16 %v300
    %v2362 = vunpack.c.h.b16 %v300
    %v2363 = vunpack.c.l.b16 %v301
    %v2364 = vunpack.c.l.b16 %v302
    %v2365 = vunpack.c.h.b16 %v302
    %v2366 = vunpack.c.l.b16 %v303
    %v2367 = vunpack.c.l.b16 %v304
    %v2368 = vunpack.c.h.b16 %v304
    %v2369 = vunpack.c.l.b16 %v305
    %v2370 = vunpack.c.l.b16 %v306
    %v2371 = vunpack.c.h.b16 %v306
    %v2372 = vunpack.c.l.b16 %v307
    %v2373 = vunpack.c.l.b16 %v308
    %v2374 = vunpack.c.h.b16 %v308
    %v2375 = vunpack.c.l.b16 %v309
    %v2376 = vunpack.c.l.b16 %v310
    %v2377 = vunpack.c.h.b16 %v310
    %v2378 = vunpack.c.l.b16 %v311
    %v2379 = vunpack.c.l.b16 %v312
    %v2380 = vunpack.c.h.b16 %v312
    %v2381 = vunpack.c.l.b16 %v313
    %v2382 = vunpack.c.l.b16 %v314
    %v2383 = vunpack.c.h.b16 %v314
    %v2384 = vunpack.c.l.b16 %v315
    %v2385 = vunpack.c.l.b16 %v316
    %v2386 = vunpack.c.h.b16 %v316
    %v2387 = vunpack.c.l.b16 %v317
    %v2388 = vunpack.c.l.b16 %v318
    %v2389 = vunpack.c.h.b16 %v318
    %v2390 = vunpack.c.l.b16 %v319
    %v2391 = vunpack.c.l.b16 %v320
    %v2392 = vunpack.c.h.b16 %v320
    %v2393 = vunpack.c.l.b16 %v321
    %v2394 = vunpack.c.l.b16 %v322
    %v2395 = vunpack.c.h.b16 %v322
    %v2396 = vunpack.c.l.b16 %v323
    %v2397 = vunpack.c.l.b16 %v324
    %v2398 = vunpack.c.h.b16 %v324
    %v2399 = vunpack.c.l.b16 %v325
    %v2400 = vunpack.c.l.b16 %v326
    %v2401 = vunpack.c.h.b16 %v326
    %v2402 = vunpack.c.l.b16 %v327
    %v2403 = vunpack.c.l.b16 %v328
    %v2404 = vunpack.c.h.b16 %v328
    %v2405 = vunpack.c.l.b16 %v329
    %v2406 = vunpack.c.l.b16 %v330
    %v2407 = vunpack.c.h.b16 %v330
    %v2408 = vunpack.c.l.b16 %v331
    %v2409 = vunpack.c.l.b16 %v332
    %v2410 = vunpack.c.h.b16 %v332
    %v2411 = vunpack.c.l.b16 %v333
    %v2412 = vunpack.c.l.b16 %v334
    %v2413 = vunpack.c.h.b16 %v334
    %v2414 = vunpack.c.l.b16 %v335
    %v2415 = vunpack.c.l.b16 %v336
    %v2416 = vunpack.c.h.b16 %v336
    %v2417 = vunpack.c.l.b16 %v337
    %v2418 = vunpack.c.l.b16 %v338
    %v2419 = vunpack.c.h.b16 %v338
    %v2420 = vunpack.c.l.b16 %v339
    %v2421 = vunpack.c.l.b16 %v340
    %v2422 = vunpack.c.h.b16 %v340
    %v2423 = vunpack.c.l.b16 %v341
    %v2424 = vunpack.c.l.b16 %v342
    %v2425 = vunpack.c.h.b16 %v342
    %v2426 = vunpack.c.l.b16 %v343
    %v2427 = vunpack.c.l.b16 %v344
    %v2428 = vunpack.c.h.b16 %v344
    %v2429 = vunpack.c.l.b16 %v345
    %v2430 = vunpack.c.l.b16 %v346
    %v2431 = vunpack.c.h.b16 %v346
    %v2432 = vunpack.c.l.b16 %v347
    %v2433 = vunpack.c.l.b16 %v348
    %v2434 = vunpack.c.h.b16 %v348
    %v2435 = vunpack.c.l.b16 %v349
    %v2436 = vunpack.c.l.b16 %v350
    %v2437 = vunpack.c.h.b16 %v350
    %v2438 = vunpack.c.l.b16 %v351
    %v2439 = vunpack.c.l.b16 %v352
    %v2440 = vunpack.c.h.b16 %v352
    %v2441 = vunpack.c.l.b16 %v353
    %v2442 = vunpack.c.l.b16 %v354
    %v2443 = vunpack.c.h.b16 %v354
    %v2444 = vunpack.c.l.b16 %v355
    %v2445 = vunpack.c.l.b16 %v356
    %v2446 = vunpack.c.h.b16 %v356
    %v2447 = vunpack.c.l.b16 %v357
    %v2448 = vunpack.c.l.b16 %v358
    %v2449 = vunpack.c.h.b16 %v358
    %v2450 = vunpack.c.l.b16 %v359
    %v2451 = vunpack.c.l.b16 %v360
    %v2452 = vunpack.c.h.b16 %v360
    %v2453 = vunpack.c.l.b16 %v361
    %v2454 = vunpack.c.l.b16 %v362
    %v2455 = vunpack.c.h.b16 %v362
    %v2456 = vunpack.c.l.b16 %v363
    %v2457 = vunpack.c.l.b16 %v364
    %v2458 = vunpack.c.h.b16 %v364
    %v2459 = vunpack.c.l.b16 %v365
    %v2460 = vunpack.c.l.b16 %v366
    %v2461 = vunpack.c.h.b16 %v366
    %v2462 = vunpack.c.l.b16 %v367
    %v2463 = vunpack.c.l.b16 %v368
    %v2464 = vunpack.c.h.b16 %v368
    %v2465 = vunpack.c.l.b16 %v369
    %v2466 = vunpack.c.l.b16 %v370
    %v2467 = vunpack.c.h.b16 %v370
    %v2468 = vunpack.c.l.b16 %v371
    %v2469 = vunpack.c.l.b16 %v372
    %v2470 = vunpack.c.h.b16 %v372
    %v2471 = vunpack.c.l.b16 %v373
    %v2472 = vunpack.c.l.b16 %v374
    %v2473 = vunpack.c.h.b16 %v374
    %v2474 = vunpack.c.l.b16 %v375
    %v2475 = vunpack.c.l.b16 %v376
    %v2476 = vunpack.c.h.b16 %v376
    %v2477 = vunpack.c.l.b16 %v377
    %v2478 = vunpack.c.l.b16 %v378
    %v2479 = vunpack.c.h.b16 %v378
    %v2480 = vunpack.c.l.b16 %v379
    %v2481 = vunpack.c.l.b16 %v380
    %v2482 = vunpack.c.h.b16 %v380
    %v2483 = vunpack.c.l.b16 %v381
    %v2484 = vunpack.c.l.b16 %v382
    %v2485 = vunpack.c.h.b16 %v382
    %v2486 = vunpack.c.l.b16 %v383
    %v2487 = vunpack.c.l.b16 %v384
    %v2488 = vunpack.c.h.b16 %v384
    %v2489 = vunpack.c.l.b16 %v385
    %v2490 = vunpack.c.l.b16 %v386
    %v2491 = vunpack.c.h.b16 %v386
    %v2492 = vunpack.c.l.b16 %v387
    %v2493 = vunpack.c.l.b16 %v388
    %v2494 = vunpack.c.h.b16 %v388
    %v2495 = vunpack.c.l.b16 %v389
    %v2496 = vunpack.c.l.b16 %v390
    %v2497 = vunpack.c.h.b16 %v390
    %v2498 = vunpack.c.l.b16 %v391
    %v2499 = vunpack.c.l.b16 %v392
    %v2500 = vunpack.c.h.b16 %v392
    %v2501 = vunpack.c.l.b16 %v393
    %v2502 = vunpack.c.l.b16 %v394
    %v2503 = vunpack.c.h.b16 %v394
    %v2504 = vunpack.c.l.b16 %v395
    %v2505 = vunpack.c.l.b16 %v396
    %v2506 = vunpack.c.h.b16 %v396
    %v2507 = vunpack.c.l.b16 %v397
    %v2508 = vunpack.c.l.b16 %v398
    %v2509 = vunpack.c.h.b16 %v398
    %v2510 = vunpack.c.l.b16 %v399
    %v2511 = vunpack.c.l.b16 %v400
    %v2512 = vunpack.c.h.b16 %v400
    %v2513 = vunpack.c.l.b16 %v401
    %v2514 = vunpack.c.l.b16 %v402
    %v2515 = vunpack.c.h.b16 %v402
    %v2516 = vunpack.c.l.b16 %v403
    %v2517 = vunpack.c.l.b16 %v404
    %v2518 = vunpack.c.h.b16 %v404
    %v2519 = vunpack.c.l.b16 %v405
    %v2520 = vunpack.c.l.b16 %v406
    %v2521 = vunpack.c.h.b16 %v406
    %v2522 = vunpack.c.l.b16 %v407
    %v2523 = vunpack.c.l.b16 %v408
    %v2524 = vunpack.c.h.b16 %v408
    %v2525 = vunpack.c.l.b16 %v409
    %v2526 = vunpack.c.l.b16 %v410
    %v2527 = vunpack.c.h.b16 %v410
    %v2528 = vunpack.c.l.b16 %v411
    %v2529 = vunpack.c.l.b16 %v412
    %v2530 = vunpack.c.h.b16 %v412
    %v2531 = vunpack.c.l.b16 %v413
    %v2532 = vunpack.c.l.b16 %v414
    %v2533 = vunpack.c.h.b16 %v414
    %v2534 = vunpack.c.l.b16 %v415
    %v2535 = vunpack.c.l.b16 %v416
    %v2536 = vunpack.c.h.b16 %v416
    %v2537 = vunpack.c.l.b16 %v417
    %v2538 = vunpack.c.l.b16 %v418
    %v2539 = vunpack.c.h.b16 %v418
    %v2540 = vunpack.c.l.b16 %v419
    %v2541 = vunpack.c.l.b16 %v420
    %v2542 = vunpack.c.h.b16 %v420
    %v2543 = vunpack.c.l.b16 %v421
    %v2544 = vunpack.c.l.b16 %v422
    %v2545 = vunpack.c.h.b16 %v422
    %v2546 = vunpack.c.l.b16 %v423
    %v2547 = vunpack.c.l.b16 %v424
    %v2548 = vunpack.c.h.b16 %v424
    %v2549 = vunpack.c.l.b16 %v425
    %v2550 = vunpack.c.l.b16 %v426
    %v2551 = vunpack.c.h.b16 %v426
    %v2552 = vunpack.c.l.b16 %v427
    %v2553 = vunpack.c.l.b16 %v428
    %v2554 = vunpack.c.h.b16 %v428
    %v2555 = vunpack.c.l.b16 %v429
    %v2556 = vunpack.c.l.b16 %v430
    %v2557 = vunpack.c.h.b16 %v430
    %v2558 = vunpack.c.l.b16 %v431
    %v2559 = vunpack.c.l.b16 %v432
    %v2560 = vunpack.c.h.b16 %v432
    %v2561 = vunpack.c.l.b16 %v433
    %v2562 = vunpack.c.l.b16 %v434
    %v2563 = vunpack.c.h.b16 %v434
    %v2564 = vunpack.c.l.b16 %v435
    %v2565 = vunpack.c.l.b16 %v436
    %v2566 = vunpack.c.h.b16 %v436
    %v2567 = vunpack.c.l.b16 %v437
    %v2568 = vunpack.c.l.b16 %v438
    %v2569 = vunpack.c.h.b16 %v438
    %v2570 = vunpack.c.l.b16 %v439
    %v2571 = vunpack.c.l.b16 %v440
    %v2572 = vunpack.c.h.b16 %v440
    %v2573 = vunpack.c.l.b16 %v441
    %v2574 = vunpack.c.l.b16 %v442
    %v2575 = vunpack.c.h.b16 %v442
    %v2576 = vunpack.c.l.b16 %v443
    %v2577 = vunpack.c.l.b16 %v444
    %v2578 = vunpack.c.h.b16 %v444
    %v2579 = vunpack.c.l.b16 %v445
    %v2580 = vunpack.c.l.b16 %v446
    %v2581 = vunpack.c.h.b16 %v446
    %v2582 = vunpack.c.l.b16 %v447
    %v2583 = vunpack.c.l.b16 %v448
    %v2584 = vunpack.c.h.b16 %v448
    %v2585 = vunpack.c.l.b16 %v449
    %v2586 = vunpack.c.l.b16 %v450
    %v2587 = vunpack.c.h.b16 %v450
    %v2588 = vunpack.c.l.b16 %v451
    %v2589 = vunpack.c.l.b16 %v452
    %v2590 = vunpack.c.h.b16 %v452
    %v2591 = vunpack.c.l.b16 %v453
    %v2592 = vunpack.c.l.b16 %v454
    %v2593 = vunpack.c.h.b16 %v454
    %v2594 = vunpack.c.l.b16 %v455
    %v2595 = vunpack.c.l.b16 %v456
    %v2596 = vunpack.c.h.b16 %v456
    %v2597 = vunpack.c.l.b16 %v457
    %v2598 = vunpack.c.l.b16 %v458
    %v2599 = vunpack.c.h.b16 %v458
    %v2600 = vunpack.c.l.b16 %v459
    %v2601 = vunpack.c.l.b16 %v460
    %v2602 = vunpack.c.h.b16 %v460
    %v2603 = vunpack.c.l.b16 %v461
    %v2604 = vunpack.c.l.b16 %v462
    %v2605 = vunpack.c.h.b16 %v462
    %v2606 = vunpack.c.l.b16 %v463
    %v2607 = vunpack.c.l.b16 %v464
    %v2608 = vunpack.c.h.b16 %v464
    %v2609 = vunpack.c.l.b16 %v465
    %v2610 = vunpack.c.l.b16 %v466
    %v2611 = vunpack.c.h.b16 %v466
    %v2612 = vunpack.c.l.b16 %v467
    %v2613 = vunpack.c.l.b16 %v468
    %v2614 = vunpack.c.h.b16 %v468
    %v2615 = vunpack.c.l.b16 %v469
    %v2616 = vunpack.c.l.b16 %v470
    %v2617 = vunpack.c.h.b16 %v470
    %v2618 = vunpack.c.l.b16 %v471
    %v2619 = vunpack.c.l.b16 %v472
    %v2620 = vunpack.c.h.b16 %v472
    %v2621 = vunpack.c.l.b16 %v473
    %v2622 = vunpack.c.l.b16 %v474
    %v2623 = vunpack.c.h.b16 %v474
    %v2624 = vunpack.c.l.b16 %v475
    %v2625 = vunpack.c.l.b16 %v476
    %v2626 = vunpack.c.h.b16 %v476
    %v2627 = vunpack.c.l.b16 %v477
    %v2628 = vunpack.c.l.b16 %v478
    %v2629 = vunpack.c.h.b16 %v478
    %v2630 = vunpack.c.l.b16 %v479
    %v2631 = vunpack.c.l.b16 %v480
    %v2632 = vunpack.c.h.b16 %v480
    %v2633 = vunpack.c.l.b16 %v481
    %v2634 = vunpack.c.l.b16 %v482
    %v2635 = vunpack.c.h.b16 %v482
    %v2636 = vunpack.c.l.b16 %v483
    %v2637 = vunpack.c.l.b16 %v484
    %v2638 = vunpack.c.h.b16 %v484
    %v2639 = vunpack.c.l.b16 %v485
    %v2640 = vunpack.c.l.b16 %v486
    %v2641 = vunpack.c.h.b16 %v486
    %v2642 = vunpack.c.l.b16 %v487
    %v2643 = vunpack.c.l.b16 %v488
    %v2644 = vunpack.c.h.b16 %v488
    %v2645 = vunpack.c.l.b16 %v489
    %v2646 = vpack.c.b16 %v2061, %v2058
    %v2647 = vpack.c.b16 %v2062, %v2059
    %v2648 = vpack.c.b16 %v2063, %v2060
    %v2649 = vpack.c.b16 %v2067, %v2064
    %v2650 = vpack.c.b16 %v2068, %v2065
    %v2651 = vpack.c.b16 %v2069, %v2066
    %v2652 = vpack.c.b16 %v2073, %v2070
    %v2653 = vpack.c.b16 %v2074, %v2071
    %v2654 = vpack.c.b16 %v2075, %v2072
    %v2655 = vpack.c.b16 %v2079, %v2076
    %v2656 = vpack.c.b16 %v2080, %v2077
    %v2657 = vpack.c.b16 %v2081, %v2078
    %v2658 = vpack.c.b16 %v2085, %v2082
    %v2659 = vpack.c.b16 %v2086, %v2083
    %v2660 = vpack.c.b16 %v2087, %v2084
    %v2661 = vpack.c.b16 %v2091, %v2088
    %v2662 = vpack.c.b16 %v2092, %v2089
    %v2663 = vpack.c.b16 %v2093, %v2090
    %v2664 = vpack.c.b16 %v2097, %v2094
    %v2665 = vpack.c.b16 %v2098, %v2095
    %v2666 = vpack.c.b16 %v2099, %v2096
    %v2667 = vpack.c.b16 %v2103, %v2100
    %v2668 = vpack.c.b16 %v2104, %v2101
    %v2669 = vpack.c.b16 %v2105, %v2102
    %v2670 = vpack.c.b16 %v2109, %v2106
    %v2671 = vpack.c.b16 %v2110, %v2107
    %v2672 = vpack.c.b16 %v2111, %v2108
    %v2673 = vpack.c.b16 %v2115, %v2112
    %v2674 = vpack.c.b16 %v2116, %v2113
    %v2675 = vpack.c.b16 %v2117, %v2114
    %v2676 = vpack.c.b16 %v2121, %v2118
    %v2677 = vpack.c.b16 %v2122, %v2119
    %v2678 = vpack.c.b16 %v2123, %v2120
    %v2679 = vpack.c.b16 %v2127, %v2124
    %v2680 = vpack.c.b16 %v2128, %v2125
    %v2681 = vpack.c.b16 %v2129, %v2126
    %v2682 = vpack.c.b16 %v2133, %v2130
    %v2683 = vpack.c.b16 %v2134, %v2131
    %v2684 = vpack.c.b16 %v2135, %v2132
    %v2685 = vpack.c.b16 %v2139, %v2136
    %v2686 = vpack.c.b16 %v2140, %v2137
    %v2687 = vpack.c.b16 %v2141, %v2138
    %v2688 = vpack.c.b16 %v2145, %v2142
    %v2689 = vpack.c.b16 %v2146, %v2143
    %v2690 = vpack.c.b16 %v2147, %v2144
    %v2691 = vpack.c.b16 %v2151, %v2148
    %v2692 = vpack.c.b16 %v2152, %v2149
    %v2693 = vpack.c.b16 %v2153, %v2150
    %v2694 = vpack.c.b16 %v2157, %v2154
    %v2695 = vpack.c.b16 %v2158, %v2155
    %v2696 = vpack.c.b16 %v2159, %v2156
    %v2697 = vpack.c.b16 %v2163, %v2160
    %v2698 = vpack.c.b16 %v2164, %v2161
    %v2699 = vpack.c.b16 %v2165, %v2162
    %v2700 = vpack.c.b16 %v2169, %v2166
    %v2701 = vpack.c.b16 %v2170, %v2167
    %v2702 = vpack.c.b16 %v2171, %v2168
    %v2703 = vpack.c.b16 %v2175, %v2172
    %v2704 = vpack.c.b16 %v2176, %v2173
    %v2705 = vpack.c.b16 %v2177, %v2174
    %v2706 = vpack.c.b16 %v2181, %v2178
    %v2707 = vpack.c.b16 %v2182, %v2179
    %v2708 = vpack.c.b16 %v2183, %v2180
    %v2709 = vpack.c.b16 %v2187, %v2184
    %v2710 = vpack.c.b16 %v2188, %v2185
    %v2711 = vpack.c.b16 %v2189, %v2186
    %v2712 = vpack.c.b16 %v2193, %v2190
    %v2713 = vpack.c.b16 %v2194, %v2191
    %v2714 = vpack.c.b16 %v2195, %v2192
    %v2715 = vpack.c.b16 %v2199, %v2196
    %v2716 = vpack.c.b16 %v2200, %v2197
    %v2717 = vpack.c.b16 %v2201, %v2198
    %v2718 = vpack.c.b16 %v2205, %v2202
    %v2719 = vpack.c.b16 %v2206, %v2203
    %v2720 = vpack.c.b16 %v2207, %v2204
    %v2721 = vpack.c.b16 %v2211, %v2208
    %v2722 = vpack.c.b16 %v2212, %v2209
    %v2723 = vpack.c.b16 %v2213, %v2210
    %v2724 = vpack.c.b16 %v2217, %v2214
    %v2725 = vpack.c.b16 %v2218, %v2215
    %v2726 = vpack.c.b16 %v2219, %v2216
    %v2727 = vpack.c.b16 %v2223, %v2220
    %v2728 = vpack.c.b16 %v2224, %v2221
    %v2729 = vpack.c.b16 %v2225, %v2222
    %v2730 = vpack.c.b16 %v2229, %v2226
    %v2731 = vpack.c.b16 %v2230, %v2227
    %v2732 = vpack.c.b16 %v2231, %v2228
    %v2733 = vpack.c.b16 %v2235, %v2232
    %v2734 = vpack.c.b16 %v2236, %v2233
    %v2735 = vpack.c.b16 %v2237, %v2234
    %v2736 = vpack.c.b16 %v2241, %v2238
    %v2737 = vpack.c.b16 %v2242, %v2239
    %v2738 = vpack.c.b16 %v2243, %v2240
    %v2739 = vpack.c.b16 %v2247, %v2244
    %v2740 = vpack.c.b16 %v2248, %v2245
    %v2741 = vpack.c.b16 %v2249, %v2246
    %v2742 = vpack.c.b16 %v2253, %v2250
    %v2743 = vpack.c.b16 %v2254, %v2251
    %v2744 = vpack.c.b16 %v2255, %v2252
    %v2745 = vpack.c.b16 %v2259, %v2256
    %v2746 = vpack.c.b16 %v2260, %v2257
    %v2747 = vpack.c.b16 %v2261, %v2258
    %v2748 = vpack.c.b16 %v2265, %v2262
    %v2749 = vpack.c.b16 %v2266, %v2263
    %v2750 = vpack.c.b16 %v2267, %v2264
    %v2751 = vpack.c.b16 %v2271, %v2268
    %v2752 = vpack.c.b16 %v2272, %v2269
    %v2753 = vpack.c.b16 %v2273, %v2270
    %v2754 = vpack.c.b16 %v2277, %v2274
    %v2755 = vpack.c.b16 %v2278, %v2275
    %v2756 = vpack.c.b16 %v2279, %v2276
    %v2757 = vpack.c.b16 %v2283, %v2280
    %v2758 = vpack.c.b16 %v2284, %v2281
    %v2759 = vpack.c.b16 %v2285, %v2282
    %v2760 = vpack.c.b16 %v2289, %v2286
    %v2761 = vpack.c.b16 %v2290, %v2287
    %v2762 = vpack.c.b16 %v2291, %v2288
    %v2763 = vpack.c.b16 %v2295, %v2292
    %v2764 = vpack.c.b16 %v2296, %v2293
    %v2765 = vpack.c.b16 %v2297, %v2294
    %v2766 = vpack.c.b16 %v2301, %v2298
    %v2767 = vpack.c.b16 %v2302, %v2299
    %v2768 = vpack.c.b16 %v2303, %v2300
    %v2769 = vpack.c.b16 %v2307, %v2304
    %v2770 = vpack.c.b16 %v2308, %v2305
    %v2771 = vpack.c.b16 %v2309, %v2306
    %v2772 = vpack.c.b16 %v2313, %v2310
    %v2773 = vpack.c.b16 %v2314, %v2311
    %v2774 = vpack.c.b16 %v2315, %v2312
    %v2775 = vpack.c.b16 %v2319, %v2316
    %v2776 = vpack.c.b16 %v2320, %v2317
    %v2777 = vpack.c.b16 %v2321, %v2318
    %v2778 = vpack.c.b16 %v2325, %v2322
    %v2779 = vpack.c.b16 %v2326, %v2323
    %v2780 = vpack.c.b16 %v2327, %v2324
    %v2781 = vpack.c.b16 %v2331, %v2328
    %v2782 = vpack.c.b16 %v2332, %v2329
    %v2783 = vpack.c.b16 %v2333, %v2330
    %v2784 = vpack.c.b16 %v2337, %v2334
    %v2785 = vpack.c.b16 %v2338, %v2335
    %v2786 = vpack.c.b16 %v2339, %v2336
    %v2787 = vpack.c.b16 %v2343, %v2340
    %v2788 = vpack.c.b16 %v2344, %v2341
    %v2789 = vpack.c.b16 %v2345, %v2342
    %v2790 = vpack.c.b16 %v2349, %v2346
    %v2791 = vpack.c.b16 %v2350, %v2347
    %v2792 = vpack.c.b16 %v2351, %v2348
    %v2793 = vpack.c.b16 %v2355, %v2352
    %v2794 = vpack.c.b16 %v2356, %v2353
    %v2795 = vpack.c.b16 %v2357, %v2354
    %v2796 = vpack.c.b16 %v2361, %v2358
    %v2797 = vpack.c.b16 %v2362, %v2359
    %v2798 = vpack.c.b16 %v2363, %v2360
    %v2799 = vpack.c.b16 %v2367, %v2364
    %v2800 = vpack.c.b16 %v2368, %v2365
    %v2801 = vpack.c.b16 %v2369, %v2366
    %v2802 = vpack.c.b16 %v2373, %v2370
    %v2803 = vpack.c.b16 %v2374, %v2371
    %v2804 = vpack.c.b16 %v2375, %v2372
    %v2805 = vpack.c.b16 %v2379, %v2376
    %v2806 = vpack.c.b16 %v2380, %v2377
    %v2807 = vpack.c.b16 %v2381, %v2378
    %v2808 = vpack.c.b16 %v2385, %v2382
    %v2809 = vpack.c.b16 %v2386, %v2383
    %v2810 = vpack.c.b16 %v2387, %v2384
    %v2811 = vpack.c.b16 %v2391, %v2388
    %v2812 = vpack.c.b16 %v2392, %v2389
    %v2813 = vpack.c.b16 %v2393, %v2390
    %v2814 = vpack.c.b16 %v2397, %v2394
    %v2815 = vpack.c.b16 %v2398, %v2395
    %v2816 = vpack.c.b16 %v2399, %v2396
    %v2817 = vpack.c.b16 %v2403, %v2400
    %v2818 = vpack.c.b16 %v2404, %v2401
    %v2819 = vpack.c.b16 %v2405, %v2402
    %v2820 = vpack.c.b16 %v2409, %v2406
    %v2821 = vpack.c.b16 %v2410, %v2407
    %v2822 = vpack.c.b16 %v2411, %v2408
    %v2823 = vpack.c.b16 %v2415, %v2412
    %v2824 = vpack.c.b16 %v2416, %v2413
    %v2825 = vpack.c.b16 %v2417, %v2414
    %v2826 = vpack.c.b16 %v2421, %v2418
    %v2827 = vpack.c.b16 %v2422, %v2419
    %v2828 = vpack.c.b16 %v2423, %v2420
    %v2829 = vpack.c.b16 %v2427, %v2424
    %v2830 = vpack.c.b16 %v2428, %v2425
    %v2831 = vpack.c.b16 %v2429, %v2426
    %v2832 = vpack.c.b16 %v2433, %v2430
    %v2833 = vpack.c.b16 %v2434, %v2431
    %v2834 = vpack.c.b16 %v2435, %v2432
    %v2835 = vpack.c.b16 %v2439, %v2436
    %v2836 = vpack.c.b16 %v2440, %v2437
    %v2837 = vpack.c.b16 %v2441, %v2438
    %v2838 = vpack.c.b16 %v2445, %v2442
    %v2839 = vpack.c.b16 %v2446, %v2443
    %v2840 = vpack.c.b16 %v2447, %v2444
    %v2841 = vpack.c.b16 %v2451, %v2448
    %v2842 = vpack.c.b16 %v2452, %v2449
    %v2843 = vpack.c.b16 %v2453, %v2450
    %v2844 = vpack.c.b16 %v2457, %v2454
    %v2845 = vpack.c.b16 %v2458, %v2455
    %v2846 = vpack.c.b16 %v2459, %v2456
    %v2847 = vpack.c.b16 %v2463, %v2460
    %v2848 = vpack.c.b16 %v2464, %v2461
    %v2849 = vpack.c.b16 %v2465, %v2462
    %v2850 = vpack.c.b16 %v2469, %v2466
    %v2851 = vpack.c.b16 %v2470, %v2467
    %v2852 = vpack.c.b16 %v2471, %v2468
    %v2853 = vpack.c.b16 %v2475, %v2472
    %v2854 = vpack.c.b16 %v2476, %v2473
    %v2855 = vpack.c.b16 %v2477, %v2474
    %v2856 = vpack.c.b16 %v2481, %v2478
    %v2857 = vpack.c.b16 %v2482, %v2479
    %v2858 = vpack.c.b16 %v2483, %v2480
    %v2859 = vpack.c.b16 %v2487, %v2484
    %v2860 = vpack.c.b16 %v2488, %v2485
    %v2861 = vpack.c.b16 %v2489, %v2486
    %v2862 = vpack.c.b16 %v2493, %v2490
    %v2863 = vpack.c.b16 %v2494, %v2491
    %v2864 = vpack.c.b16 %v2495, %v2492
    %v2865 = vpack.c.b16 %v2499, %v2496
    %v2866 = vpack.c.b16 %v2500, %v2497
    %v2867 = vpack.c.b16 %v2501, %v2498
    %v2868 = vpack.c.b16 %v2505, %v2502
    %v2869 = vpack.c.b16 %v2506, %v2503
    %v2870 = vpack.c.b16 %v2507, %v2504
    %v2871 = vpack.c.b16 %v2511, %v2508
    %v2872 = vpack.c.b16 %v2512, %v2509
    %v2873 = vpack.c.b16 %v2513, %v2510
    %v2874 = vpack.c.b16 %v2517, %v2514
    %v2875 = vpack.c.b16 %v2518, %v2515
    %v2876 = vpack.c.b16 %v2519, %v2516
    %v2877 = vpack.c.b16 %v2523, %v2520
    %v2878 = vpack.c.b16 %v2524, %v2521
    %v2879 = vpack.c.b16 %v2525, %v2522
    %v2880 = vpack.c.b16 %v2529, %v2526
    %v2881 = vpack.c.b16 %v2530, %v2527
    %v2882 = vpack.c.b16 %v2531, %v2528
    %v2883 = vpack.c.b16 %v2535, %v2532
    %v2884 = vpack.c.b16 %v2536, %v2533
    %v2885 = vpack.c.b16 %v2537, %v2534
    %v2886 = vpack.c.b16 %v2541, %v2538
    %v2887 = vpack.c.b16 %v2542, %v2539
    %v2888 = vpack.c.b16 %v2543, %v2540
    %v2889 = vpack.c.b16 %v2547, %v2544
    %v2890 = vpack.c.b16 %v2548, %v2545
    %v2891 = vpack.c.b16 %v2549, %v2546
    %v2892 = vpack.c.b16 %v2553, %v2550
    %v2893 = vpack.c.b16 %v2554, %v2551
    %v2894 = vpack.c.b16 %v2555, %v2552
    %v2895 = vpack.c.b16 %v2559, %v2556
    %v2896 = vpack.c.b16 %v2560, %v2557
    %v2897 = vpack.c.b16 %v2561, %v2558
    %v2898 = vpack.c.b16 %v2565, %v2562
    %v2899 = vpack.c.b16 %v2566, %v2563
    %v2900 = vpack.c.b16 %v2567, %v2564
    %v2901 = vpack.c.b16 %v2571, %v2568
    %v2902 = vpack.c.b16 %v2572, %v2569
    %v2903 = vpack.c.b16 %v2573, %v2570
    %v2904 = vpack.c.b16 %v2577, %v2574
    %v2905 = vpack.c.b16 %v2578, %v2575
    %v2906 = vpack.c.b16 %v2579, %v2576
    %v2907 = vpack.c.b16 %v2583, %v2580
    %v2908 = vpack.c.b16 %v2584, %v2581
    %v2909 = vpack.c.b16 %v2585, %v2582
    %v2910 = vpack.c.b16 %v2589, %v2586
    %v2911 = vpack.c.b16 %v2590, %v2587
    %v2912 = vpack.c.b16 %v2591, %v2588
    %v2913 = vpack.c.b16 %v2595, %v2592
    %v2914 = vpack.c.b16 %v2596, %v2593
    %v2915 = vpack.c.b16 %v2597, %v2594
    %v2916 = vpack.c.b16 %v2601, %v2598
    %v2917 = vpack.c.b16 %v2602, %v2599
    %v2918 = vpack.c.b16 %v2603, %v2600
    %v2919 = vpack.c.b16 %v2607, %v2604
    %v2920 = vpack.c.b16 %v2608, %v2605
    %v2921 = vpack.c.b16 %v2609, %v2606
    %v2922 = vpack.c.b16 %v2613, %v2610
    %v2923 = vpack.c.b16 %v2614, %v2611
    %v2924 = vpack.c.b16 %v2615, %v2612
    %v2925 = vpack.c.b16 %v2619, %v2616
    %v2926 = vpack.c.b16 %v2620, %v2617
    %v2927 = vpack.c.b16 %v2621, %v2618
    %v2928 = vpack.c.b16 %v2625, %v2622
    %v2929 = vpack.c.b16 %v2626, %v2623
    %v2930 = vpack.c.b16 %v2627, %v2624
    %v2931 = vpack.c.b16 %v2631, %v2628
    %v2932 = vpack.c.b16 %v2632, %v2629
    %v2933 = vpack.c.b16 %v2633, %v2630
    %v2934 = vpack.c.b16 %v2637, %v2634
    %v2935 = vpack.c.b16 %v2638, %v2635
    %v2936 = vpack.c.b16 %v2639, %v2636
    %v2937 = vpack.c.b16 %v2643, %v2640
    %v2938 = vpack.c.b16 %v2644, %v2641
    %v2939 = vpack.c.b16 %v2645, %v2642
    %v3169 = vunpack.c.l.b16 %v33
    %v3170 = vunpack.c.l.b16 %v34
    %v3171 = vunpack.c.l.b16 %v35
    %v3172 = vunpack.c.l.b16 %v36
    %v3173 = vunpack.c.l.b16 %v37
    %v3174 = vunpack.c.l.b16 %v38
    %v3175 = vunpack.c.l.b16 %v39
    %v3176 = vunpack.c.l.b16 %v40
    %v3177 = vunpack.c.l.b16 %v41
    %v3178 = vunpack.c.l.b16 %v42
    %v3179 = vunpack.c.l.b16 %v43
    %v3180 = vunpack.c.l.b16 %v44
    %v3181 = vunpack.c.l.b16 %v45
    %v3182 = vunpack.c.l.b16 %v46
    %v3183 = vunpack.c.l.b16 %v47
    %v3184 = vunpack.c.l.b16 %v48
    %v3185 = vunpack.c.l.b16 %v49
    %v3186 = vunpack.c.l.b16 %v50
    %v3187 = vunpack.c.l.b16 %v51
    %v3188 = vunpack.c.l.b16 %v52
    %v3189 = vunpack.c.l.b16 %v53
    %v3190 = vunpack.c.l.b16 %v54
    %v3191 = vunpack.c.l.b16 %v55
    %v3192 = vunpack.c.l.b16 %v56
    %v3193 = vunpack.c.l.b16 %v57
    %v3194 = vunpack.c.l.b16 %v58
    %v3195 = vunpack.c.l.b16 %v59
    %v3196 = vunpack.c.l.b16 %v60
    %v3197 = vunpack.c.l.b16 %v61
    %v3198 = vunpack.c.l.b16 %v62
    %v3199 = vunpack.c.l.b16 %v63
    %v3200 = vunpack.c.l.b16 %v64
    %v3201 = vunpack.c.l.b16 %v65
    %v3202 = vpack.c.b16 %v3170, %v3169
    %v3203 = vpack.c.b16 %v3172, %v3171
    %v3204 = vpack.c.b16 %v3174, %v3173
    %v3205 = vpack.c.b16 %v3176, %v3175
    %v3206 = vpack.c.b16 %v3178, %v3177
    %v3207 = vpack.c.b16 %v3180, %v3179
    %v3208 = vpack.c.b16 %v3182, %v3181
    %v3209 = vpack.c.b16 %v3184, %v3183
    %v3210 = vpack.c.b16 %v3186, %v3185
    %v3211 = vpack.c.b16 %v3188, %v3187
    %v3212 = vpack.c.b16 %v3190, %v3189
    %v3213 = vpack.c.b16 %v3192, %v3191
    %v3214 = vpack.c.b16 %v3194, %v3193
    %v3215 = vpack.c.b16 %v3196, %v3195
    %v3216 = vpack.c.b16 %v3198, %v3197
    %v3217 = vpack.c.b16 %v3200, %v3199
    %v3218 = vpack.c.b16 %v3201, %v3201
    %vm3235 = vcmask 31744
    %v3237 = vsel %vm3235, %v2648, 0
    %v3240 = vsel %vm3235, %v2651, 0
    %v3243 = vsel %vm3235, %v2654, 0
    %v3246 = vsel %vm3235, %v2657, 0
    %v3249 = vsel %vm3235, %v2660, 0
    %v3252 = vsel %vm3235, %v2663, 0
    %v3255 = vsel %vm3235, %v2666, 0
    %v3258 = vsel %vm3235, %v2669, 0
    %v3261 = vsel %vm3235, %v2672, 0
    %v3264 = vsel %vm3235, %v2675, 0
    %v3267 = vsel %vm3235, %v2678, 0
    %v3270 = vsel %vm3235, %v2681, 0
    %v3273 = vsel %vm3235, %v2684, 0
    %v3276 = vsel %vm3235, %v2687, 0
    %v3279 = vsel %vm3235, %v2690, 0
    %v3282 = vsel %vm3235, %v2693, 0
    %v3285 = vsel %vm3235, %v2696, 0
    %v3288 = vsel %vm3235, %v2699, 0
    %v3291 = vsel %vm3235, %v2702, 0
    %v3294 = vsel %vm3235, %v2705, 0
    %v3297 = vsel %vm3235, %v2708, 0
    %v3300 = vsel %vm3235, %v2711, 0
    %v3303 = vsel %vm3235, %v2714, 0
    %v3306 = vsel %vm3235, %v2717, 0
    %v3309 = vsel %vm3235, %v2720, 0
    %v3312 = vsel %vm3235, %v2723, 0
    %v3315 = vsel %vm3235, %v2726, 0
    %v3318 = vsel %vm3235, %v2729, 0
    %v3321 = vsel %vm3235, %v2732, 0
    %v3324 = vsel %vm3235, %v2735, 0
    %v3327 = vsel %vm3235, %v2738, 0
    %v3330 = vsel %vm3235, %v2741, 0
    %v3333 = vsel %vm3235, %v2744, 0
    %v3336 = vsel %vm3235, %v2747, 0
    %v3339 = vsel %vm3235, %v2750, 0
    %v3342 = vsel %vm3235, %v2753, 0
    %v3345 = vsel %vm3235, %v2756, 0
    %v3348 = vsel %vm3235, %v2759, 0
    %v3351 = vsel %vm3235, %v2762, 0
    %v3354 = vsel %vm3235, %v2765, 0
    %v3357 = vsel %vm3235, %v2768, 0
    %v3360 = vsel %vm3235, %v2771, 0
    %v3363 = vsel %vm3235, %v2774, 0
    %v3366 = vsel %vm3235, %v2777, 0
    %v3369 = vsel %vm3235, %v2780, 0
    %v3372 = vsel %vm3235, %v2783, 0
    %v3375 = vsel %vm3235, %v2786, 0
    %v3378 = vsel %vm3235, %v2789, 0
    %v3381 = vsel %vm3235, %v2792, 0
    %v3384 = vsel %vm3235, %v2795, 0
    %v3387 = vsel %vm3235, %v2798, 0
    %v3390 = vsel %vm3235, %v2801, 0
    %v3393 = vsel %vm3235, %v2804, 0
    %v3396 = vsel %vm3235, %v2807, 0
    %v3399 = vsel %vm3235, %v2810, 0
    %v3402 = vsel %vm3235, %v2813, 0
    %v3405 = vsel %vm3235, %v2816, 0
    %v3408 = vsel %vm3235, %v2819, 0
    %v3411 = vsel %vm3235, %v2822, 0
    %v3414 = vsel %vm3235, %v2825, 0
    %v3417 = vsel %vm3235, %v2828, 0
    %v3420 = vsel %vm3235, %v2831, 0
    %v3423 = vsel %vm3235, %v2834, 0
    %v3426 = vsel %vm3235, %v2837, 0
    %v3429 = vsel %vm3235, %v2840, 0
    %v3432 = vsel %vm3235, %v2843, 0
    %v3435 = vsel %vm3235, %v2846, 0
    %v3438 = vsel %vm3235, %v2849, 0
    %v3441 = vsel %vm3235, %v2852, 0
    %v3444 = vsel %vm3235, %v2855, 0
    %v3447 = vsel %vm3235, %v2858, 0
    %v3450 = vsel %vm3235, %v2861, 0
    %v3453 = vsel %vm3235, %v2864, 0
    %v3456 = vsel %vm3235, %v2867, 0
    %v3459 = vsel %vm3235, %v2870, 0
    %v3462 = vsel %vm3235, %v2873, 0
    %v3465 = vsel %vm3235, %v2876, 0
    %v3468 = vsel %vm3235, %v2879, 0
    %v3471 = vsel %vm3235, %v2882, 0
    %v3474 = vsel %vm3235, %v2885, 0
    %v3477 = vsel %vm3235, %v2888, 0
    %v3480 = vsel %vm3235, %v2891, 0
    %v3483 = vsel %vm3235, %v2894, 0
    %v3486 = vsel %vm3235, %v2897, 0
    %v3489 = vsel %vm3235, %v2900, 0
    %v3492 = vsel %vm3235, %v2903, 0
    %v3495 = vsel %vm3235, %v2906, 0
    %v3498 = vsel %vm3235, %v2909, 0
    %v3501 = vsel %vm3235, %v2912, 0
    %v3504 = vsel %vm3235, %v2915, 0
    %v3507 = vsel %vm3235, %v2918, 0
    %v3510 = vsel %vm3235, %v2921, 0
    %v3513 = vsel %vm3235, %v2924, 0
    %v3516 = vsel %vm3235, %v2927, 0
    %v3519 = vsel %vm3235, %v2930, 0
    %v3522 = vsel %vm3235, %v2933, 0
    %v3525 = vsel %vm3235, %v2936, 0
    %v3528 = vsel %vm3235, %v2939, 0
    %vm3530 = vcmask 1041408
    %v3532 = vsel %vm3530, %v3218, 0
    %3534 = vmatprep.subr.bf16.mxu0 0
    %3535 = vmatpush1.bf16.msra.mxu0 %v3209
    %3536 = vmatprep.subr.bf16.mxu0 0
    %3537 = vmatpush1.bf16.msra.mxu0 %v3208
    %3538 = vmatprep.subr.bf16.mxu0 0
    %3539 = vmatpush1.bf16.msra.mxu0 %v3207
    %3540 = vmatprep.subr.bf16.mxu0 0
    %3541 = vmatpush1.bf16.msra.mxu0 %v3206
    %3542 = vmatprep.subr.bf16.mxu0 0
    %3543 = vmatpush1.bf16.msra.mxu0 %v3205
    %3544 = vmatprep.subr.bf16.mxu0 0
    %3545 = vmatpush1.bf16.msra.mxu0 %v3204
    %3546 = vmatprep.subr.bf16.mxu0 0
    %3547 = vmatpush1.bf16.msra.mxu0 %v3203
    %3548 = vmatprep.subr.bf16.mxu0 0
    %3549 = vmatpush1.bf16.msra.mxu0 %v3202
    %3550 = vmatprep.subr.bf16.mxu0 0
    %3551 = vmatpush2.bf16.msra.mxu0 %v3217
    %3552 = vmatprep.subr.bf16.mxu0 0
    %3553 = vmatpush2.bf16.msra.mxu0 %v3216
    %3554 = vmatprep.subr.bf16.mxu0 0
    %3555 = vmatpush2.bf16.msra.mxu0 %v3215
    %3556 = vmatprep.subr.bf16.mxu0 0
    %3557 = vmatpush2.bf16.msra.mxu0 %v3214
    %3558 = vmatprep.subr.bf16.mxu0 0
    %3559 = vmatpush2.bf16.msra.mxu0 %v3213
    %3560 = vmatprep.subr.bf16.mxu0 0
    %3561 = vmatpush2.bf16.msra.mxu0 %v3212
    %3562 = vmatprep.subr.bf16.mxu0 0
    %3563 = vmatpush2.bf16.msra.mxu0 %v3211
    %3564 = vmatprep.subr.bf16.mxu0 0
    %3565 = vmatpush2.bf16.msra.mxu0 %v3210
    %3566 = vmatprep.mubr.bf16.mxu0 %v2647
    %3567 = vmatmul.mubr.bf16.gmra.mxu0 %v2646
    %v3568 = vpop.f32.mrf.mxu0
    %v3569 = vadd.f32 %v689, %v3568
    %v3570 = vpop.f32.mrf.mxu0
    %v3571 = vpop.f32.mrf.mxu0
    %v3572 = vadd.f32 %v694, %v3571
    %v3573 = vpop.f32.mrf.mxu0
    %3574 = vmatprep.mubr.bf16.mxu0 %v2650
    %3575 = vmatmul.mubr.bf16.gmra.mxu0 %v2649
    %v3576 = vpop.f32.mrf.mxu0
    %v3577 = vadd.f32 %v699, %v3576
    %v3578 = vpop.f32.mrf.mxu0
    %v3579 = vpop.f32.mrf.mxu0
    %v3580 = vadd.f32 %v704, %v3579
    %v3581 = vpop.f32.mrf.mxu0
    %3582 = vmatprep.mubr.bf16.mxu0 %v2653
    %3583 = vmatmul.mubr.bf16.gmra.mxu0 %v2652
    %v3584 = vpop.f32.mrf.mxu0
    %v3585 = vadd.f32 %v709, %v3584
    %v3586 = vpop.f32.mrf.mxu0
    %v3587 = vpop.f32.mrf.mxu0
    %v3588 = vadd.f32 %v714, %v3587
    %v3589 = vpop.f32.mrf.mxu0
    %3590 = vmatprep.mubr.bf16.mxu0 %v2656
    %3591 = vmatmul.mubr.bf16.gmra.mxu0 %v2655
    %v3592 = vpop.f32.mrf.mxu0
    %v3593 = vadd.f32 %v719, %v3592
    %v3594 = vpop.f32.mrf.mxu0
    %v3595 = vpop.f32.mrf.mxu0
    %v3596 = vadd.f32 %v724, %v3595
    %v3597 = vpop.f32.mrf.mxu0
    %3598 = vmatprep.mubr.bf16.mxu0 %v2659
    %3599 = vmatmul.mubr.bf16.gmra.mxu0 %v2658
    %v3600 = vpop.f32.mrf.mxu0
    %v3601 = vadd.f32 %v729, %v3600
    %v3602 = vpop.f32.mrf.mxu0
    %v3603 = vpop.f32.mrf.mxu0
    %v3604 = vadd.f32 %v734, %v3603
    %v3605 = vpop.f32.mrf.mxu0
    %3606 = vmatprep.mubr.bf16.mxu0 %v2662
    %3607 = vmatmul.mubr.bf16.gmra.mxu0 %v2661
    %v3608 = vpop.f32.mrf.mxu0
    %v3609 = vadd.f32 %v739, %v3608
    %v3610 = vpop.f32.mrf.mxu0
    %v3611 = vpop.f32.mrf.mxu0
    %v3612 = vadd.f32 %v744, %v3611
    %v3613 = vpop.f32.mrf.mxu0
    %3614 = vmatprep.mubr.bf16.mxu0 %v2665
    %3615 = vmatmul.mubr.bf16.gmra.mxu0 %v2664
    %v3616 = vpop.f32.mrf.mxu0
    %v3617 = vadd.f32 %v749, %v3616
    %v3618 = vpop.f32.mrf.mxu0
    %v3619 = vpop.f32.mrf.mxu0
    %v3620 = vadd.f32 %v754, %v3619
    %v3621 = vpop.f32.mrf.mxu0
    %3622 = vmatprep.mubr.bf16.mxu0 %v2668
    %3623 = vmatmul.mubr.bf16.gmra.mxu0 %v2667
    %v3624 = vpop.f32.mrf.mxu0
    %v3625 = vadd.f32 %v759, %v3624
    %v3626 = vpop.f32.mrf.mxu0
    %v3627 = vpop.f32.mrf.mxu0
    %v3628 = vadd.f32 %v764, %v3627
    %v3629 = vpop.f32.mrf.mxu0
    %3630 = vmatprep.mubr.bf16.mxu0 %v2671
    %3631 = vmatmul.mubr.bf16.gmra.mxu0 %v2670
    %v3632 = vpop.f32.mrf.mxu0
    %v3633 = vadd.f32 %v769, %v3632
    %v3634 = vpop.f32.mrf.mxu0
    %v3635 = vpop.f32.mrf.mxu0
    %v3636 = vadd.f32 %v774, %v3635
    %v3637 = vpop.f32.mrf.mxu0
    %3638 = vmatprep.mubr.bf16.mxu0 %v2674
    %3639 = vmatmul.mubr.bf16.gmra.mxu0 %v2673
    %v3640 = vpop.f32.mrf.mxu0
    %v3641 = vadd.f32 %v779, %v3640
    %v3642 = vpop.f32.mrf.mxu0
    %v3643 = vpop.f32.mrf.mxu0
    %v3644 = vadd.f32 %v784, %v3643
    %v3645 = vpop.f32.mrf.mxu0
    %3646 = vmatprep.mubr.bf16.mxu0 %v2677
    %3647 = vmatmul.mubr.bf16.gmra.mxu0 %v2676
    %v3648 = vpop.f32.mrf.mxu0
    %v3649 = vadd.f32 %v789, %v3648
    %v3650 = vpop.f32.mrf.mxu0
    %v3651 = vpop.f32.mrf.mxu0
    %v3652 = vadd.f32 %v794, %v3651
    %v3653 = vpop.f32.mrf.mxu0
    %3654 = vmatprep.mubr.bf16.mxu0 %v2680
    %3655 = vmatmul.mubr.bf16.gmra.mxu0 %v2679
    %v3656 = vpop.f32.mrf.mxu0
    %v3657 = vadd.f32 %v799, %v3656
    %v3658 = vpop.f32.mrf.mxu0
    %v3659 = vpop.f32.mrf.mxu0
    %v3660 = vadd.f32 %v804, %v3659
    %v3661 = vpop.f32.mrf.mxu0
    %3662 = vmatprep.mubr.bf16.mxu0 %v2683
    %3663 = vmatmul.mubr.bf16.gmra.mxu0 %v2682
    %v3664 = vpop.f32.mrf.mxu0
    %v3665 = vadd.f32 %v809, %v3664
    %v3666 = vpop.f32.mrf.mxu0
    %v3667 = vpop.f32.mrf.mxu0
    %v3668 = vadd.f32 %v814, %v3667
    %v3669 = vpop.f32.mrf.mxu0
    %3670 = vmatprep.mubr.bf16.mxu0 %v2686
    %3671 = vmatmul.mubr.bf16.gmra.mxu0 %v2685
    %v3672 = vpop.f32.mrf.mxu0
    %v3673 = vadd.f32 %v819, %v3672
    %v3674 = vpop.f32.mrf.mxu0
    %v3675 = vpop.f32.mrf.mxu0
    %v3676 = vadd.f32 %v824, %v3675
    %v3677 = vpop.f32.mrf.mxu0
    %3678 = vmatprep.mubr.bf16.mxu0 %v2689
    %3679 = vmatmul.mubr.bf16.gmra.mxu0 %v2688
    %v3680 = vpop.f32.mrf.mxu0
    %v3681 = vadd.f32 %v829, %v3680
    %v3682 = vpop.f32.mrf.mxu0
    %v3683 = vpop.f32.mrf.mxu0
    %v3684 = vadd.f32 %v834, %v3683
    %v3685 = vpop.f32.mrf.mxu0
    %3686 = vmatprep.mubr.bf16.mxu0 %v2692
    %3687 = vmatmul.mubr.bf16.gmra.mxu0 %v2691
    %v3688 = vpop.f32.mrf.mxu0
    %v3689 = vadd.f32 %v839, %v3688
    %v3690 = vpop.f32.mrf.mxu0
    %v3691 = vpop.f32.mrf.mxu0
    %v3692 = vadd.f32 %v844, %v3691
    %v3693 = vpop.f32.mrf.mxu0
    %3694 = vmatprep.mubr.bf16.mxu0 %v2695
    %3695 = vmatmul.mubr.bf16.gmra.mxu0 %v2694
    %v3696 = vpop.f32.mrf.mxu0
    %v3697 = vadd.f32 %v849, %v3696
    %v3698 = vpop.f32.mrf.mxu0
    %v3699 = vpop.f32.mrf.mxu0
    %v3700 = vadd.f32 %v854, %v3699
    %v3701 = vpop.f32.mrf.mxu0
    %3702 = vmatprep.mubr.bf16.mxu0 %v2698
    %3703 = vmatmul.mubr.bf16.gmra.mxu0 %v2697
    %v3704 = vpop.f32.mrf.mxu0
    %v3705 = vadd.f32 %v859, %v3704
    %v3706 = vpop.f32.mrf.mxu0
    %v3707 = vpop.f32.mrf.mxu0
    %v3708 = vadd.f32 %v864, %v3707
    %v3709 = vpop.f32.mrf.mxu0
    %3710 = vmatprep.mubr.bf16.mxu0 %v2701
    %3711 = vmatmul.mubr.bf16.gmra.mxu0 %v2700
    %v3712 = vpop.f32.mrf.mxu0
    %v3713 = vadd.f32 %v869, %v3712
    %v3714 = vpop.f32.mrf.mxu0
    %v3715 = vpop.f32.mrf.mxu0
    %v3716 = vadd.f32 %v874, %v3715
    %v3717 = vpop.f32.mrf.mxu0
    %3718 = vmatprep.mubr.bf16.mxu0 %v2704
    %3719 = vmatmul.mubr.bf16.gmra.mxu0 %v2703
    %v3720 = vpop.f32.mrf.mxu0
    %v3721 = vadd.f32 %v879, %v3720
    %v3722 = vpop.f32.mrf.mxu0
    %v3723 = vpop.f32.mrf.mxu0
    %v3724 = vadd.f32 %v884, %v3723
    %v3725 = vpop.f32.mrf.mxu0
    %3726 = vmatprep.mubr.bf16.mxu0 %v2707
    %3727 = vmatmul.mubr.bf16.gmra.mxu0 %v2706
    %v3728 = vpop.f32.mrf.mxu0
    %v3729 = vadd.f32 %v889, %v3728
    %v3730 = vpop.f32.mrf.mxu0
    %v3731 = vpop.f32.mrf.mxu0
    %v3732 = vadd.f32 %v894, %v3731
    %v3733 = vpop.f32.mrf.mxu0
    %3734 = vmatprep.mubr.bf16.mxu0 %v2710
    %3735 = vmatmul.mubr.bf16.gmra.mxu0 %v2709
    %v3736 = vpop.f32.mrf.mxu0
    %v3737 = vadd.f32 %v899, %v3736
    %v3738 = vpop.f32.mrf.mxu0
    %v3739 = vpop.f32.mrf.mxu0
    %v3740 = vadd.f32 %v904, %v3739
    %v3741 = vpop.f32.mrf.mxu0
    %3742 = vmatprep.mubr.bf16.mxu0 %v2713
    %3743 = vmatmul.mubr.bf16.gmra.mxu0 %v2712
    %v3744 = vpop.f32.mrf.mxu0
    %v3745 = vadd.f32 %v909, %v3744
    %v3746 = vpop.f32.mrf.mxu0
    %v3747 = vpop.f32.mrf.mxu0
    %v3748 = vadd.f32 %v914, %v3747
    %v3749 = vpop.f32.mrf.mxu0
    %3750 = vmatprep.mubr.bf16.mxu0 %v2716
    %3751 = vmatmul.mubr.bf16.gmra.mxu0 %v2715
    %v3752 = vpop.f32.mrf.mxu0
    %v3753 = vadd.f32 %v919, %v3752
    %v3754 = vpop.f32.mrf.mxu0
    %v3755 = vpop.f32.mrf.mxu0
    %v3756 = vadd.f32 %v924, %v3755
    %v3757 = vpop.f32.mrf.mxu0
    %3758 = vmatprep.mubr.bf16.mxu0 %v2719
    %3759 = vmatmul.mubr.bf16.gmra.mxu0 %v2718
    %v3760 = vpop.f32.mrf.mxu0
    %v3761 = vadd.f32 %v929, %v3760
    %v3762 = vpop.f32.mrf.mxu0
    %v3763 = vpop.f32.mrf.mxu0
    %v3764 = vadd.f32 %v934, %v3763
    %v3765 = vpop.f32.mrf.mxu0
    %3766 = vmatprep.mubr.bf16.mxu0 %v2722
    %3767 = vmatmul.mubr.bf16.gmra.mxu0 %v2721
    %v3768 = vpop.f32.mrf.mxu0
    %v3769 = vadd.f32 %v939, %v3768
    %v3770 = vpop.f32.mrf.mxu0
    %v3771 = vpop.f32.mrf.mxu0
    %v3772 = vadd.f32 %v944, %v3771
    %v3773 = vpop.f32.mrf.mxu0
    %3774 = vmatprep.mubr.bf16.mxu0 %v2725
    %3775 = vmatmul.mubr.bf16.gmra.mxu0 %v2724
    %v3776 = vpop.f32.mrf.mxu0
    %v3777 = vadd.f32 %v949, %v3776
    %v3778 = vpop.f32.mrf.mxu0
    %v3779 = vpop.f32.mrf.mxu0
    %v3780 = vadd.f32 %v954, %v3779
    %v3781 = vpop.f32.mrf.mxu0
    %3782 = vmatprep.mubr.bf16.mxu0 %v2728
    %3783 = vmatmul.mubr.bf16.gmra.mxu0 %v2727
    %v3784 = vpop.f32.mrf.mxu0
    %v3785 = vadd.f32 %v959, %v3784
    %v3786 = vpop.f32.mrf.mxu0
    %v3787 = vpop.f32.mrf.mxu0
    %v3788 = vadd.f32 %v964, %v3787
    %v3789 = vpop.f32.mrf.mxu0
    %3790 = vmatprep.mubr.bf16.mxu0 %v2731
    %3791 = vmatmul.mubr.bf16.gmra.mxu0 %v2730
    %v3792 = vpop.f32.mrf.mxu0
    %v3793 = vadd.f32 %v969, %v3792
    %v3794 = vpop.f32.mrf.mxu0
    %v3795 = vpop.f32.mrf.mxu0
    %v3796 = vadd.f32 %v974, %v3795
    %v3797 = vpop.f32.mrf.mxu0
    %3798 = vmatprep.mubr.bf16.mxu0 %v2734
    %3799 = vmatmul.mubr.bf16.gmra.mxu0 %v2733
    %v3800 = vpop.f32.mrf.mxu0
    %v3801 = vadd.f32 %v979, %v3800
    %v3802 = vpop.f32.mrf.mxu0
    %v3803 = vpop.f32.mrf.mxu0
    %v3804 = vadd.f32 %v984, %v3803
    %v3805 = vpop.f32.mrf.mxu0
    %3806 = vmatprep.mubr.bf16.mxu0 %v2737
    %3807 = vmatmul.mubr.bf16.gmra.mxu0 %v2736
    %v3808 = vpop.f32.mrf.mxu0
    %v3809 = vadd.f32 %v989, %v3808
    %v3810 = vpop.f32.mrf.mxu0
    %v3811 = vpop.f32.mrf.mxu0
    %v3812 = vadd.f32 %v994, %v3811
    %v3813 = vpop.f32.mrf.mxu0
    %3814 = vmatprep.mubr.bf16.mxu0 %v2740
    %3815 = vmatmul.mubr.bf16.gmra.mxu0 %v2739
    %v3816 = vpop.f32.mrf.mxu0
    %v3817 = vadd.f32 %v999, %v3816
    %v3818 = vpop.f32.mrf.mxu0
    %v3819 = vpop.f32.mrf.mxu0
    %v3820 = vadd.f32 %v1004, %v3819
    %v3821 = vpop.f32.mrf.mxu0
    %3822 = vmatprep.mubr.bf16.mxu0 %v2743
    %3823 = vmatmul.mubr.bf16.gmra.mxu0 %v2742
    %v3824 = vpop.f32.mrf.mxu0
    %v3825 = vadd.f32 %v1009, %v3824
    %v3826 = vpop.f32.mrf.mxu0
    %v3827 = vpop.f32.mrf.mxu0
    %v3828 = vadd.f32 %v1014, %v3827
    %v3829 = vpop.f32.mrf.mxu0
    %3830 = vmatprep.mubr.bf16.mxu0 %v2746
    %3831 = vmatmul.mubr.bf16.gmra.mxu0 %v2745
    %v3832 = vpop.f32.mrf.mxu0
    %v3833 = vadd.f32 %v1019, %v3832
    %v3834 = vpop.f32.mrf.mxu0
    %v3835 = vpop.f32.mrf.mxu0
    %v3836 = vadd.f32 %v1024, %v3835
    %v3837 = vpop.f32.mrf.mxu0
    %3838 = vmatprep.mubr.bf16.mxu0 %v2749
    %3839 = vmatmul.mubr.bf16.gmra.mxu0 %v2748
    %v3840 = vpop.f32.mrf.mxu0
    %v3841 = vadd.f32 %v1029, %v3840
    %v3842 = vpop.f32.mrf.mxu0
    %v3843 = vpop.f32.mrf.mxu0
    %v3844 = vadd.f32 %v1034, %v3843
    %v3845 = vpop.f32.mrf.mxu0
    %3846 = vmatprep.mubr.bf16.mxu0 %v2752
    %3847 = vmatmul.mubr.bf16.gmra.mxu0 %v2751
    %v3848 = vpop.f32.mrf.mxu0
    %v3849 = vadd.f32 %v1039, %v3848
    %v3850 = vpop.f32.mrf.mxu0
    %v3851 = vpop.f32.mrf.mxu0
    %v3852 = vadd.f32 %v1044, %v3851
    %v3853 = vpop.f32.mrf.mxu0
    %3854 = vmatprep.mubr.bf16.mxu0 %v2755
    %3855 = vmatmul.mubr.bf16.gmra.mxu0 %v2754
    %v3856 = vpop.f32.mrf.mxu0
    %v3857 = vadd.f32 %v1049, %v3856
    %v3858 = vpop.f32.mrf.mxu0
    %v3859 = vpop.f32.mrf.mxu0
    %v3860 = vadd.f32 %v1054, %v3859
    %v3861 = vpop.f32.mrf.mxu0
    %3862 = vmatprep.mubr.bf16.mxu0 %v2758
    %3863 = vmatmul.mubr.bf16.gmra.mxu0 %v2757
    %v3864 = vpop.f32.mrf.mxu0
    %v3865 = vadd.f32 %v1059, %v3864
    %v3866 = vpop.f32.mrf.mxu0
    %v3867 = vpop.f32.mrf.mxu0
    %v3868 = vadd.f32 %v1064, %v3867
    %v3869 = vpop.f32.mrf.mxu0
    %3870 = vmatprep.mubr.bf16.mxu0 %v2761
    %3871 = vmatmul.mubr.bf16.gmra.mxu0 %v2760
    %v3872 = vpop.f32.mrf.mxu0
    %v3873 = vadd.f32 %v1069, %v3872
    %v3874 = vpop.f32.mrf.mxu0
    %v3875 = vpop.f32.mrf.mxu0
    %v3876 = vadd.f32 %v1074, %v3875
    %v3877 = vpop.f32.mrf.mxu0
    %3878 = vmatprep.mubr.bf16.mxu0 %v2764
    %3879 = vmatmul.mubr.bf16.gmra.mxu0 %v2763
    %v3880 = vpop.f32.mrf.mxu0
    %v3881 = vadd.f32 %v1079, %v3880
    %v3882 = vpop.f32.mrf.mxu0
    %v3883 = vpop.f32.mrf.mxu0
    %v3884 = vadd.f32 %v1084, %v3883
    %v3885 = vpop.f32.mrf.mxu0
    %3886 = vmatprep.mubr.bf16.mxu0 %v2767
    %3887 = vmatmul.mubr.bf16.gmra.mxu0 %v2766
    %v3888 = vpop.f32.mrf.mxu0
    %v3889 = vadd.f32 %v1089, %v3888
    %v3890 = vpop.f32.mrf.mxu0
    %v3891 = vpop.f32.mrf.mxu0
    %v3892 = vadd.f32 %v1094, %v3891
    %v3893 = vpop.f32.mrf.mxu0
    %3894 = vmatprep.mubr.bf16.mxu0 %v2770
    %3895 = vmatmul.mubr.bf16.gmra.mxu0 %v2769
    %v3896 = vpop.f32.mrf.mxu0
    %v3897 = vadd.f32 %v1099, %v3896
    %v3898 = vpop.f32.mrf.mxu0
    %v3899 = vpop.f32.mrf.mxu0
    %v3900 = vadd.f32 %v1104, %v3899
    %v3901 = vpop.f32.mrf.mxu0
    %3902 = vmatprep.mubr.bf16.mxu0 %v2773
    %3903 = vmatmul.mubr.bf16.gmra.mxu0 %v2772
    %v3904 = vpop.f32.mrf.mxu0
    %v3905 = vadd.f32 %v1109, %v3904
    %v3906 = vpop.f32.mrf.mxu0
    %v3907 = vpop.f32.mrf.mxu0
    %v3908 = vadd.f32 %v1114, %v3907
    %v3909 = vpop.f32.mrf.mxu0
    %3910 = vmatprep.mubr.bf16.mxu0 %v2776
    %3911 = vmatmul.mubr.bf16.gmra.mxu0 %v2775
    %v3912 = vpop.f32.mrf.mxu0
    %v3913 = vadd.f32 %v1119, %v3912
    %v3914 = vpop.f32.mrf.mxu0
    %v3915 = vpop.f32.mrf.mxu0
    %v3916 = vadd.f32 %v1124, %v3915
    %v3917 = vpop.f32.mrf.mxu0
    %3918 = vmatprep.mubr.bf16.mxu0 %v2779
    %3919 = vmatmul.mubr.bf16.gmra.mxu0 %v2778
    %v3920 = vpop.f32.mrf.mxu0
    %v3921 = vadd.f32 %v1129, %v3920
    %v3922 = vpop.f32.mrf.mxu0
    %v3923 = vpop.f32.mrf.mxu0
    %v3924 = vadd.f32 %v1134, %v3923
    %v3925 = vpop.f32.mrf.mxu0
    %3926 = vmatprep.mubr.bf16.mxu0 %v2782
    %3927 = vmatmul.mubr.bf16.gmra.mxu0 %v2781
    %v3928 = vpop.f32.mrf.mxu0
    %v3929 = vadd.f32 %v1139, %v3928
    %v3930 = vpop.f32.mrf.mxu0
    %v3931 = vpop.f32.mrf.mxu0
    %v3932 = vadd.f32 %v1144, %v3931
    %v3933 = vpop.f32.mrf.mxu0
    %3934 = vmatprep.mubr.bf16.mxu0 %v2785
    %3935 = vmatmul.mubr.bf16.gmra.mxu0 %v2784
    %v3936 = vpop.f32.mrf.mxu0
    %v3937 = vadd.f32 %v1149, %v3936
    %v3938 = vpop.f32.mrf.mxu0
    %v3939 = vpop.f32.mrf.mxu0
    %v3940 = vadd.f32 %v1154, %v3939
    %v3941 = vpop.f32.mrf.mxu0
    %3942 = vmatprep.mubr.bf16.mxu0 %v2788
    %3943 = vmatmul.mubr.bf16.gmra.mxu0 %v2787
    %v3944 = vpop.f32.mrf.mxu0
    %v3945 = vadd.f32 %v1159, %v3944
    %v3946 = vpop.f32.mrf.mxu0
    %v3947 = vpop.f32.mrf.mxu0
    %v3948 = vadd.f32 %v1164, %v3947
    %v3949 = vpop.f32.mrf.mxu0
    %3950 = vmatprep.mubr.bf16.mxu0 %v2791
    %3951 = vmatmul.mubr.bf16.gmra.mxu0 %v2790
    %v3952 = vpop.f32.mrf.mxu0
    %v3953 = vadd.f32 %v1169, %v3952
    %v3954 = vpop.f32.mrf.mxu0
    %v3955 = vpop.f32.mrf.mxu0
    %v3956 = vadd.f32 %v1174, %v3955
    %v3957 = vpop.f32.mrf.mxu0
    %3958 = vmatprep.mubr.bf16.mxu0 %v2794
    %3959 = vmatmul.mubr.bf16.gmra.mxu0 %v2793
    %v3960 = vpop.f32.mrf.mxu0
    %v3961 = vadd.f32 %v1179, %v3960
    %v3962 = vpop.f32.mrf.mxu0
    %v3963 = vpop.f32.mrf.mxu0
    %v3964 = vadd.f32 %v1184, %v3963
    %v3965 = vpop.f32.mrf.mxu0
    %3966 = vmatprep.mubr.bf16.mxu0 %v2797
    %3967 = vmatmul.mubr.bf16.gmra.mxu0 %v2796
    %v3968 = vpop.f32.mrf.mxu0
    %v3969 = vadd.f32 %v1189, %v3968
    %v3970 = vpop.f32.mrf.mxu0
    %v3971 = vpop.f32.mrf.mxu0
    %v3972 = vadd.f32 %v1194, %v3971
    %v3973 = vpop.f32.mrf.mxu0
    %3974 = vmatprep.mubr.bf16.mxu0 %v2800
    %3975 = vmatmul.mubr.bf16.gmra.mxu0 %v2799
    %v3976 = vpop.f32.mrf.mxu0
    %v3977 = vadd.f32 %v1199, %v3976
    %v3978 = vpop.f32.mrf.mxu0
    %v3979 = vpop.f32.mrf.mxu0
    %v3980 = vadd.f32 %v1204, %v3979
    %v3981 = vpop.f32.mrf.mxu0
    %3982 = vmatprep.mubr.bf16.mxu0 %v2803
    %3983 = vmatmul.mubr.bf16.gmra.mxu0 %v2802
    %v3984 = vpop.f32.mrf.mxu0
    %v3985 = vadd.f32 %v1209, %v3984
    %v3986 = vpop.f32.mrf.mxu0
    %v3987 = vpop.f32.mrf.mxu0
    %v3988 = vadd.f32 %v1214, %v3987
    %v3989 = vpop.f32.mrf.mxu0
    %3990 = vmatprep.mubr.bf16.mxu0 %v2806
    %3991 = vmatmul.mubr.bf16.gmra.mxu0 %v2805
    %v3992 = vpop.f32.mrf.mxu0
    %v3993 = vadd.f32 %v1219, %v3992
    %v3994 = vpop.f32.mrf.mxu0
    %v3995 = vpop.f32.mrf.mxu0
    %v3996 = vadd.f32 %v1224, %v3995
    %v3997 = vpop.f32.mrf.mxu0
    %3998 = vmatprep.mubr.bf16.mxu0 %v2809
    %3999 = vmatmul.mubr.bf16.gmra.mxu0 %v2808
    %v4000 = vpop.f32.mrf.mxu0
    %v4001 = vadd.f32 %v1229, %v4000
    %v4002 = vpop.f32.mrf.mxu0
    %v4003 = vpop.f32.mrf.mxu0
    %v4004 = vadd.f32 %v1234, %v4003
    %v4005 = vpop.f32.mrf.mxu0
    %4006 = vmatprep.mubr.bf16.mxu0 %v2812
    %4007 = vmatmul.mubr.bf16.gmra.mxu0 %v2811
    %v4008 = vpop.f32.mrf.mxu0
    %v4009 = vadd.f32 %v1239, %v4008
    %v4010 = vpop.f32.mrf.mxu0
    %v4011 = vpop.f32.mrf.mxu0
    %v4012 = vadd.f32 %v1244, %v4011
    %v4013 = vpop.f32.mrf.mxu0
    %4014 = vmatprep.mubr.bf16.mxu0 %v2815
    %4015 = vmatmul.mubr.bf16.gmra.mxu0 %v2814
    %v4016 = vpop.f32.mrf.mxu0
    %v4017 = vadd.f32 %v1249, %v4016
    %v4018 = vpop.f32.mrf.mxu0
    %v4019 = vpop.f32.mrf.mxu0
    %v4020 = vadd.f32 %v1254, %v4019
    %v4021 = vpop.f32.mrf.mxu0
    %4022 = vmatprep.mubr.bf16.mxu0 %v2818
    %4023 = vmatmul.mubr.bf16.gmra.mxu0 %v2817
    %v4024 = vpop.f32.mrf.mxu0
    %v4025 = vadd.f32 %v1259, %v4024
    %v4026 = vpop.f32.mrf.mxu0
    %v4027 = vpop.f32.mrf.mxu0
    %v4028 = vadd.f32 %v1264, %v4027
    %v4029 = vpop.f32.mrf.mxu0
    %4030 = vmatprep.mubr.bf16.mxu0 %v2821
    %4031 = vmatmul.mubr.bf16.gmra.mxu0 %v2820
    %v4032 = vpop.f32.mrf.mxu0
    %v4033 = vadd.f32 %v1269, %v4032
    %v4034 = vpop.f32.mrf.mxu0
    %v4035 = vpop.f32.mrf.mxu0
    %v4036 = vadd.f32 %v1274, %v4035
    %v4037 = vpop.f32.mrf.mxu0
    %4038 = vmatprep.mubr.bf16.mxu0 %v2824
    %4039 = vmatmul.mubr.bf16.gmra.mxu0 %v2823
    %v4040 = vpop.f32.mrf.mxu0
    %v4041 = vadd.f32 %v1279, %v4040
    %v4042 = vpop.f32.mrf.mxu0
    %v4043 = vpop.f32.mrf.mxu0
    %v4044 = vadd.f32 %v1284, %v4043
    %v4045 = vpop.f32.mrf.mxu0
    %4046 = vmatprep.mubr.bf16.mxu0 %v2827
    %4047 = vmatmul.mubr.bf16.gmra.mxu0 %v2826
    %v4048 = vpop.f32.mrf.mxu0
    %v4049 = vadd.f32 %v1289, %v4048
    %v4050 = vpop.f32.mrf.mxu0
    %v4051 = vpop.f32.mrf.mxu0
    %v4052 = vadd.f32 %v1294, %v4051
    %v4053 = vpop.f32.mrf.mxu0
    %4054 = vmatprep.mubr.bf16.mxu0 %v2830
    %4055 = vmatmul.mubr.bf16.gmra.mxu0 %v2829
    %v4056 = vpop.f32.mrf.mxu0
    %v4057 = vadd.f32 %v1299, %v4056
    %v4058 = vpop.f32.mrf.mxu0
    %v4059 = vpop.f32.mrf.mxu0
    %v4060 = vadd.f32 %v1304, %v4059
    %v4061 = vpop.f32.mrf.mxu0
    %4062 = vmatprep.mubr.bf16.mxu0 %v2833
    %4063 = vmatmul.mubr.bf16.gmra.mxu0 %v2832
    %v4064 = vpop.f32.mrf.mxu0
    %v4065 = vadd.f32 %v1309, %v4064
    %v4066 = vpop.f32.mrf.mxu0
    %v4067 = vpop.f32.mrf.mxu0
    %v4068 = vadd.f32 %v1314, %v4067
    %v4069 = vpop.f32.mrf.mxu0
    %4070 = vmatprep.mubr.bf16.mxu0 %v2836
    %4071 = vmatmul.mubr.bf16.gmra.mxu0 %v2835
    %v4072 = vpop.f32.mrf.mxu0
    %v4073 = vadd.f32 %v1319, %v4072
    %v4074 = vpop.f32.mrf.mxu0
    %v4075 = vpop.f32.mrf.mxu0
    %v4076 = vadd.f32 %v1324, %v4075
    %v4077 = vpop.f32.mrf.mxu0
    %4078 = vmatprep.mubr.bf16.mxu0 %v2839
    %4079 = vmatmul.mubr.bf16.gmra.mxu0 %v2838
    %v4080 = vpop.f32.mrf.mxu0
    %v4081 = vadd.f32 %v1329, %v4080
    %v4082 = vpop.f32.mrf.mxu0
    %v4083 = vpop.f32.mrf.mxu0
    %v4084 = vadd.f32 %v1334, %v4083
    %v4085 = vpop.f32.mrf.mxu0
    %4086 = vmatprep.mubr.bf16.mxu0 %v2842
    %4087 = vmatmul.mubr.bf16.gmra.mxu0 %v2841
    %v4088 = vpop.f32.mrf.mxu0
    %v4089 = vadd.f32 %v1339, %v4088
    %v4090 = vpop.f32.mrf.mxu0
    %v4091 = vpop.f32.mrf.mxu0
    %v4092 = vadd.f32 %v1344, %v4091
    %v4093 = vpop.f32.mrf.mxu0
    %4094 = vmatprep.mubr.bf16.mxu0 %v2845
    %4095 = vmatmul.mubr.bf16.gmra.mxu0 %v2844
    %v4096 = vpop.f32.mrf.mxu0
    %v4097 = vadd.f32 %v1349, %v4096
    %v4098 = vpop.f32.mrf.mxu0
    %v4099 = vpop.f32.mrf.mxu0
    %v4100 = vadd.f32 %v1354, %v4099
    %v4101 = vpop.f32.mrf.mxu0
    %4102 = vmatprep.mubr.bf16.mxu0 %v2848
    %4103 = vmatmul.mubr.bf16.gmra.mxu0 %v2847
    %v4104 = vpop.f32.mrf.mxu0
    %v4105 = vadd.f32 %v1359, %v4104
    %v4106 = vpop.f32.mrf.mxu0
    %v4107 = vpop.f32.mrf.mxu0
    %v4108 = vadd.f32 %v1364, %v4107
    %v4109 = vpop.f32.mrf.mxu0
    %4110 = vmatprep.mubr.bf16.mxu0 %v2851
    %4111 = vmatmul.mubr.bf16.gmra.mxu0 %v2850
    %v4112 = vpop.f32.mrf.mxu0
    %v4113 = vadd.f32 %v1369, %v4112
    %v4114 = vpop.f32.mrf.mxu0
    %v4115 = vpop.f32.mrf.mxu0
    %v4116 = vadd.f32 %v1374, %v4115
    %v4117 = vpop.f32.mrf.mxu0
    %4118 = vmatprep.mubr.bf16.mxu0 %v2854
    %4119 = vmatmul.mubr.bf16.gmra.mxu0 %v2853
    %v4120 = vpop.f32.mrf.mxu0
    %v4121 = vadd.f32 %v1379, %v4120
    %v4122 = vpop.f32.mrf.mxu0
    %v4123 = vpop.f32.mrf.mxu0
    %v4124 = vadd.f32 %v1384, %v4123
    %v4125 = vpop.f32.mrf.mxu0
    %4126 = vmatprep.mubr.bf16.mxu0 %v2857
    %4127 = vmatmul.mubr.bf16.gmra.mxu0 %v2856
    %v4128 = vpop.f32.mrf.mxu0
    %v4129 = vadd.f32 %v1389, %v4128
    %v4130 = vpop.f32.mrf.mxu0
    %v4131 = vpop.f32.mrf.mxu0
    %v4132 = vadd.f32 %v1394, %v4131
    %v4133 = vpop.f32.mrf.mxu0
    %4134 = vmatprep.mubr.bf16.mxu0 %v2860
    %4135 = vmatmul.mubr.bf16.gmra.mxu0 %v2859
    %v4136 = vpop.f32.mrf.mxu0
    %v4137 = vadd.f32 %v1399, %v4136
    %v4138 = vpop.f32.mrf.mxu0
    %v4139 = vpop.f32.mrf.mxu0
    %v4140 = vadd.f32 %v1404, %v4139
    %v4141 = vpop.f32.mrf.mxu0
    %4142 = vmatprep.mubr.bf16.mxu0 %v2863
    %4143 = vmatmul.mubr.bf16.gmra.mxu0 %v2862
    %v4144 = vpop.f32.mrf.mxu0
    %v4145 = vadd.f32 %v1409, %v4144
    %v4146 = vpop.f32.mrf.mxu0
    %v4147 = vpop.f32.mrf.mxu0
    %v4148 = vadd.f32 %v1414, %v4147
    %v4149 = vpop.f32.mrf.mxu0
    %4150 = vmatprep.mubr.bf16.mxu0 %v2866
    %4151 = vmatmul.mubr.bf16.gmra.mxu0 %v2865
    %v4152 = vpop.f32.mrf.mxu0
    %v4153 = vadd.f32 %v1419, %v4152
    %v4154 = vpop.f32.mrf.mxu0
    %v4155 = vpop.f32.mrf.mxu0
    %v4156 = vadd.f32 %v1424, %v4155
    %v4157 = vpop.f32.mrf.mxu0
    %4158 = vmatprep.mubr.bf16.mxu0 %v2869
    %4159 = vmatmul.mubr.bf16.gmra.mxu0 %v2868
    %v4160 = vpop.f32.mrf.mxu0
    %v4161 = vadd.f32 %v1429, %v4160
    %v4162 = vpop.f32.mrf.mxu0
    %v4163 = vpop.f32.mrf.mxu0
    %v4164 = vadd.f32 %v1434, %v4163
    %v4165 = vpop.f32.mrf.mxu0
    %4166 = vmatprep.mubr.bf16.mxu0 %v2872
    %4167 = vmatmul.mubr.bf16.gmra.mxu0 %v2871
    %v4168 = vpop.f32.mrf.mxu0
    %v4169 = vadd.f32 %v1439, %v4168
    %v4170 = vpop.f32.mrf.mxu0
    %v4171 = vpop.f32.mrf.mxu0
    %v4172 = vadd.f32 %v1444, %v4171
    %v4173 = vpop.f32.mrf.mxu0
    %4174 = vmatprep.mubr.bf16.mxu0 %v2875
    %4175 = vmatmul.mubr.bf16.gmra.mxu0 %v2874
    %v4176 = vpop.f32.mrf.mxu0
    %v4177 = vadd.f32 %v1449, %v4176
    %v4178 = vpop.f32.mrf.mxu0
    %v4179 = vpop.f32.mrf.mxu0
    %v4180 = vadd.f32 %v1454, %v4179
    %v4181 = vpop.f32.mrf.mxu0
    %4182 = vmatprep.mubr.bf16.mxu0 %v2878
    %4183 = vmatmul.mubr.bf16.gmra.mxu0 %v2877
    %v4184 = vpop.f32.mrf.mxu0
    %v4185 = vadd.f32 %v1459, %v4184
    %v4186 = vpop.f32.mrf.mxu0
    %v4187 = vpop.f32.mrf.mxu0
    %v4188 = vadd.f32 %v1464, %v4187
    %v4189 = vpop.f32.mrf.mxu0
    %4190 = vmatprep.mubr.bf16.mxu0 %v2881
    %4191 = vmatmul.mubr.bf16.gmra.mxu0 %v2880
    %v4192 = vpop.f32.mrf.mxu0
    %v4193 = vadd.f32 %v1469, %v4192
    %v4194 = vpop.f32.mrf.mxu0
    %v4195 = vpop.f32.mrf.mxu0
    %v4196 = vadd.f32 %v1474, %v4195
    %v4197 = vpop.f32.mrf.mxu0
    %4198 = vmatprep.mubr.bf16.mxu0 %v2884
    %4199 = vmatmul.mubr.bf16.gmra.mxu0 %v2883
    %v4200 = vpop.f32.mrf.mxu0
    %v4201 = vadd.f32 %v1479, %v4200
    %v4202 = vpop.f32.mrf.mxu0
    %v4203 = vpop.f32.mrf.mxu0
    %v4204 = vadd.f32 %v1484, %v4203
    %v4205 = vpop.f32.mrf.mxu0
    %4206 = vmatprep.mubr.bf16.mxu0 %v2887
    %4207 = vmatmul.mubr.bf16.gmra.mxu0 %v2886
    %v4208 = vpop.f32.mrf.mxu0
    %v4209 = vadd.f32 %v1489, %v4208
    %v4210 = vpop.f32.mrf.mxu0
    %v4211 = vpop.f32.mrf.mxu0
    %v4212 = vadd.f32 %v1494, %v4211
    %v4213 = vpop.f32.mrf.mxu0
    %4214 = vmatprep.mubr.bf16.mxu0 %v2890
    %4215 = vmatmul.mubr.bf16.gmra.mxu0 %v2889
    %v4216 = vpop.f32.mrf.mxu0
    %v4217 = vadd.f32 %v1499, %v4216
    %v4218 = vpop.f32.mrf.mxu0
    %v4219 = vpop.f32.mrf.mxu0
    %v4220 = vadd.f32 %v1504, %v4219
    %v4221 = vpop.f32.mrf.mxu0
    %4222 = vmatprep.mubr.bf16.mxu0 %v2893
    %4223 = vmatmul.mubr.bf16.gmra.mxu0 %v2892
    %v4224 = vpop.f32.mrf.mxu0
    %v4225 = vadd.f32 %v1509, %v4224
    %v4226 = vpop.f32.mrf.mxu0
    %v4227 = vpop.f32.mrf.mxu0
    %v4228 = vadd.f32 %v1514, %v4227
    %v4229 = vpop.f32.mrf.mxu0
    %4230 = vmatprep.mubr.bf16.mxu0 %v2896
    %4231 = vmatmul.mubr.bf16.gmra.mxu0 %v2895
    %v4232 = vpop.f32.mrf.mxu0
    %v4233 = vadd.f32 %v1519, %v4232
    %v4234 = vpop.f32.mrf.mxu0
    %v4235 = vpop.f32.mrf.mxu0
    %v4236 = vadd.f32 %v1524, %v4235
    %v4237 = vpop.f32.mrf.mxu0
    %4238 = vmatprep.mubr.bf16.mxu0 %v2899
    %4239 = vmatmul.mubr.bf16.gmra.mxu0 %v2898
    %v4240 = vpop.f32.mrf.mxu0
    %v4241 = vadd.f32 %v1529, %v4240
    %v4242 = vpop.f32.mrf.mxu0
    %v4243 = vpop.f32.mrf.mxu0
    %v4244 = vadd.f32 %v1534, %v4243
    %v4245 = vpop.f32.mrf.mxu0
    %4246 = vmatprep.mubr.bf16.mxu0 %v2902
    %4247 = vmatmul.mubr.bf16.gmra.mxu0 %v2901
    %v4248 = vpop.f32.mrf.mxu0
    %v4249 = vadd.f32 %v1539, %v4248
    %v4250 = vpop.f32.mrf.mxu0
    %v4251 = vpop.f32.mrf.mxu0
    %v4252 = vadd.f32 %v1544, %v4251
    %v4253 = vpop.f32.mrf.mxu0
    %4254 = vmatprep.mubr.bf16.mxu0 %v2905
    %4255 = vmatmul.mubr.bf16.gmra.mxu0 %v2904
    %v4256 = vpop.f32.mrf.mxu0
    %v4257 = vadd.f32 %v1549, %v4256
    %v4258 = vpop.f32.mrf.mxu0
    %v4259 = vpop.f32.mrf.mxu0
    %v4260 = vadd.f32 %v1554, %v4259
    %v4261 = vpop.f32.mrf.mxu0
    %4262 = vmatprep.mubr.bf16.mxu0 %v2908
    %4263 = vmatmul.mubr.bf16.gmra.mxu0 %v2907
    %v4264 = vpop.f32.mrf.mxu0
    %v4265 = vadd.f32 %v1559, %v4264
    %v4266 = vpop.f32.mrf.mxu0
    %v4267 = vpop.f32.mrf.mxu0
    %v4268 = vadd.f32 %v1564, %v4267
    %v4269 = vpop.f32.mrf.mxu0
    %4270 = vmatprep.mubr.bf16.mxu0 %v2911
    %4271 = vmatmul.mubr.bf16.gmra.mxu0 %v2910
    %v4272 = vpop.f32.mrf.mxu0
    %v4273 = vadd.f32 %v1569, %v4272
    %v4274 = vpop.f32.mrf.mxu0
    %v4275 = vpop.f32.mrf.mxu0
    %v4276 = vadd.f32 %v1574, %v4275
    %v4277 = vpop.f32.mrf.mxu0
    %4278 = vmatprep.mubr.bf16.mxu0 %v2914
    %4279 = vmatmul.mubr.bf16.gmra.mxu0 %v2913
    %v4280 = vpop.f32.mrf.mxu0
    %v4281 = vadd.f32 %v1579, %v4280
    %v4282 = vpop.f32.mrf.mxu0
    %v4283 = vpop.f32.mrf.mxu0
    %v4284 = vadd.f32 %v1584, %v4283
    %v4285 = vpop.f32.mrf.mxu0
    %4286 = vmatprep.mubr.bf16.mxu0 %v2917
    %4287 = vmatmul.mubr.bf16.gmra.mxu0 %v2916
    %v4288 = vpop.f32.mrf.mxu0
    %v4289 = vadd.f32 %v1589, %v4288
    %v4290 = vpop.f32.mrf.mxu0
    %v4291 = vpop.f32.mrf.mxu0
    %v4292 = vadd.f32 %v1594, %v4291
    %v4293 = vpop.f32.mrf.mxu0
    %4294 = vmatprep.mubr.bf16.mxu0 %v2920
    %4295 = vmatmul.mubr.bf16.gmra.mxu0 %v2919
    %v4296 = vpop.f32.mrf.mxu0
    %v4297 = vadd.f32 %v1599, %v4296
    %v4298 = vpop.f32.mrf.mxu0
    %v4299 = vpop.f32.mrf.mxu0
    %v4300 = vadd.f32 %v1604, %v4299
    %v4301 = vpop.f32.mrf.mxu0
    %4302 = vmatprep.mubr.bf16.mxu0 %v2923
    %4303 = vmatmul.mubr.bf16.gmra.mxu0 %v2922
    %v4304 = vpop.f32.mrf.mxu0
    %v4305 = vadd.f32 %v1609, %v4304
    %v4306 = vpop.f32.mrf.mxu0
    %v4307 = vpop.f32.mrf.mxu0
    %v4308 = vadd.f32 %v1614, %v4307
    %v4309 = vpop.f32.mrf.mxu0
    %4310 = vmatprep.mubr.bf16.mxu0 %v2926
    %4311 = vmatmul.mubr.bf16.gmra.mxu0 %v2925
    %v4312 = vpop.f32.mrf.mxu0
    %v4313 = vadd.f32 %v1619, %v4312
    %v4314 = vpop.f32.mrf.mxu0
    %v4315 = vpop.f32.mrf.mxu0
    %v4316 = vadd.f32 %v1624, %v4315
    %v4317 = vpop.f32.mrf.mxu0
    %4318 = vmatprep.mubr.bf16.mxu0 %v2929
    %4319 = vmatmul.mubr.bf16.gmra.mxu0 %v2928
    %v4320 = vpop.f32.mrf.mxu0
    %v4321 = vadd.f32 %v1629, %v4320
    %v4322 = vpop.f32.mrf.mxu0
    %v4323 = vpop.f32.mrf.mxu0
    %v4324 = vadd.f32 %v1634, %v4323
    %v4325 = vpop.f32.mrf.mxu0
    %4326 = vmatprep.mubr.bf16.mxu0 %v2932
    %4327 = vmatmul.mubr.bf16.gmra.mxu0 %v2931
    %v4328 = vpop.f32.mrf.mxu0
    %v4329 = vadd.f32 %v1639, %v4328
    %v4330 = vpop.f32.mrf.mxu0
    %v4331 = vpop.f32.mrf.mxu0
    %v4332 = vadd.f32 %v1644, %v4331
    %v4333 = vpop.f32.mrf.mxu0
    %4334 = vmatprep.mubr.bf16.mxu0 %v2935
    %4335 = vmatmul.mubr.bf16.gmra.mxu0 %v2934
    %v4336 = vpop.f32.mrf.mxu0
    %v4337 = vadd.f32 %v1649, %v4336
    %v4338 = vpop.f32.mrf.mxu0
    %v4339 = vpop.f32.mrf.mxu0
    %v4340 = vadd.f32 %v1654, %v4339
    %v4341 = vpop.f32.mrf.mxu0
    %4342 = vmatprep.mubr.bf16.mxu0 %v2938
    %4343 = vmatmul.mubr.bf16.gmra.mxu0 %v2937
    %v4344 = vpop.f32.mrf.mxu0
    %v4345 = vadd.f32 %v1659, %v4344
    %v4346 = vpop.f32.mrf.mxu0
    %v4347 = vpop.f32.mrf.mxu0
    %v4348 = vadd.f32 %v1664, %v4347
    %v4349 = vpop.f32.mrf.mxu0
    %4350 = vdwg.mxu0
    %4351 = vmatprep.subr.bf16.mxu0 0
    %4352 = vmatpush1.bf16.msra.mxu0 0
    %4353 = vmatprep.subr.bf16.mxu0 0
    %4354 = vmatpush1.bf16.msra.mxu0 0
    %4355 = vmatprep.subr.bf16.mxu0 0
    %4356 = vmatpush1.bf16.msra.mxu0 0
    %4357 = vmatprep.subr.bf16.mxu0 0
    %4358 = vmatpush1.bf16.msra.mxu0 0
    %4359 = vmatprep.subr.bf16.mxu0 0
    %4360 = vmatpush1.bf16.msra.mxu0 0
    %4361 = vmatprep.subr.bf16.mxu0 0
    %4362 = vmatpush1.bf16.msra.mxu0 0
    %4363 = vmatprep.subr.bf16.mxu0 0
    %4364 = vmatpush1.bf16.msra.mxu0 0
    %4365 = vmatprep.subr.bf16.mxu0 0
    %4366 = vmatpush1.bf16.msra.mxu0 %v3532
    %4367 = vmatprep.subr.bf16.mxu0 0
    %4368 = vmatpush2.bf16.msra.mxu0 0
    %4369 = vmatprep.subr.bf16.mxu0 0
    %4370 = vmatpush2.bf16.msra.mxu0 0
    %4371 = vmatprep.subr.bf16.mxu0 0
    %4372 = vmatpush2.bf16.msra.mxu0 0
    %4373 = vmatprep.subr.bf16.mxu0 0
    %4374 = vmatpush2.bf16.msra.mxu0 0
    %4375 = vmatprep.subr.bf16.mxu0 0
    %4376 = vmatpush2.bf16.msra.mxu0 0
    %4377 = vmatprep.subr.bf16.mxu0 0
    %4378 = vmatpush2.bf16.msra.mxu0 0
    %4379 = vmatprep.subr.bf16.mxu0 0
    %4380 = vmatpush2.bf16.msra.mxu0 0
    %4381 = vmatprep.subr.bf16.mxu0 0
    %4382 = vmatpush2.bf16.msra.mxu0 0
    %4383 = vmatprep.mubr.bf16.mxu0 0
    %4384 = vmatmul.mubr.bf16.gmra.mxu0 %v3237
    %v4385 = vpop.f32.mrf.mxu0
    %v4386 = vadd.f32 %v3569, %v4385
    %v4387 = vpop.f32.mrf.mxu0
    %v4388 = vpop.f32.mrf.mxu0
    %v4389 = vadd.f32 %v3572, %v4388
    %v4390 = vpop.f32.mrf.mxu0
    %4391 = vmatprep.mubr.bf16.mxu0 0
    %4392 = vmatmul.mubr.bf16.gmra.mxu0 %v3240
    %v4393 = vpop.f32.mrf.mxu0
    %v4394 = vadd.f32 %v3577, %v4393
    %v4395 = vpop.f32.mrf.mxu0
    %v4396 = vpop.f32.mrf.mxu0
    %v4397 = vadd.f32 %v3580, %v4396
    %v4398 = vpop.f32.mrf.mxu0
    %4399 = vmatprep.mubr.bf16.mxu0 0
    %4400 = vmatmul.mubr.bf16.gmra.mxu0 %v3243
    %v4401 = vpop.f32.mrf.mxu0
    %v4402 = vadd.f32 %v3585, %v4401
    %v4403 = vpop.f32.mrf.mxu0
    %v4404 = vpop.f32.mrf.mxu0
    %v4405 = vadd.f32 %v3588, %v4404
    %v4406 = vpop.f32.mrf.mxu0
    %4407 = vmatprep.mubr.bf16.mxu0 0
    %4408 = vmatmul.mubr.bf16.gmra.mxu0 %v3246
    %v4409 = vpop.f32.mrf.mxu0
    %v4410 = vadd.f32 %v3593, %v4409
    %v4411 = vpop.f32.mrf.mxu0
    %v4412 = vpop.f32.mrf.mxu0
    %v4413 = vadd.f32 %v3596, %v4412
    %v4414 = vpop.f32.mrf.mxu0
    %4415 = vmatprep.mubr.bf16.mxu0 0
    %4416 = vmatmul.mubr.bf16.gmra.mxu0 %v3249
    %v4417 = vpop.f32.mrf.mxu0
    %v4418 = vadd.f32 %v3601, %v4417
    %v4419 = vpop.f32.mrf.mxu0
    %v4420 = vpop.f32.mrf.mxu0
    %v4421 = vadd.f32 %v3604, %v4420
    %v4422 = vpop.f32.mrf.mxu0
    %4423 = vmatprep.mubr.bf16.mxu0 0
    %4424 = vmatmul.mubr.bf16.gmra.mxu0 %v3252
    %v4425 = vpop.f32.mrf.mxu0
    %v4426 = vadd.f32 %v3609, %v4425
    %v4427 = vpop.f32.mrf.mxu0
    %v4428 = vpop.f32.mrf.mxu0
    %v4429 = vadd.f32 %v3612, %v4428
    %v4430 = vpop.f32.mrf.mxu0
    %4431 = vmatprep.mubr.bf16.mxu0 0
    %4432 = vmatmul.mubr.bf16.gmra.mxu0 %v3255
    %v4433 = vpop.f32.mrf.mxu0
    %v4434 = vadd.f32 %v3617, %v4433
    %v4435 = vpop.f32.mrf.mxu0
    %v4436 = vpop.f32.mrf.mxu0
    %v4437 = vadd.f32 %v3620, %v4436
    %v4438 = vpop.f32.mrf.mxu0
    %4439 = vmatprep.mubr.bf16.mxu0 0
    %4440 = vmatmul.mubr.bf16.gmra.mxu0 %v3258
    %v4441 = vpop.f32.mrf.mxu0
    %v4442 = vadd.f32 %v3625, %v4441
    %v4443 = vpop.f32.mrf.mxu0
    %v4444 = vpop.f32.mrf.mxu0
    %v4445 = vadd.f32 %v3628, %v4444
    %v4446 = vpop.f32.mrf.mxu0
    %4447 = vmatprep.mubr.bf16.mxu0 0
    %4448 = vmatmul.mubr.bf16.gmra.mxu0 %v3261
    %v4449 = vpop.f32.mrf.mxu0
    %v4450 = vadd.f32 %v3633, %v4449
    %v4451 = vpop.f32.mrf.mxu0
    %v4452 = vpop.f32.mrf.mxu0
    %v4453 = vadd.f32 %v3636, %v4452
    %v4454 = vpop.f32.mrf.mxu0
    %4455 = vmatprep.mubr.bf16.mxu0 0
    %4456 = vmatmul.mubr.bf16.gmra.mxu0 %v3264
    %v4457 = vpop.f32.mrf.mxu0
    %v4458 = vadd.f32 %v3641, %v4457
    %v4459 = vpop.f32.mrf.mxu0
    %v4460 = vpop.f32.mrf.mxu0
    %v4461 = vadd.f32 %v3644, %v4460
    %v4462 = vpop.f32.mrf.mxu0
    %4463 = vmatprep.mubr.bf16.mxu0 0
    %4464 = vmatmul.mubr.bf16.gmra.mxu0 %v3267
    %v4465 = vpop.f32.mrf.mxu0
    %v4466 = vadd.f32 %v3649, %v4465
    %v4467 = vpop.f32.mrf.mxu0
    %v4468 = vpop.f32.mrf.mxu0
    %v4469 = vadd.f32 %v3652, %v4468
    %v4470 = vpop.f32.mrf.mxu0
    %4471 = vmatprep.mubr.bf16.mxu0 0
    %4472 = vmatmul.mubr.bf16.gmra.mxu0 %v3270
    %v4473 = vpop.f32.mrf.mxu0
    %v4474 = vadd.f32 %v3657, %v4473
    %v4475 = vpop.f32.mrf.mxu0
    %v4476 = vpop.f32.mrf.mxu0
    %v4477 = vadd.f32 %v3660, %v4476
    %v4478 = vpop.f32.mrf.mxu0
    %4479 = vmatprep.mubr.bf16.mxu0 0
    %4480 = vmatmul.mubr.bf16.gmra.mxu0 %v3273
    %v4481 = vpop.f32.mrf.mxu0
    %v4482 = vadd.f32 %v3665, %v4481
    %v4483 = vpop.f32.mrf.mxu0
    %v4484 = vpop.f32.mrf.mxu0
    %v4485 = vadd.f32 %v3668, %v4484
    %v4486 = vpop.f32.mrf.mxu0
    %4487 = vmatprep.mubr.bf16.mxu0 0
    %4488 = vmatmul.mubr.bf16.gmra.mxu0 %v3276
    %v4489 = vpop.f32.mrf.mxu0
    %v4490 = vadd.f32 %v3673, %v4489
    %v4491 = vpop.f32.mrf.mxu0
    %v4492 = vpop.f32.mrf.mxu0
    %v4493 = vadd.f32 %v3676, %v4492
    %v4494 = vpop.f32.mrf.mxu0
    %4495 = vmatprep.mubr.bf16.mxu0 0
    %4496 = vmatmul.mubr.bf16.gmra.mxu0 %v3279
    %v4497 = vpop.f32.mrf.mxu0
    %v4498 = vadd.f32 %v3681, %v4497
    %v4499 = vpop.f32.mrf.mxu0
    %v4500 = vpop.f32.mrf.mxu0
    %v4501 = vadd.f32 %v3684, %v4500
    %v4502 = vpop.f32.mrf.mxu0
    %4503 = vmatprep.mubr.bf16.mxu0 0
    %4504 = vmatmul.mubr.bf16.gmra.mxu0 %v3282
    %v4505 = vpop.f32.mrf.mxu0
    %v4506 = vadd.f32 %v3689, %v4505
    %v4507 = vpop.f32.mrf.mxu0
    %v4508 = vpop.f32.mrf.mxu0
    %v4509 = vadd.f32 %v3692, %v4508
    %v4510 = vpop.f32.mrf.mxu0
    %4511 = vmatprep.mubr.bf16.mxu0 0
    %4512 = vmatmul.mubr.bf16.gmra.mxu0 %v3285
    %v4513 = vpop.f32.mrf.mxu0
    %v4514 = vadd.f32 %v3697, %v4513
    %v4515 = vpop.f32.mrf.mxu0
    %v4516 = vpop.f32.mrf.mxu0
    %v4517 = vadd.f32 %v3700, %v4516
    %v4518 = vpop.f32.mrf.mxu0
    %4519 = vmatprep.mubr.bf16.mxu0 0
    %4520 = vmatmul.mubr.bf16.gmra.mxu0 %v3288
    %v4521 = vpop.f32.mrf.mxu0
    %v4522 = vadd.f32 %v3705, %v4521
    %v4523 = vpop.f32.mrf.mxu0
    %v4524 = vpop.f32.mrf.mxu0
    %v4525 = vadd.f32 %v3708, %v4524
    %v4526 = vpop.f32.mrf.mxu0
    %4527 = vmatprep.mubr.bf16.mxu0 0
    %4528 = vmatmul.mubr.bf16.gmra.mxu0 %v3291
    %v4529 = vpop.f32.mrf.mxu0
    %v4530 = vadd.f32 %v3713, %v4529
    %v4531 = vpop.f32.mrf.mxu0
    %v4532 = vpop.f32.mrf.mxu0
    %v4533 = vadd.f32 %v3716, %v4532
    %v4534 = vpop.f32.mrf.mxu0
    %4535 = vmatprep.mubr.bf16.mxu0 0
    %4536 = vmatmul.mubr.bf16.gmra.mxu0 %v3294
    %v4537 = vpop.f32.mrf.mxu0
    %v4538 = vadd.f32 %v3721, %v4537
    %v4539 = vpop.f32.mrf.mxu0
    %v4540 = vpop.f32.mrf.mxu0
    %v4541 = vadd.f32 %v3724, %v4540
    %v4542 = vpop.f32.mrf.mxu0
    %4543 = vmatprep.mubr.bf16.mxu0 0
    %4544 = vmatmul.mubr.bf16.gmra.mxu0 %v3297
    %v4545 = vpop.f32.mrf.mxu0
    %v4546 = vadd.f32 %v3729, %v4545
    %v4547 = vpop.f32.mrf.mxu0
    %v4548 = vpop.f32.mrf.mxu0
    %v4549 = vadd.f32 %v3732, %v4548
    %v4550 = vpop.f32.mrf.mxu0
    %4551 = vmatprep.mubr.bf16.mxu0 0
    %4552 = vmatmul.mubr.bf16.gmra.mxu0 %v3300
    %v4553 = vpop.f32.mrf.mxu0
    %v4554 = vadd.f32 %v3737, %v4553
    %v4555 = vpop.f32.mrf.mxu0
    %v4556 = vpop.f32.mrf.mxu0
    %v4557 = vadd.f32 %v3740, %v4556
    %v4558 = vpop.f32.mrf.mxu0
    %4559 = vmatprep.mubr.bf16.mxu0 0
    %4560 = vmatmul.mubr.bf16.gmra.mxu0 %v3303
    %v4561 = vpop.f32.mrf.mxu0
    %v4562 = vadd.f32 %v3745, %v4561
    %v4563 = vpop.f32.mrf.mxu0
    %v4564 = vpop.f32.mrf.mxu0
    %v4565 = vadd.f32 %v3748, %v4564
    %v4566 = vpop.f32.mrf.mxu0
    %4567 = vmatprep.mubr.bf16.mxu0 0
    %4568 = vmatmul.mubr.bf16.gmra.mxu0 %v3306
    %v4569 = vpop.f32.mrf.mxu0
    %v4570 = vadd.f32 %v3753, %v4569
    %v4571 = vpop.f32.mrf.mxu0
    %v4572 = vpop.f32.mrf.mxu0
    %v4573 = vadd.f32 %v3756, %v4572
    %v4574 = vpop.f32.mrf.mxu0
    %4575 = vmatprep.mubr.bf16.mxu0 0
    %4576 = vmatmul.mubr.bf16.gmra.mxu0 %v3309
    %v4577 = vpop.f32.mrf.mxu0
    %v4578 = vadd.f32 %v3761, %v4577
    %v4579 = vpop.f32.mrf.mxu0
    %v4580 = vpop.f32.mrf.mxu0
    %v4581 = vadd.f32 %v3764, %v4580
    %v4582 = vpop.f32.mrf.mxu0
    %4583 = vmatprep.mubr.bf16.mxu0 0
    %4584 = vmatmul.mubr.bf16.gmra.mxu0 %v3312
    %v4585 = vpop.f32.mrf.mxu0
    %v4586 = vadd.f32 %v3769, %v4585
    %v4587 = vpop.f32.mrf.mxu0
    %v4588 = vpop.f32.mrf.mxu0
    %v4589 = vadd.f32 %v3772, %v4588
    %v4590 = vpop.f32.mrf.mxu0
    %4591 = vmatprep.mubr.bf16.mxu0 0
    %4592 = vmatmul.mubr.bf16.gmra.mxu0 %v3315
    %v4593 = vpop.f32.mrf.mxu0
    %v4594 = vadd.f32 %v3777, %v4593
    %v4595 = vpop.f32.mrf.mxu0
    %v4596 = vpop.f32.mrf.mxu0
    %v4597 = vadd.f32 %v3780, %v4596
    %v4598 = vpop.f32.mrf.mxu0
    %4599 = vmatprep.mubr.bf16.mxu0 0
    %4600 = vmatmul.mubr.bf16.gmra.mxu0 %v3318
    %v4601 = vpop.f32.mrf.mxu0
    %v4602 = vadd.f32 %v3785, %v4601
    %v4603 = vpop.f32.mrf.mxu0
    %v4604 = vpop.f32.mrf.mxu0
    %v4605 = vadd.f32 %v3788, %v4604
    %v4606 = vpop.f32.mrf.mxu0
    %4607 = vmatprep.mubr.bf16.mxu0 0
    %4608 = vmatmul.mubr.bf16.gmra.mxu0 %v3321
    %v4609 = vpop.f32.mrf.mxu0
    %v4610 = vadd.f32 %v3793, %v4609
    %v4611 = vpop.f32.mrf.mxu0
    %v4612 = vpop.f32.mrf.mxu0
    %v4613 = vadd.f32 %v3796, %v4612
    %v4614 = vpop.f32.mrf.mxu0
    %4615 = vmatprep.mubr.bf16.mxu0 0
    %4616 = vmatmul.mubr.bf16.gmra.mxu0 %v3324
    %v4617 = vpop.f32.mrf.mxu0
    %v4618 = vadd.f32 %v3801, %v4617
    %v4619 = vpop.f32.mrf.mxu0
    %v4620 = vpop.f32.mrf.mxu0
    %v4621 = vadd.f32 %v3804, %v4620
    %v4622 = vpop.f32.mrf.mxu0
    %4623 = vmatprep.mubr.bf16.mxu0 0
    %4624 = vmatmul.mubr.bf16.gmra.mxu0 %v3327
    %v4625 = vpop.f32.mrf.mxu0
    %v4626 = vadd.f32 %v3809, %v4625
    %v4627 = vpop.f32.mrf.mxu0
    %v4628 = vpop.f32.mrf.mxu0
    %v4629 = vadd.f32 %v3812, %v4628
    %v4630 = vpop.f32.mrf.mxu0
    %4631 = vmatprep.mubr.bf16.mxu0 0
    %4632 = vmatmul.mubr.bf16.gmra.mxu0 %v3330
    %v4633 = vpop.f32.mrf.mxu0
    %v4634 = vadd.f32 %v3817, %v4633
    %v4635 = vpop.f32.mrf.mxu0
    %v4636 = vpop.f32.mrf.mxu0
    %v4637 = vadd.f32 %v3820, %v4636
    %v4638 = vpop.f32.mrf.mxu0
    %4639 = vmatprep.mubr.bf16.mxu0 0
    %4640 = vmatmul.mubr.bf16.gmra.mxu0 %v3333
    %v4641 = vpop.f32.mrf.mxu0
    %v4642 = vadd.f32 %v3825, %v4641
    %v4643 = vpop.f32.mrf.mxu0
    %v4644 = vpop.f32.mrf.mxu0
    %v4645 = vadd.f32 %v3828, %v4644
    %v4646 = vpop.f32.mrf.mxu0
    %4647 = vmatprep.mubr.bf16.mxu0 0
    %4648 = vmatmul.mubr.bf16.gmra.mxu0 %v3336
    %v4649 = vpop.f32.mrf.mxu0
    %v4650 = vadd.f32 %v3833, %v4649
    %v4651 = vpop.f32.mrf.mxu0
    %v4652 = vpop.f32.mrf.mxu0
    %v4653 = vadd.f32 %v3836, %v4652
    %v4654 = vpop.f32.mrf.mxu0
    %4655 = vmatprep.mubr.bf16.mxu0 0
    %4656 = vmatmul.mubr.bf16.gmra.mxu0 %v3339
    %v4657 = vpop.f32.mrf.mxu0
    %v4658 = vadd.f32 %v3841, %v4657
    %v4659 = vpop.f32.mrf.mxu0
    %v4660 = vpop.f32.mrf.mxu0
    %v4661 = vadd.f32 %v3844, %v4660
    %v4662 = vpop.f32.mrf.mxu0
    %4663 = vmatprep.mubr.bf16.mxu0 0
    %4664 = vmatmul.mubr.bf16.gmra.mxu0 %v3342
    %v4665 = vpop.f32.mrf.mxu0
    %v4666 = vadd.f32 %v3849, %v4665
    %v4667 = vpop.f32.mrf.mxu0
    %v4668 = vpop.f32.mrf.mxu0
    %v4669 = vadd.f32 %v3852, %v4668
    %v4670 = vpop.f32.mrf.mxu0
    %4671 = vmatprep.mubr.bf16.mxu0 0
    %4672 = vmatmul.mubr.bf16.gmra.mxu0 %v3345
    %v4673 = vpop.f32.mrf.mxu0
    %v4674 = vadd.f32 %v3857, %v4673
    %v4675 = vpop.f32.mrf.mxu0
    %v4676 = vpop.f32.mrf.mxu0
    %v4677 = vadd.f32 %v3860, %v4676
    %v4678 = vpop.f32.mrf.mxu0
    %4679 = vmatprep.mubr.bf16.mxu0 0
    %4680 = vmatmul.mubr.bf16.gmra.mxu0 %v3348
    %v4681 = vpop.f32.mrf.mxu0
    %v4682 = vadd.f32 %v3865, %v4681
    %v4683 = vpop.f32.mrf.mxu0
    %v4684 = vpop.f32.mrf.mxu0
    %v4685 = vadd.f32 %v3868, %v4684
    %v4686 = vpop.f32.mrf.mxu0
    %4687 = vmatprep.mubr.bf16.mxu0 0
    %4688 = vmatmul.mubr.bf16.gmra.mxu0 %v3351
    %v4689 = vpop.f32.mrf.mxu0
    %v4690 = vadd.f32 %v3873, %v4689
    %v4691 = vpop.f32.mrf.mxu0
    %v4692 = vpop.f32.mrf.mxu0
    %v4693 = vadd.f32 %v3876, %v4692
    %v4694 = vpop.f32.mrf.mxu0
    %4695 = vmatprep.mubr.bf16.mxu0 0
    %4696 = vmatmul.mubr.bf16.gmra.mxu0 %v3354
    %v4697 = vpop.f32.mrf.mxu0
    %v4698 = vadd.f32 %v3881, %v4697
    %v4699 = vpop.f32.mrf.mxu0
    %v4700 = vpop.f32.mrf.mxu0
    %v4701 = vadd.f32 %v3884, %v4700
    %v4702 = vpop.f32.mrf.mxu0
    %4703 = vmatprep.mubr.bf16.mxu0 0
    %4704 = vmatmul.mubr.bf16.gmra.mxu0 %v3357
    %v4705 = vpop.f32.mrf.mxu0
    %v4706 = vadd.f32 %v3889, %v4705
    %v4707 = vpop.f32.mrf.mxu0
    %v4708 = vpop.f32.mrf.mxu0
    %v4709 = vadd.f32 %v3892, %v4708
    %v4710 = vpop.f32.mrf.mxu0
    %4711 = vmatprep.mubr.bf16.mxu0 0
    %4712 = vmatmul.mubr.bf16.gmra.mxu0 %v3360
    %v4713 = vpop.f32.mrf.mxu0
    %v4714 = vadd.f32 %v3897, %v4713
    %v4715 = vpop.f32.mrf.mxu0
    %v4716 = vpop.f32.mrf.mxu0
    %v4717 = vadd.f32 %v3900, %v4716
    %v4718 = vpop.f32.mrf.mxu0
    %4719 = vmatprep.mubr.bf16.mxu0 0
    %4720 = vmatmul.mubr.bf16.gmra.mxu0 %v3363
    %v4721 = vpop.f32.mrf.mxu0
    %v4722 = vadd.f32 %v3905, %v4721
    %v4723 = vpop.f32.mrf.mxu0
    %v4724 = vpop.f32.mrf.mxu0
    %v4725 = vadd.f32 %v3908, %v4724
    %v4726 = vpop.f32.mrf.mxu0
    %4727 = vmatprep.mubr.bf16.mxu0 0
    %4728 = vmatmul.mubr.bf16.gmra.mxu0 %v3366
    %v4729 = vpop.f32.mrf.mxu0
    %v4730 = vadd.f32 %v3913, %v4729
    %v4731 = vpop.f32.mrf.mxu0
    %v4732 = vpop.f32.mrf.mxu0
    %v4733 = vadd.f32 %v3916, %v4732
    %v4734 = vpop.f32.mrf.mxu0
    %4735 = vmatprep.mubr.bf16.mxu0 0
    %4736 = vmatmul.mubr.bf16.gmra.mxu0 %v3369
    %v4737 = vpop.f32.mrf.mxu0
    %v4738 = vadd.f32 %v3921, %v4737
    %v4739 = vpop.f32.mrf.mxu0
    %v4740 = vpop.f32.mrf.mxu0
    %v4741 = vadd.f32 %v3924, %v4740
    %v4742 = vpop.f32.mrf.mxu0
    %4743 = vmatprep.mubr.bf16.mxu0 0
    %4744 = vmatmul.mubr.bf16.gmra.mxu0 %v3372
    %v4745 = vpop.f32.mrf.mxu0
    %v4746 = vadd.f32 %v3929, %v4745
    %v4747 = vpop.f32.mrf.mxu0
    %v4748 = vpop.f32.mrf.mxu0
    %v4749 = vadd.f32 %v3932, %v4748
    %v4750 = vpop.f32.mrf.mxu0
    %4751 = vmatprep.mubr.bf16.mxu0 0
    %4752 = vmatmul.mubr.bf16.gmra.mxu0 %v3375
    %v4753 = vpop.f32.mrf.mxu0
    %v4754 = vadd.f32 %v3937, %v4753
    %v4755 = vpop.f32.mrf.mxu0
    %v4756 = vpop.f32.mrf.mxu0
    %v4757 = vadd.f32 %v3940, %v4756
    %v4758 = vpop.f32.mrf.mxu0
    %4759 = vmatprep.mubr.bf16.mxu0 0
    %4760 = vmatmul.mubr.bf16.gmra.mxu0 %v3378
    %v4761 = vpop.f32.mrf.mxu0
    %v4762 = vadd.f32 %v3945, %v4761
    %v4763 = vpop.f32.mrf.mxu0
    %v4764 = vpop.f32.mrf.mxu0
    %v4765 = vadd.f32 %v3948, %v4764
    %v4766 = vpop.f32.mrf.mxu0
    %4767 = vmatprep.mubr.bf16.mxu0 0
    %4768 = vmatmul.mubr.bf16.gmra.mxu0 %v3381
    %v4769 = vpop.f32.mrf.mxu0
    %v4770 = vadd.f32 %v3953, %v4769
    %v4771 = vpop.f32.mrf.mxu0
    %v4772 = vpop.f32.mrf.mxu0
    %v4773 = vadd.f32 %v3956, %v4772
    %v4774 = vpop.f32.mrf.mxu0
    %4775 = vmatprep.mubr.bf16.mxu0 0
    %4776 = vmatmul.mubr.bf16.gmra.mxu0 %v3384
    %v4777 = vpop.f32.mrf.mxu0
    %v4778 = vadd.f32 %v3961, %v4777
    %v4779 = vpop.f32.mrf.mxu0
    %v4780 = vpop.f32.mrf.mxu0
    %v4781 = vadd.f32 %v3964, %v4780
    %v4782 = vpop.f32.mrf.mxu0
    %4783 = vmatprep.mubr.bf16.mxu0 0
    %4784 = vmatmul.mubr.bf16.gmra.mxu0 %v3387
    %v4785 = vpop.f32.mrf.mxu0
    %v4786 = vadd.f32 %v3969, %v4785
    %v4787 = vpop.f32.mrf.mxu0
    %v4788 = vpop.f32.mrf.mxu0
    %v4789 = vadd.f32 %v3972, %v4788
    %v4790 = vpop.f32.mrf.mxu0
    %4791 = vmatprep.mubr.bf16.mxu0 0
    %4792 = vmatmul.mubr.bf16.gmra.mxu0 %v3390
    %v4793 = vpop.f32.mrf.mxu0
    %v4794 = vadd.f32 %v3977, %v4793
    %v4795 = vpop.f32.mrf.mxu0
    %v4796 = vpop.f32.mrf.mxu0
    %v4797 = vadd.f32 %v3980, %v4796
    %v4798 = vpop.f32.mrf.mxu0
    %4799 = vmatprep.mubr.bf16.mxu0 0
    %4800 = vmatmul.mubr.bf16.gmra.mxu0 %v3393
    %v4801 = vpop.f32.mrf.mxu0
    %v4802 = vadd.f32 %v3985, %v4801
    %v4803 = vpop.f32.mrf.mxu0
    %v4804 = vpop.f32.mrf.mxu0
    %v4805 = vadd.f32 %v3988, %v4804
    %v4806 = vpop.f32.mrf.mxu0
    %4807 = vmatprep.mubr.bf16.mxu0 0
    %4808 = vmatmul.mubr.bf16.gmra.mxu0 %v3396
    %v4809 = vpop.f32.mrf.mxu0
    %v4810 = vadd.f32 %v3993, %v4809
    %v4811 = vpop.f32.mrf.mxu0
    %v4812 = vpop.f32.mrf.mxu0
    %v4813 = vadd.f32 %v3996, %v4812
    %v4814 = vpop.f32.mrf.mxu0
    %4815 = vmatprep.mubr.bf16.mxu0 0
    %4816 = vmatmul.mubr.bf16.gmra.mxu0 %v3399
    %v4817 = vpop.f32.mrf.mxu0
    %v4818 = vadd.f32 %v4001, %v4817
    %v4819 = vpop.f32.mrf.mxu0
    %v4820 = vpop.f32.mrf.mxu0
    %v4821 = vadd.f32 %v4004, %v4820
    %v4822 = vpop.f32.mrf.mxu0
    %4823 = vmatprep.mubr.bf16.mxu0 0
    %4824 = vmatmul.mubr.bf16.gmra.mxu0 %v3402
    %v4825 = vpop.f32.mrf.mxu0
    %v4826 = vadd.f32 %v4009, %v4825
    %v4827 = vpop.f32.mrf.mxu0
    %v4828 = vpop.f32.mrf.mxu0
    %v4829 = vadd.f32 %v4012, %v4828
    %v4830 = vpop.f32.mrf.mxu0
    %4831 = vmatprep.mubr.bf16.mxu0 0
    %4832 = vmatmul.mubr.bf16.gmra.mxu0 %v3405
    %v4833 = vpop.f32.mrf.mxu0
    %v4834 = vadd.f32 %v4017, %v4833
    %v4835 = vpop.f32.mrf.mxu0
    %v4836 = vpop.f32.mrf.mxu0
    %v4837 = vadd.f32 %v4020, %v4836
    %v4838 = vpop.f32.mrf.mxu0
    %4839 = vmatprep.mubr.bf16.mxu0 0
    %4840 = vmatmul.mubr.bf16.gmra.mxu0 %v3408
    %v4841 = vpop.f32.mrf.mxu0
    %v4842 = vadd.f32 %v4025, %v4841
    %v4843 = vpop.f32.mrf.mxu0
    %v4844 = vpop.f32.mrf.mxu0
    %v4845 = vadd.f32 %v4028, %v4844
    %v4846 = vpop.f32.mrf.mxu0
    %4847 = vmatprep.mubr.bf16.mxu0 0
    %4848 = vmatmul.mubr.bf16.gmra.mxu0 %v3411
    %v4849 = vpop.f32.mrf.mxu0
    %v4850 = vadd.f32 %v4033, %v4849
    %v4851 = vpop.f32.mrf.mxu0
    %v4852 = vpop.f32.mrf.mxu0
    %v4853 = vadd.f32 %v4036, %v4852
    %v4854 = vpop.f32.mrf.mxu0
    %4855 = vmatprep.mubr.bf16.mxu0 0
    %4856 = vmatmul.mubr.bf16.gmra.mxu0 %v3414
    %v4857 = vpop.f32.mrf.mxu0
    %v4858 = vadd.f32 %v4041, %v4857
    %v4859 = vpop.f32.mrf.mxu0
    %v4860 = vpop.f32.mrf.mxu0
    %v4861 = vadd.f32 %v4044, %v4860
    %v4862 = vpop.f32.mrf.mxu0
    %4863 = vmatprep.mubr.bf16.mxu0 0
    %4864 = vmatmul.mubr.bf16.gmra.mxu0 %v3417
    %v4865 = vpop.f32.mrf.mxu0
    %v4866 = vadd.f32 %v4049, %v4865
    %v4867 = vpop.f32.mrf.mxu0
    %v4868 = vpop.f32.mrf.mxu0
    %v4869 = vadd.f32 %v4052, %v4868
    %v4870 = vpop.f32.mrf.mxu0
    %4871 = vmatprep.mubr.bf16.mxu0 0
    %4872 = vmatmul.mubr.bf16.gmra.mxu0 %v3420
    %v4873 = vpop.f32.mrf.mxu0
    %v4874 = vadd.f32 %v4057, %v4873
    %v4875 = vpop.f32.mrf.mxu0
    %v4876 = vpop.f32.mrf.mxu0
    %v4877 = vadd.f32 %v4060, %v4876
    %v4878 = vpop.f32.mrf.mxu0
    %4879 = vmatprep.mubr.bf16.mxu0 0
    %4880 = vmatmul.mubr.bf16.gmra.mxu0 %v3423
    %v4881 = vpop.f32.mrf.mxu0
    %v4882 = vadd.f32 %v4065, %v4881
    %v4883 = vpop.f32.mrf.mxu0
    %v4884 = vpop.f32.mrf.mxu0
    %v4885 = vadd.f32 %v4068, %v4884
    %v4886 = vpop.f32.mrf.mxu0
    %4887 = vmatprep.mubr.bf16.mxu0 0
    %4888 = vmatmul.mubr.bf16.gmra.mxu0 %v3426
    %v4889 = vpop.f32.mrf.mxu0
    %v4890 = vadd.f32 %v4073, %v4889
    %v4891 = vpop.f32.mrf.mxu0
    %v4892 = vpop.f32.mrf.mxu0
    %v4893 = vadd.f32 %v4076, %v4892
    %v4894 = vpop.f32.mrf.mxu0
    %4895 = vmatprep.mubr.bf16.mxu0 0
    %4896 = vmatmul.mubr.bf16.gmra.mxu0 %v3429
    %v4897 = vpop.f32.mrf.mxu0
    %v4898 = vadd.f32 %v4081, %v4897
    %v4899 = vpop.f32.mrf.mxu0
    %v4900 = vpop.f32.mrf.mxu0
    %v4901 = vadd.f32 %v4084, %v4900
    %v4902 = vpop.f32.mrf.mxu0
    %4903 = vmatprep.mubr.bf16.mxu0 0
    %4904 = vmatmul.mubr.bf16.gmra.mxu0 %v3432
    %v4905 = vpop.f32.mrf.mxu0
    %v4906 = vadd.f32 %v4089, %v4905
    %v4907 = vpop.f32.mrf.mxu0
    %v4908 = vpop.f32.mrf.mxu0
    %v4909 = vadd.f32 %v4092, %v4908
    %v4910 = vpop.f32.mrf.mxu0
    %4911 = vmatprep.mubr.bf16.mxu0 0
    %4912 = vmatmul.mubr.bf16.gmra.mxu0 %v3435
    %v4913 = vpop.f32.mrf.mxu0
    %v4914 = vadd.f32 %v4097, %v4913
    %v4915 = vpop.f32.mrf.mxu0
    %v4916 = vpop.f32.mrf.mxu0
    %v4917 = vadd.f32 %v4100, %v4916
    %v4918 = vpop.f32.mrf.mxu0
    %4919 = vmatprep.mubr.bf16.mxu0 0
    %4920 = vmatmul.mubr.bf16.gmra.mxu0 %v3438
    %v4921 = vpop.f32.mrf.mxu0
    %v4922 = vadd.f32 %v4105, %v4921
    %v4923 = vpop.f32.mrf.mxu0
    %v4924 = vpop.f32.mrf.mxu0
    %v4925 = vadd.f32 %v4108, %v4924
    %v4926 = vpop.f32.mrf.mxu0
    %4927 = vmatprep.mubr.bf16.mxu0 0
    %4928 = vmatmul.mubr.bf16.gmra.mxu0 %v3441
    %v4929 = vpop.f32.mrf.mxu0
    %v4930 = vadd.f32 %v4113, %v4929
    %v4931 = vpop.f32.mrf.mxu0
    %v4932 = vpop.f32.mrf.mxu0
    %v4933 = vadd.f32 %v4116, %v4932
    %v4934 = vpop.f32.mrf.mxu0
    %4935 = vmatprep.mubr.bf16.mxu0 0
    %4936 = vmatmul.mubr.bf16.gmra.mxu0 %v3444
    %v4937 = vpop.f32.mrf.mxu0
    %v4938 = vadd.f32 %v4121, %v4937
    %v4939 = vpop.f32.mrf.mxu0
    %v4940 = vpop.f32.mrf.mxu0
    %v4941 = vadd.f32 %v4124, %v4940
    %v4942 = vpop.f32.mrf.mxu0
    %4943 = vmatprep.mubr.bf16.mxu0 0
    %4944 = vmatmul.mubr.bf16.gmra.mxu0 %v3447
    %v4945 = vpop.f32.mrf.mxu0
    %v4946 = vadd.f32 %v4129, %v4945
    %v4947 = vpop.f32.mrf.mxu0
    %v4948 = vpop.f32.mrf.mxu0
    %v4949 = vadd.f32 %v4132, %v4948
    %v4950 = vpop.f32.mrf.mxu0
    %4951 = vmatprep.mubr.bf16.mxu0 0
    %4952 = vmatmul.mubr.bf16.gmra.mxu0 %v3450
    %v4953 = vpop.f32.mrf.mxu0
    %v4954 = vadd.f32 %v4137, %v4953
    %v4955 = vpop.f32.mrf.mxu0
    %v4956 = vpop.f32.mrf.mxu0
    %v4957 = vadd.f32 %v4140, %v4956
    %v4958 = vpop.f32.mrf.mxu0
    %4959 = vmatprep.mubr.bf16.mxu0 0
    %4960 = vmatmul.mubr.bf16.gmra.mxu0 %v3453
    %v4961 = vpop.f32.mrf.mxu0
    %v4962 = vadd.f32 %v4145, %v4961
    %v4963 = vpop.f32.mrf.mxu0
    %v4964 = vpop.f32.mrf.mxu0
    %v4965 = vadd.f32 %v4148, %v4964
    %v4966 = vpop.f32.mrf.mxu0
    %4967 = vmatprep.mubr.bf16.mxu0 0
    %4968 = vmatmul.mubr.bf16.gmra.mxu0 %v3456
    %v4969 = vpop.f32.mrf.mxu0
    %v4970 = vadd.f32 %v4153, %v4969
    %v4971 = vpop.f32.mrf.mxu0
    %v4972 = vpop.f32.mrf.mxu0
    %v4973 = vadd.f32 %v4156, %v4972
    %v4974 = vpop.f32.mrf.mxu0
    %4975 = vmatprep.mubr.bf16.mxu0 0
    %4976 = vmatmul.mubr.bf16.gmra.mxu0 %v3459
    %v4977 = vpop.f32.mrf.mxu0
    %v4978 = vadd.f32 %v4161, %v4977
    %v4979 = vpop.f32.mrf.mxu0
    %v4980 = vpop.f32.mrf.mxu0
    %v4981 = vadd.f32 %v4164, %v4980
    %v4982 = vpop.f32.mrf.mxu0
    %4983 = vmatprep.mubr.bf16.mxu0 0
    %4984 = vmatmul.mubr.bf16.gmra.mxu0 %v3462
    %v4985 = vpop.f32.mrf.mxu0
    %v4986 = vadd.f32 %v4169, %v4985
    %v4987 = vpop.f32.mrf.mxu0
    %v4988 = vpop.f32.mrf.mxu0
    %v4989 = vadd.f32 %v4172, %v4988
    %v4990 = vpop.f32.mrf.mxu0
    %4991 = vmatprep.mubr.bf16.mxu0 0
    %4992 = vmatmul.mubr.bf16.gmra.mxu0 %v3465
    %v4993 = vpop.f32.mrf.mxu0
    %v4994 = vadd.f32 %v4177, %v4993
    %v4995 = vpop.f32.mrf.mxu0
    %v4996 = vpop.f32.mrf.mxu0
    %v4997 = vadd.f32 %v4180, %v4996
    %v4998 = vpop.f32.mrf.mxu0
    %4999 = vmatprep.mubr.bf16.mxu0 0
    %5000 = vmatmul.mubr.bf16.gmra.mxu0 %v3468
    %v5001 = vpop.f32.mrf.mxu0
    %v5002 = vadd.f32 %v4185, %v5001
    %v5003 = vpop.f32.mrf.mxu0
    %v5004 = vpop.f32.mrf.mxu0
    %v5005 = vadd.f32 %v4188, %v5004
    %v5006 = vpop.f32.mrf.mxu0
    %5007 = vmatprep.mubr.bf16.mxu0 0
    %5008 = vmatmul.mubr.bf16.gmra.mxu0 %v3471
    %v5009 = vpop.f32.mrf.mxu0
    %v5010 = vadd.f32 %v4193, %v5009
    %v5011 = vpop.f32.mrf.mxu0
    %v5012 = vpop.f32.mrf.mxu0
    %v5013 = vadd.f32 %v4196, %v5012
    %v5014 = vpop.f32.mrf.mxu0
    %5015 = vmatprep.mubr.bf16.mxu0 0
    %5016 = vmatmul.mubr.bf16.gmra.mxu0 %v3474
    %v5017 = vpop.f32.mrf.mxu0
    %v5018 = vadd.f32 %v4201, %v5017
    %v5019 = vpop.f32.mrf.mxu0
    %v5020 = vpop.f32.mrf.mxu0
    %v5021 = vadd.f32 %v4204, %v5020
    %v5022 = vpop.f32.mrf.mxu0
    %5023 = vmatprep.mubr.bf16.mxu0 0
    %5024 = vmatmul.mubr.bf16.gmra.mxu0 %v3477
    %v5025 = vpop.f32.mrf.mxu0
    %v5026 = vadd.f32 %v4209, %v5025
    %v5027 = vpop.f32.mrf.mxu0
    %v5028 = vpop.f32.mrf.mxu0
    %v5029 = vadd.f32 %v4212, %v5028
    %v5030 = vpop.f32.mrf.mxu0
    %5031 = vmatprep.mubr.bf16.mxu0 0
    %5032 = vmatmul.mubr.bf16.gmra.mxu0 %v3480
    %v5033 = vpop.f32.mrf.mxu0
    %v5034 = vadd.f32 %v4217, %v5033
    %v5035 = vpop.f32.mrf.mxu0
    %v5036 = vpop.f32.mrf.mxu0
    %v5037 = vadd.f32 %v4220, %v5036
    %v5038 = vpop.f32.mrf.mxu0
    %5039 = vmatprep.mubr.bf16.mxu0 0
    %5040 = vmatmul.mubr.bf16.gmra.mxu0 %v3483
    %v5041 = vpop.f32.mrf.mxu0
    %v5042 = vadd.f32 %v4225, %v5041
    %v5043 = vpop.f32.mrf.mxu0
    %v5044 = vpop.f32.mrf.mxu0
    %v5045 = vadd.f32 %v4228, %v5044
    %v5046 = vpop.f32.mrf.mxu0
    %5047 = vmatprep.mubr.bf16.mxu0 0
    %5048 = vmatmul.mubr.bf16.gmra.mxu0 %v3486
    %v5049 = vpop.f32.mrf.mxu0
    %v5050 = vadd.f32 %v4233, %v5049
    %v5051 = vpop.f32.mrf.mxu0
    %v5052 = vpop.f32.mrf.mxu0
    %v5053 = vadd.f32 %v4236, %v5052
    %v5054 = vpop.f32.mrf.mxu0
    %5055 = vmatprep.mubr.bf16.mxu0 0
    %5056 = vmatmul.mubr.bf16.gmra.mxu0 %v3489
    %v5057 = vpop.f32.mrf.mxu0
    %v5058 = vadd.f32 %v4241, %v5057
    %v5059 = vpop.f32.mrf.mxu0
    %v5060 = vpop.f32.mrf.mxu0
    %v5061 = vadd.f32 %v4244, %v5060
    %v5062 = vpop.f32.mrf.mxu0
    %5063 = vmatprep.mubr.bf16.mxu0 0
    %5064 = vmatmul.mubr.bf16.gmra.mxu0 %v3492
    %v5065 = vpop.f32.mrf.mxu0
    %v5066 = vadd.f32 %v4249, %v5065
    %v5067 = vpop.f32.mrf.mxu0
    %v5068 = vpop.f32.mrf.mxu0
    %v5069 = vadd.f32 %v4252, %v5068
    %v5070 = vpop.f32.mrf.mxu0
    %5071 = vmatprep.mubr.bf16.mxu0 0
    %5072 = vmatmul.mubr.bf16.gmra.mxu0 %v3495
    %v5073 = vpop.f32.mrf.mxu0
    %v5074 = vadd.f32 %v4257, %v5073
    %v5075 = vpop.f32.mrf.mxu0
    %v5076 = vpop.f32.mrf.mxu0
    %v5077 = vadd.f32 %v4260, %v5076
    %v5078 = vpop.f32.mrf.mxu0
    %5079 = vmatprep.mubr.bf16.mxu0 0
    %5080 = vmatmul.mubr.bf16.gmra.mxu0 %v3498
    %v5081 = vpop.f32.mrf.mxu0
    %v5082 = vadd.f32 %v4265, %v5081
    %v5083 = vpop.f32.mrf.mxu0
    %v5084 = vpop.f32.mrf.mxu0
    %v5085 = vadd.f32 %v4268, %v5084
    %v5086 = vpop.f32.mrf.mxu0
    %5087 = vmatprep.mubr.bf16.mxu0 0
    %5088 = vmatmul.mubr.bf16.gmra.mxu0 %v3501
    %v5089 = vpop.f32.mrf.mxu0
    %v5090 = vadd.f32 %v4273, %v5089
    %v5091 = vpop.f32.mrf.mxu0
    %v5092 = vpop.f32.mrf.mxu0
    %v5093 = vadd.f32 %v4276, %v5092
    %v5094 = vpop.f32.mrf.mxu0
    %5095 = vmatprep.mubr.bf16.mxu0 0
    %5096 = vmatmul.mubr.bf16.gmra.mxu0 %v3504
    %v5097 = vpop.f32.mrf.mxu0
    %v5098 = vadd.f32 %v4281, %v5097
    %v5099 = vpop.f32.mrf.mxu0
    %v5100 = vpop.f32.mrf.mxu0
    %v5101 = vadd.f32 %v4284, %v5100
    %v5102 = vpop.f32.mrf.mxu0
    %5103 = vmatprep.mubr.bf16.mxu0 0
    %5104 = vmatmul.mubr.bf16.gmra.mxu0 %v3507
    %v5105 = vpop.f32.mrf.mxu0
    %v5106 = vadd.f32 %v4289, %v5105
    %v5107 = vpop.f32.mrf.mxu0
    %v5108 = vpop.f32.mrf.mxu0
    %v5109 = vadd.f32 %v4292, %v5108
    %v5110 = vpop.f32.mrf.mxu0
    %5111 = vmatprep.mubr.bf16.mxu0 0
    %5112 = vmatmul.mubr.bf16.gmra.mxu0 %v3510
    %v5113 = vpop.f32.mrf.mxu0
    %v5114 = vadd.f32 %v4297, %v5113
    %v5115 = vpop.f32.mrf.mxu0
    %v5116 = vpop.f32.mrf.mxu0
    %v5117 = vadd.f32 %v4300, %v5116
    %v5118 = vpop.f32.mrf.mxu0
    %5119 = vmatprep.mubr.bf16.mxu0 0
    %5120 = vmatmul.mubr.bf16.gmra.mxu0 %v3513
    %v5121 = vpop.f32.mrf.mxu0
    %v5122 = vadd.f32 %v4305, %v5121
    %v5123 = vpop.f32.mrf.mxu0
    %v5124 = vpop.f32.mrf.mxu0
    %v5125 = vadd.f32 %v4308, %v5124
    %v5126 = vpop.f32.mrf.mxu0
    %5127 = vmatprep.mubr.bf16.mxu0 0
    %5128 = vmatmul.mubr.bf16.gmra.mxu0 %v3516
    %v5129 = vpop.f32.mrf.mxu0
    %v5130 = vadd.f32 %v4313, %v5129
    %v5131 = vpop.f32.mrf.mxu0
    %v5132 = vpop.f32.mrf.mxu0
    %v5133 = vadd.f32 %v4316, %v5132
    %v5134 = vpop.f32.mrf.mxu0
    %5135 = vmatprep.mubr.bf16.mxu0 0
    %5136 = vmatmul.mubr.bf16.gmra.mxu0 %v3519
    %v5137 = vpop.f32.mrf.mxu0
    %v5138 = vadd.f32 %v4321, %v5137
    %v5139 = vpop.f32.mrf.mxu0
    %v5140 = vpop.f32.mrf.mxu0
    %v5141 = vadd.f32 %v4324, %v5140
    %v5142 = vpop.f32.mrf.mxu0
    %5143 = vmatprep.mubr.bf16.mxu0 0
    %5144 = vmatmul.mubr.bf16.gmra.mxu0 %v3522
    %v5145 = vpop.f32.mrf.mxu0
    %v5146 = vadd.f32 %v4329, %v5145
    %v5147 = vpop.f32.mrf.mxu0
    %v5148 = vpop.f32.mrf.mxu0
    %v5149 = vadd.f32 %v4332, %v5148
    %v5150 = vpop.f32.mrf.mxu0
    %5151 = vmatprep.mubr.bf16.mxu0 0
    %5152 = vmatmul.mubr.bf16.gmra.mxu0 %v3525
    %v5153 = vpop.f32.mrf.mxu0
    %v5154 = vadd.f32 %v4337, %v5153
    %v5155 = vpop.f32.mrf.mxu0
    %v5156 = vpop.f32.mrf.mxu0
    %v5157 = vadd.f32 %v4340, %v5156
    %v5158 = vpop.f32.mrf.mxu0
    %5159 = vmatprep.mubr.bf16.mxu0 0
    %5160 = vmatmul.mubr.bf16.gmra.mxu0 %v3528
    %v5161 = vpop.f32.mrf.mxu0
    %v5162 = vadd.f32 %v4345, %v5161
    %v5163 = vpop.f32.mrf.mxu0
    %v5164 = vpop.f32.mrf.mxu0
    %v5165 = vadd.f32 %v4348, %v5164
    %v5166 = vpop.f32.mrf.mxu0
    %5167 = vdwg.mxu0
    %v5168 = vmax.f32 %v4386, 0.0
    %v5169 = vmax.f32 %v4389, 0.0
    %v5170 = vmax.f32 %v4394, 0.0
    %v5171 = vmax.f32 %v4397, 0.0
    %v5172 = vmax.f32 %v4402, 0.0
    %v5173 = vmax.f32 %v4405, 0.0
    %v5174 = vmax.f32 %v4410, 0.0
    %v5175 = vmax.f32 %v4413, 0.0
    %v5176 = vmax.f32 %v4418, 0.0
    %v5177 = vmax.f32 %v4421, 0.0
    %v5178 = vmax.f32 %v4426, 0.0
    %v5179 = vmax.f32 %v4429, 0.0
    %v5180 = vmax.f32 %v4434, 0.0
    %v5181 = vmax.f32 %v4437, 0.0
    %v5182 = vmax.f32 %v4442, 0.0
    %v5183 = vmax.f32 %v4445, 0.0
    %v5184 = vmax.f32 %v4450, 0.0
    %v5185 = vmax.f32 %v4453, 0.0
    %v5186 = vmax.f32 %v4458, 0.0
    %v5187 = vmax.f32 %v4461, 0.0
    %v5188 = vmax.f32 %v4466, 0.0
    %v5189 = vmax.f32 %v4469, 0.0
    %v5190 = vmax.f32 %v4474, 0.0
    %v5191 = vmax.f32 %v4477, 0.0
    %v5192 = vmax.f32 %v4482, 0.0
    %v5193 = vmax.f32 %v4485, 0.0
    %v5194 = vmax.f32 %v4490, 0.0
    %v5195 = vmax.f32 %v4493, 0.0
    %v5196 = vmax.f32 %v4498, 0.0
    %v5197 = vmax.f32 %v4501, 0.0
    %v5198 = vmax.f32 %v4506, 0.0
    %v5199 = vmax.f32 %v4509, 0.0
    %v5200 = vmax.f32 %v4514, 0.0
    %v5201 = vmax.f32 %v4517, 0.0
    %v5202 = vmax.f32 %v4522, 0.0
    %v5203 = vmax.f32 %v4525, 0.0
    %v5204 = vmax.f32 %v4530, 0.0
    %v5205 = vmax.f32 %v4533, 0.0
    %v5206 = vmax.f32 %v4538, 0.0
    %v5207 = vmax.f32 %v4541, 0.0
    %v5208 = vmax.f32 %v4546, 0.0
    %v5209 = vmax.f32 %v4549, 0.0
    %v5210 = vmax.f32 %v4554, 0.0
    %v5211 = vmax.f32 %v4557, 0.0
    %v5212 = vmax.f32 %v4562, 0.0
    %v5213 = vmax.f32 %v4565, 0.0
    %v5214 = vmax.f32 %v4570, 0.0
    %v5215 = vmax.f32 %v4573, 0.0
    %v5216 = vmax.f32 %v4578, 0.0
    %v5217 = vmax.f32 %v4581, 0.0
    %v5218 = vmax.f32 %v4586, 0.0
    %v5219 = vmax.f32 %v4589, 0.0
    %v5220 = vmax.f32 %v4594, 0.0
    %v5221 = vmax.f32 %v4597, 0.0
    %v5222 = vmax.f32 %v4602, 0.0
    %v5223 = vmax.f32 %v4605, 0.0
    %v5224 = vmax.f32 %v4610, 0.0
    %v5225 = vmax.f32 %v4613, 0.0
    %v5226 = vmax.f32 %v4618, 0.0
    %v5227 = vmax.f32 %v4621, 0.0
    %v5228 = vmax.f32 %v4626, 0.0
    %v5229 = vmax.f32 %v4629, 0.0
    %v5230 = vmax.f32 %v4634, 0.0
    %v5231 = vmax.f32 %v4637, 0.0
    %v5232 = vmax.f32 %v4642, 0.0
    %v5233 = vmax.f32 %v4645, 0.0
    %v5234 = vmax.f32 %v4650, 0.0
    %v5235 = vmax.f32 %v4653, 0.0
    %v5236 = vmax.f32 %v4658, 0.0
    %v5237 = vmax.f32 %v4661, 0.0
    %v5238 = vmax.f32 %v4666, 0.0
    %v5239 = vmax.f32 %v4669, 0.0
    %v5240 = vmax.f32 %v4674, 0.0
    %v5241 = vmax.f32 %v4677, 0.0
    %v5242 = vmax.f32 %v4682, 0.0
    %v5243 = vmax.f32 %v4685, 0.0
    %v5244 = vmax.f32 %v4690, 0.0
    %v5245 = vmax.f32 %v4693, 0.0
    %v5246 = vmax.f32 %v4698, 0.0
    %v5247 = vmax.f32 %v4701, 0.0
    %v5248 = vmax.f32 %v4706, 0.0
    %v5249 = vmax.f32 %v4709, 0.0
    %v5250 = vmax.f32 %v4714, 0.0
    %v5251 = vmax.f32 %v4717, 0.0
    %v5252 = vmax.f32 %v4722, 0.0
    %v5253 = vmax.f32 %v4725, 0.0
    %v5254 = vmax.f32 %v4730, 0.0
    %v5255 = vmax.f32 %v4733, 0.0
    %v5256 = vmax.f32 %v4738, 0.0
    %v5257 = vmax.f32 %v4741, 0.0
    %v5258 = vmax.f32 %v4746, 0.0
    %v5259 = vmax.f32 %v4749, 0.0
    %v5260 = vmax.f32 %v4754, 0.0
    %v5261 = vmax.f32 %v4757, 0.0
    %v5262 = vmax.f32 %v4762, 0.0
    %v5263 = vmax.f32 %v4765, 0.0
    %v5264 = vmax.f32 %v4770, 0.0
    %v5265 = vmax.f32 %v4773, 0.0
    %v5266 = vmax.f32 %v4778, 0.0
    %v5267 = vmax.f32 %v4781, 0.0
    %v5268 = vmax.f32 %v4786, 0.0
    %v5269 = vmax.f32 %v4789, 0.0
    %v5270 = vmax.f32 %v4794, 0.0
    %v5271 = vmax.f32 %v4797, 0.0
    %v5272 = vmax.f32 %v4802, 0.0
    %v5273 = vmax.f32 %v4805, 0.0
    %v5274 = vmax.f32 %v4810, 0.0
    %v5275 = vmax.f32 %v4813, 0.0
    %v5276 = vmax.f32 %v4818, 0.0
    %v5277 = vmax.f32 %v4821, 0.0
    %v5278 = vmax.f32 %v4826, 0.0
    %v5279 = vmax.f32 %v4829, 0.0
    %v5280 = vmax.f32 %v4834, 0.0
    %v5281 = vmax.f32 %v4837, 0.0
    %v5282 = vmax.f32 %v4842, 0.0
    %v5283 = vmax.f32 %v4845, 0.0
    %v5284 = vmax.f32 %v4850, 0.0
    %v5285 = vmax.f32 %v4853, 0.0
    %v5286 = vmax.f32 %v4858, 0.0
    %v5287 = vmax.f32 %v4861, 0.0
    %v5288 = vmax.f32 %v4866, 0.0
    %v5289 = vmax.f32 %v4869, 0.0
    %v5290 = vmax.f32 %v4874, 0.0
    %v5291 = vmax.f32 %v4877, 0.0
    %v5292 = vmax.f32 %v4882, 0.0
    %v5293 = vmax.f32 %v4885, 0.0
    %v5294 = vmax.f32 %v4890, 0.0
    %v5295 = vmax.f32 %v4893, 0.0
    %v5296 = vmax.f32 %v4898, 0.0
    %v5297 = vmax.f32 %v4901, 0.0
    %v5298 = vmax.f32 %v4906, 0.0
    %v5299 = vmax.f32 %v4909, 0.0
    %v5300 = vmax.f32 %v4914, 0.0
    %v5301 = vmax.f32 %v4917, 0.0
    %v5302 = vmax.f32 %v4922, 0.0
    %v5303 = vmax.f32 %v4925, 0.0
    %v5304 = vmax.f32 %v4930, 0.0
    %v5305 = vmax.f32 %v4933, 0.0
    %v5306 = vmax.f32 %v4938, 0.0
    %v5307 = vmax.f32 %v4941, 0.0
    %v5308 = vmax.f32 %v4946, 0.0
    %v5309 = vmax.f32 %v4949, 0.0
    %v5310 = vmax.f32 %v4954, 0.0
    %v5311 = vmax.f32 %v4957, 0.0
    %v5312 = vmax.f32 %v4962, 0.0
    %v5313 = vmax.f32 %v4965, 0.0
    %v5314 = vmax.f32 %v4970, 0.0
    %v5315 = vmax.f32 %v4973, 0.0
    %v5316 = vmax.f32 %v4978, 0.0
    %v5317 = vmax.f32 %v4981, 0.0
    %v5318 = vmax.f32 %v4986, 0.0
    %v5319 = vmax.f32 %v4989, 0.0
    %v5320 = vmax.f32 %v4994, 0.0
    %v5321 = vmax.f32 %v4997, 0.0
    %v5322 = vmax.f32 %v5002, 0.0
    %v5323 = vmax.f32 %v5005, 0.0
    %v5324 = vmax.f32 %v5010, 0.0
    %v5325 = vmax.f32 %v5013, 0.0
    %v5326 = vmax.f32 %v5018, 0.0
    %v5327 = vmax.f32 %v5021, 0.0
    %v5328 = vmax.f32 %v5026, 0.0
    %v5329 = vmax.f32 %v5029, 0.0
    %v5330 = vmax.f32 %v5034, 0.0
    %v5331 = vmax.f32 %v5037, 0.0
    %v5332 = vmax.f32 %v5042, 0.0
    %v5333 = vmax.f32 %v5045, 0.0
    %v5334 = vmax.f32 %v5050, 0.0
    %v5335 = vmax.f32 %v5053, 0.0
    %v5336 = vmax.f32 %v5058, 0.0
    %v5337 = vmax.f32 %v5061, 0.0
    %v5338 = vmax.f32 %v5066, 0.0
    %v5339 = vmax.f32 %v5069, 0.0
    %v5340 = vmax.f32 %v5074, 0.0
    %v5341 = vmax.f32 %v5077, 0.0
    %v5342 = vmax.f32 %v5082, 0.0
    %v5343 = vmax.f32 %v5085, 0.0
    %v5344 = vmax.f32 %v5090, 0.0
    %v5345 = vmax.f32 %v5093, 0.0
    %v5346 = vmax.f32 %v5098, 0.0
    %v5347 = vmax.f32 %v5101, 0.0
    %v5348 = vmax.f32 %v5106, 0.0
    %v5349 = vmax.f32 %v5109, 0.0
    %v5350 = vmax.f32 %v5114, 0.0
    %v5351 = vmax.f32 %v5117, 0.0
    %v5352 = vmax.f32 %v5122, 0.0
    %v5353 = vmax.f32 %v5125, 0.0
    %v5354 = vmax.f32 %v5130, 0.0
    %v5355 = vmax.f32 %v5133, 0.0
    %v5356 = vmax.f32 %v5138, 0.0
    %v5357 = vmax.f32 %v5141, 0.0
    %v5358 = vmax.f32 %v5146, 0.0
    %v5359 = vmax.f32 %v5149, 0.0
    %v5360 = vmax.f32 %v5154, 0.0
    %v5361 = vmax.f32 %v5157, 0.0
    %v5362 = vmax.f32 %v5162, 0.0
    %v5363 = vmax.f32 %v5165, 0.0
    %v5364 = vpack.c.bf16 %v5169, %v5168
    %v5365 = vpack.c.bf16 %v5171, %v5170
    %v5366 = vpack.c.bf16 %v5173, %v5172
    %v5367 = vpack.c.bf16 %v5175, %v5174
    %v5368 = vpack.c.bf16 %v5177, %v5176
    %v5369 = vpack.c.bf16 %v5179, %v5178
    %v5370 = vpack.c.bf16 %v5181, %v5180
    %v5371 = vpack.c.bf16 %v5183, %v5182
    %v5372 = vpack.c.bf16 %v5185, %v5184
    %v5373 = vpack.c.bf16 %v5187, %v5186
    %v5374 = vpack.c.bf16 %v5189, %v5188
    %v5375 = vpack.c.bf16 %v5191, %v5190
    %v5376 = vpack.c.bf16 %v5193, %v5192
    %v5377 = vpack.c.bf16 %v5195, %v5194
    %v5378 = vpack.c.bf16 %v5197, %v5196
    %v5379 = vpack.c.bf16 %v5199, %v5198
    %v5380 = vpack.c.bf16 %v5201, %v5200
    %v5381 = vpack.c.bf16 %v5203, %v5202
    %v5382 = vpack.c.bf16 %v5205, %v5204
    %v5383 = vpack.c.bf16 %v5207, %v5206
    %v5384 = vpack.c.bf16 %v5209, %v5208
    %v5385 = vpack.c.bf16 %v5211, %v5210
    %v5386 = vpack.c.bf16 %v5213, %v5212
    %v5387 = vpack.c.bf16 %v5215, %v5214
    %v5388 = vpack.c.bf16 %v5217, %v5216
    %v5389 = vpack.c.bf16 %v5219, %v5218
    %v5390 = vpack.c.bf16 %v5221, %v5220
    %v5391 = vpack.c.bf16 %v5223, %v5222
    %v5392 = vpack.c.bf16 %v5225, %v5224
    %v5393 = vpack.c.bf16 %v5227, %v5226
    %v5394 = vpack.c.bf16 %v5229, %v5228
    %v5395 = vpack.c.bf16 %v5231, %v5230
    %v5396 = vpack.c.bf16 %v5233, %v5232
    %v5397 = vpack.c.bf16 %v5235, %v5234
    %v5398 = vpack.c.bf16 %v5237, %v5236
    %v5399 = vpack.c.bf16 %v5239, %v5238
    %v5400 = vpack.c.bf16 %v5241, %v5240
    %v5401 = vpack.c.bf16 %v5243, %v5242
    %v5402 = vpack.c.bf16 %v5245, %v5244
    %v5403 = vpack.c.bf16 %v5247, %v5246
    %v5404 = vpack.c.bf16 %v5249, %v5248
    %v5405 = vpack.c.bf16 %v5251, %v5250
    %v5406 = vpack.c.bf16 %v5253, %v5252
    %v5407 = vpack.c.bf16 %v5255, %v5254
    %v5408 = vpack.c.bf16 %v5257, %v5256
    %v5409 = vpack.c.bf16 %v5259, %v5258
    %v5410 = vpack.c.bf16 %v5261, %v5260
    %v5411 = vpack.c.bf16 %v5263, %v5262
    %v5412 = vpack.c.bf16 %v5265, %v5264
    %v5413 = vpack.c.bf16 %v5267, %v5266
    %v5414 = vpack.c.bf16 %v5269, %v5268
    %v5415 = vpack.c.bf16 %v5271, %v5270
    %v5416 = vpack.c.bf16 %v5273, %v5272
    %v5417 = vpack.c.bf16 %v5275, %v5274
    %v5418 = vpack.c.bf16 %v5277, %v5276
    %v5419 = vpack.c.bf16 %v5279, %v5278
    %v5420 = vpack.c.bf16 %v5281, %v5280
    %v5421 = vpack.c.bf16 %v5283, %v5282
    %v5422 = vpack.c.bf16 %v5285, %v5284
    %v5423 = vpack.c.bf16 %v5287, %v5286
    %v5424 = vpack.c.bf16 %v5289, %v5288
    %v5425 = vpack.c.bf16 %v5291, %v5290
    %v5426 = vpack.c.bf16 %v5293, %v5292
    %v5427 = vpack.c.bf16 %v5295, %v5294
    %v5428 = vpack.c.bf16 %v5297, %v5296
    %v5429 = vpack.c.bf16 %v5299, %v5298
    %v5430 = vpack.c.bf16 %v5301, %v5300
    %v5431 = vpack.c.bf16 %v5303, %v5302
    %v5432 = vpack.c.bf16 %v5305, %v5304
    %v5433 = vpack.c.bf16 %v5307, %v5306
    %v5434 = vpack.c.bf16 %v5309, %v5308
    %v5435 = vpack.c.bf16 %v5311, %v5310
    %v5436 = vpack.c.bf16 %v5313, %v5312
    %v5437 = vpack.c.bf16 %v5315, %v5314
    %v5438 = vpack.c.bf16 %v5317, %v5316
    %v5439 = vpack.c.bf16 %v5319, %v5318
    %v5440 = vpack.c.bf16 %v5321, %v5320
    %v5441 = vpack.c.bf16 %v5323, %v5322
    %v5442 = vpack.c.bf16 %v5325, %v5324
    %v5443 = vpack.c.bf16 %v5327, %v5326
    %v5444 = vpack.c.bf16 %v5329, %v5328
    %v5445 = vpack.c.bf16 %v5331, %v5330
    %v5446 = vpack.c.bf16 %v5333, %v5332
    %v5447 = vpack.c.bf16 %v5335, %v5334
    %v5448 = vpack.c.bf16 %v5337, %v5336
    %v5449 = vpack.c.bf16 %v5339, %v5338
    %v5450 = vpack.c.bf16 %v5341, %v5340
    %v5451 = vpack.c.bf16 %v5343, %v5342
    %v5452 = vpack.c.bf16 %v5345, %v5344
    %v5453 = vpack.c.bf16 %v5347, %v5346
    %v5454 = vpack.c.bf16 %v5349, %v5348
    %v5455 = vpack.c.bf16 %v5351, %v5350
    %v5456 = vpack.c.bf16 %v5353, %v5352
    %v5457 = vpack.c.bf16 %v5355, %v5354
    %v5458 = vpack.c.bf16 %v5357, %v5356
    %v5459 = vpack.c.bf16 %v5359, %v5358
    %v5460 = vpack.c.bf16 %v5361, %v5360
    %v5461 = vpack.c.bf16 %v5363, %v5362
    %v5462 = vld [vmem:[%s4] sm:$0xff]
    %v5463 = vld [vmem:[%s4 + $0x8] sm:$0xff]
    %v5464 = vld [vmem:[%s4 + $0x10] sm:$0xff]
    %v5465 = vld [vmem:[%s4 + $0x18] sm:$0xff]
    %v5466 = vld [vmem:[%s4 + $0x20] sm:$0xff]
    %v5467 = vld [vmem:[%s4 + $0x28] sm:$0xff]
    %v5468 = vld [vmem:[%s4 + $0x30] sm:$0xf]
    %v5469 = vld [vmem:[%s4 + $0x34] sm:$0xff]
    %v5470 = vld [vmem:[%s4 + $0x3c] sm:$0xff]
    %v5471 = vld [vmem:[%s4 + $0x44] sm:$0xff]
    %v5472 = vld [vmem:[%s4 + $0x4c] sm:$0xff]
    %v5473 = vld [vmem:[%s4 + $0x54] sm:$0xff]
    %v5474 = vld [vmem:[%s4 + $0x5c] sm:$0xff]
    %v5475 = vld [vmem:[%s4 + $0x64] sm:$0xf]
    %v5476 = vld [vmem:[%s4 + $0x68] sm:$0xff]
    %v5477 = vld [vmem:[%s4 + $0x70] sm:$0xff]
    %v5478 = vld [vmem:[%s4 + $0x78] sm:$0xff]
    %v5479 = vld [vmem:[%s4 + $0x80] sm:$0xff]
    %v5480 = vld [vmem:[%s4 + $0x88] sm:$0xff]
    %v5481 = vld [vmem:[%s4 + $0x90] sm:$0xff]
    %v5482 = vld [vmem:[%s4 + $0x98] sm:$0xf]
    %v5483 = vld [vmem:[%s4 + $0x9c] sm:$0xff]
    %v5484 = vld [vmem:[%s4 + $0xa4] sm:$0xff]
    %v5485 = vld [vmem:[%s4 + $0xac] sm:$0xff]
    %v5486 = vld [vmem:[%s4 + $0xb4] sm:$0xff]
    %v5487 = vld [vmem:[%s4 + $0xbc] sm:$0xff]
    %v5488 = vld [vmem:[%s4 + $0xc4] sm:$0xff]
    %v5489 = vld [vmem:[%s4 + $0xcc] sm:$0xf]
    %v5490 = vld [vmem:[%s4 + $0xd0] sm:$0xff]
    %v5491 = vld [vmem:[%s4 + $0xd8] sm:$0xff]
    %v5492 = vld [vmem:[%s4 + $0xe0] sm:$0xff]
    %v5493 = vld [vmem:[%s4 + $0xe8] sm:$0xff]
    %v5494 = vld [vmem:[%s4 + $0xf0] sm:$0xff]
    %v5495 = vld [vmem:[%s4 + $0xf8] sm:$0xff]
    %v5496 = vld [vmem:[%s4 + $0x100] sm:$0xf]
    %v5497 = vld [vmem:[%s4 + $0x104] sm:$0xff]
    %v5498 = vld [vmem:[%s4 + $0x10c] sm:$0xff]
    %v5499 = vld [vmem:[%s4 + $0x114] sm:$0xff]
    %v5500 = vld [vmem:[%s4 + $0x11c] sm:$0xff]
    %v5501 = vld [vmem:[%s4 + $0x124] sm:$0xff]
    %v5502 = vld [vmem:[%s4 + $0x12c] sm:$0xff]
    %v5503 = vld [vmem:[%s4 + $0x134] sm:$0xf]
    %v5504 = vld [vmem:[%s4 + $0x138] sm:$0xff]
    %v5505 = vld [vmem:[%s4 + $0x140] sm:$0xff]
    %v5506 = vld [vmem:[%s4 + $0x148] sm:$0xff]
    %v5507 = vld [vmem:[%s4 + $0x150] sm:$0xff]
    %v5508 = vld [vmem:[%s4 + $0x158] sm:$0xff]
    %v5509 = vld [vmem:[%s4 + $0x160] sm:$0xff]
    %v5510 = vld [vmem:[%s4 + $0x168] sm:$0xf]
    %v5511 = vld [vmem:[%s4 + $0x16c] sm:$0xff]
    %v5512 = vld [vmem:[%s4 + $0x174] sm:$0xff]
    %v5513 = vld [vmem:[%s4 + $0x17c] sm:$0xff]
    %v5514 = vld [vmem:[%s4 + $0x184] sm:$0xff]
    %v5515 = vld [vmem:[%s4 + $0x18c] sm:$0xff]
    %v5516 = vld [vmem:[%s4 + $0x194] sm:$0xff]
    %v5517 = vld [vmem:[%s4 + $0x19c] sm:$0xf]
    %v5518 = vld [vmem:[%s4 + $0x1a0] sm:$0xff]
    %v5519 = vld [vmem:[%s4 + $0x1a8] sm:$0xff]
    %v5520 = vld [vmem:[%s4 + $0x1b0] sm:$0xff]
    %v5521 = vld [vmem:[%s4 + $0x1b8] sm:$0xff]
    %v5522 = vld [vmem:[%s4 + $0x1c0] sm:$0xff]
    %v5523 = vld [vmem:[%s4 + $0x1c8] sm:$0xff]
    %v5524 = vld [vmem:[%s4 + $0x1d0] sm:$0xf]
    %v5525 = vld [vmem:[%s4 + $0x1d4] sm:$0xff]
    %v5526 = vld [vmem:[%s4 + $0x1dc] sm:$0xff]
    %v5527 = vld [vmem:[%s4 + $0x1e4] sm:$0xff]
    %v5528 = vld [vmem:[%s4 + $0x1ec] sm:$0xff]
    %v5529 = vld [vmem:[%s4 + $0x1f4] sm:$0xff]
    %v5530 = vld [vmem:[%s4 + $0x1fc] sm:$0xff]
    %v5531 = vld [vmem:[%s4 + $0x204] sm:$0xf]
    %v5532 = vld [vmem:[%s4 + $0x208] sm:$0xff]
    %v5533 = vld [vmem:[%s4 + $0x210] sm:$0xff]
    %v5534 = vld [vmem:[%s4 + $0x218] sm:$0xff]
    %v5535 = vld [vmem:[%s4 + $0x220] sm:$0xff]
    %v5536 = vld [vmem:[%s4 + $0x228] sm:$0xff]
    %v5537 = vld [vmem:[%s4 + $0x230] sm:$0xff]
    %v5538 = vld [vmem:[%s4 + $0x238] sm:$0xf]
    %v5539 = vld [vmem:[%s4 + $0x23c] sm:$0xff]
    %v5540 = vld [vmem:[%s4 + $0x244] sm:$0xff]
    %v5541 = vld [vmem:[%s4 + $0x24c] sm:$0xff]
    %v5542 = vld [vmem:[%s4 + $0x254] sm:$0xff]
    %v5543 = vld [vmem:[%s4 + $0x25c] sm:$0xff]
    %v5544 = vld [vmem:[%s4 + $0x264] sm:$0xff]
    %v5545 = vld [vmem:[%s4 + $0x26c] sm:$0xf]
    %v5546 = vld [vmem:[%s4 + $0x270] sm:$0xff]
    %v5547 = vld [vmem:[%s4 + $0x278] sm:$0xff]
    %v5548 = vld [vmem:[%s4 + $0x280] sm:$0xff]
    %v5549 = vld [vmem:[%s4 + $0x288] sm:$0xff]
    %v5550 = vld [vmem:[%s4 + $0x290] sm:$0xff]
    %v5551 = vld [vmem:[%s4 + $0x298] sm:$0xff]
    %v5552 = vld [vmem:[%s4 + $0x2a0] sm:$0xf]
    %v5553 = vld [vmem:[%s4 + $0x2a4] sm:$0xff]
    %v5554 = vld [vmem:[%s4 + $0x2ac] sm:$0xff]
    %v5555 = vld [vmem:[%s4 + $0x2b4] sm:$0xff]
    %v5556 = vld [vmem:[%s4 + $0x2bc] sm:$0xff]
    %v5557 = vld [vmem:[%s4 + $0x2c4] sm:$0xff]
    %v5558 = vld [vmem:[%s4 + $0x2cc] sm:$0xff]
    %v5559 = vld [vmem:[%s4 + $0x2d4] sm:$0xf]
    %v5560 = vld [vmem:[%s4 + $0x2d8] sm:$0xff]
    %v5561 = vld [vmem:[%s4 + $0x2e0] sm:$0xff]
    %v5562 = vld [vmem:[%s4 + $0x2e8] sm:$0xff]
    %v5563 = vld [vmem:[%s4 + $0x2f0] sm:$0xff]
    %v5564 = vld [vmem:[%s4 + $0x2f8] sm:$0xff]
    %v5565 = vld [vmem:[%s4 + $0x300] sm:$0xff]
    %v5566 = vld [vmem:[%s4 + $0x308] sm:$0xf]
    %v5567 = vld [vmem:[%s4 + $0x30c] sm:$0xff]
    %v5568 = vld [vmem:[%s4 + $0x314] sm:$0xff]
    %v5569 = vld [vmem:[%s4 + $0x31c] sm:$0xff]
    %v5570 = vld [vmem:[%s4 + $0x324] sm:$0xff]
    %v5571 = vld [vmem:[%s4 + $0x32c] sm:$0xff]
    %v5572 = vld [vmem:[%s4 + $0x334] sm:$0xff]
    %v5573 = vld [vmem:[%s4 + $0x33c] sm:$0xf]
    %v5686 = vunpack.c.l.b16 %v5462
    %v5687 = vunpack.c.h.b16 %v5462
    %v5688 = vunpack.c.l.b16 %v5463
    %v5689 = vunpack.c.h.b16 %v5463
    %v5690 = vunpack.c.l.b16 %v5464
    %v5691 = vunpack.c.h.b16 %v5464
    %v5692 = vunpack.c.l.b16 %v5465
    %v5693 = vunpack.c.h.b16 %v5465
    %v5694 = vunpack.c.l.b16 %v5466
    %v5695 = vunpack.c.h.b16 %v5466
    %v5696 = vunpack.c.l.b16 %v5467
    %v5697 = vunpack.c.h.b16 %v5467
    %v5698 = vunpack.c.l.b16 %v5468
    %v5699 = vunpack.c.l.b16 %v5469
    %v5700 = vunpack.c.h.b16 %v5469
    %v5701 = vunpack.c.l.b16 %v5470
    %v5702 = vunpack.c.h.b16 %v5470
    %v5703 = vunpack.c.l.b16 %v5471
    %v5704 = vunpack.c.h.b16 %v5471
    %v5705 = vunpack.c.l.b16 %v5472
    %v5706 = vunpack.c.h.b16 %v5472
    %v5707 = vunpack.c.l.b16 %v5473
    %v5708 = vunpack.c.h.b16 %v5473
    %v5709 = vunpack.c.l.b16 %v5474
    %v5710 = vunpack.c.h.b16 %v5474
    %v5711 = vunpack.c.l.b16 %v5475
    %v5712 = vunpack.c.l.b16 %v5476
    %v5713 = vunpack.c.h.b16 %v5476
    %v5714 = vunpack.c.l.b16 %v5477
    %v5715 = vunpack.c.h.b16 %v5477
    %v5716 = vunpack.c.l.b16 %v5478
    %v5717 = vunpack.c.h.b16 %v5478
    %v5718 = vunpack.c.l.b16 %v5479
    %v5719 = vunpack.c.h.b16 %v5479
    %v5720 = vunpack.c.l.b16 %v5480
    %v5721 = vunpack.c.h.b16 %v5480
    %v5722 = vunpack.c.l.b16 %v5481
    %v5723 = vunpack.c.h.b16 %v5481
    %v5724 = vunpack.c.l.b16 %v5482
    %v5725 = vunpack.c.l.b16 %v5483
    %v5726 = vunpack.c.h.b16 %v5483
    %v5727 = vunpack.c.l.b16 %v5484
    %v5728 = vunpack.c.h.b16 %v5484
    %v5729 = vunpack.c.l.b16 %v5485
    %v5730 = vunpack.c.h.b16 %v5485
    %v5731 = vunpack.c.l.b16 %v5486
    %v5732 = vunpack.c.h.b16 %v5486
    %v5733 = vunpack.c.l.b16 %v5487
    %v5734 = vunpack.c.h.b16 %v5487
    %v5735 = vunpack.c.l.b16 %v5488
    %v5736 = vunpack.c.h.b16 %v5488
    %v5737 = vunpack.c.l.b16 %v5489
    %v5738 = vunpack.c.l.b16 %v5490
    %v5739 = vunpack.c.h.b16 %v5490
    %v5740 = vunpack.c.l.b16 %v5491
    %v5741 = vunpack.c.h.b16 %v5491
    %v5742 = vunpack.c.l.b16 %v5492
    %v5743 = vunpack.c.h.b16 %v5492
    %v5744 = vunpack.c.l.b16 %v5493
    %v5745 = vunpack.c.h.b16 %v5493
    %v5746 = vunpack.c.l.b16 %v5494
    %v5747 = vunpack.c.h.b16 %v5494
    %v5748 = vunpack.c.l.b16 %v5495
    %v5749 = vunpack.c.h.b16 %v5495
    %v5750 = vunpack.c.l.b16 %v5496
    %v5751 = vunpack.c.l.b16 %v5497
    %v5752 = vunpack.c.h.b16 %v5497
    %v5753 = vunpack.c.l.b16 %v5498
    %v5754 = vunpack.c.h.b16 %v5498
    %v5755 = vunpack.c.l.b16 %v5499
    %v5756 = vunpack.c.h.b16 %v5499
    %v5757 = vunpack.c.l.b16 %v5500
    %v5758 = vunpack.c.h.b16 %v5500
    %v5759 = vunpack.c.l.b16 %v5501
    %v5760 = vunpack.c.h.b16 %v5501
    %v5761 = vunpack.c.l.b16 %v5502
    %v5762 = vunpack.c.h.b16 %v5502
    %v5763 = vunpack.c.l.b16 %v5503
    %v5764 = vunpack.c.l.b16 %v5504
    %v5765 = vunpack.c.h.b16 %v5504
    %v5766 = vunpack.c.l.b16 %v5505
    %v5767 = vunpack.c.h.b16 %v5505
    %v5768 = vunpack.c.l.b16 %v5506
    %v5769 = vunpack.c.h.b16 %v5506
    %v5770 = vunpack.c.l.b16 %v5507
    %v5771 = vunpack.c.h.b16 %v5507
    %v5772 = vunpack.c.l.b16 %v5508
    %v5773 = vunpack.c.h.b16 %v5508
    %v5774 = vunpack.c.l.b16 %v5509
    %v5775 = vunpack.c.h.b16 %v5509
    %v5776 = vunpack.c.l.b16 %v5510
    %v5777 = vunpack.c.l.b16 %v5511
    %v5778 = vunpack.c.h.b16 %v5511
    %v5779 = vunpack.c.l.b16 %v5512
    %v5780 = vunpack.c.h.b16 %v5512
    %v5781 = vunpack.c.l.b16 %v5513
    %v5782 = vunpack.c.h.b16 %v5513
    %v5783 = vunpack.c.l.b16 %v5514
    %v5784 = vunpack.c.h.b16 %v5514
    %v5785 = vunpack.c.l.b16 %v5515
    %v5786 = vunpack.c.h.b16 %v5515
    %v5787 = vunpack.c.l.b16 %v5516
    %v5788 = vunpack.c.h.b16 %v5516
    %v5789 = vunpack.c.l.b16 %v5517
    %v5790 = vunpack.c.l.b16 %v5518
    %v5791 = vunpack.c.h.b16 %v5518
    %v5792 = vunpack.c.l.b16 %v5519
    %v5793 = vunpack.c.h.b16 %v5519
    %v5794 = vunpack.c.l.b16 %v5520
    %v5795 = vunpack.c.h.b16 %v5520
    %v5796 = vunpack.c.l.b16 %v5521
    %v5797 = vunpack.c.h.b16 %v5521
    %v5798 = vunpack.c.l.b16 %v5522
    %v5799 = vunpack.c.h.b16 %v5522
    %v5800 = vunpack.c.l.b16 %v5523
    %v5801 = vunpack.c.h.b16 %v5523
    %v5802 = vunpack.c.l.b16 %v5524
    %v5803 = vunpack.c.l.b16 %v5525
    %v5804 = vunpack.c.h.b16 %v5525
    %v5805 = vunpack.c.l.b16 %v5526
    %v5806 = vunpack.c.h.b16 %v5526
    %v5807 = vunpack.c.l.b16 %v5527
    %v5808 = vunpack.c.h.b16 %v5527
    %v5809 = vunpack.c.l.b16 %v5528
    %v5810 = vunpack.c.h.b16 %v5528
    %v5811 = vunpack.c.l.b16 %v5529
    %v5812 = vunpack.c.h.b16 %v5529
    %v5813 = vunpack.c.l.b16 %v5530
    %v5814 = vunpack.c.h.b16 %v5530
    %v5815 = vunpack.c.l.b16 %v5531
    %v5816 = vunpack.c.l.b16 %v5532
    %v5817 = vunpack.c.h.b16 %v5532
    %v5818 = vunpack.c.l.b16 %v5533
    %v5819 = vunpack.c.h.b16 %v5533
    %v5820 = vunpack.c.l.b16 %v5534
    %v5821 = vunpack.c.h.b16 %v5534
    %v5822 = vunpack.c.l.b16 %v5535
    %v5823 = vunpack.c.h.b16 %v5535
    %v5824 = vunpack.c.l.b16 %v5536
    %v5825 = vunpack.c.h.b16 %v5536
    %v5826 = vunpack.c.l.b16 %v5537
    %v5827 = vunpack.c.h.b16 %v5537
    %v5828 = vunpack.c.l.b16 %v5538
    %v5829 = vunpack.c.l.b16 %v5539
    %v5830 = vunpack.c.h.b16 %v5539
    %v5831 = vunpack.c.l.b16 %v5540
    %v5832 = vunpack.c.h.b16 %v5540
    %v5833 = vunpack.c.l.b16 %v5541
    %v5834 = vunpack.c.h.b16 %v5541
    %v5835 = vunpack.c.l.b16 %v5542
    %v5836 = vunpack.c.h.b16 %v5542
    %v5837 = vunpack.c.l.b16 %v5543
    %v5838 = vunpack.c.h.b16 %v5543
    %v5839 = vunpack.c.l.b16 %v5544
    %v5840 = vunpack.c.h.b16 %v5544
    %v5841 = vunpack.c.l.b16 %v5545
    %v5842 = vunpack.c.l.b16 %v5546
    %v5843 = vunpack.c.h.b16 %v5546
    %v5844 = vunpack.c.l.b16 %v5547
    %v5845 = vunpack.c.h.b16 %v5547
    %v5846 = vunpack.c.l.b16 %v5548
    %v5847 = vunpack.c.h.b16 %v5548
    %v5848 = vunpack.c.l.b16 %v5549
    %v5849 = vunpack.c.h.b16 %v5549
    %v5850 = vunpack.c.l.b16 %v5550
    %v5851 = vunpack.c.h.b16 %v5550
    %v5852 = vunpack.c.l.b16 %v5551
    %v5853 = vunpack.c.h.b16 %v5551
    %v5854 = vunpack.c.l.b16 %v5552
    %v5855 = vunpack.c.l.b16 %v5553
    %v5856 = vunpack.c.h.b16 %v5553
    %v5857 = vunpack.c.l.b16 %v5554
    %v5858 = vunpack.c.h.b16 %v5554
    %v5859 = vunpack.c.l.b16 %v5555
    %v5860 = vunpack.c.h.b16 %v5555
    %v5861 = vunpack.c.l.b16 %v5556
    %v5862 = vunpack.c.h.b16 %v5556
    %v5863 = vunpack.c.l.b16 %v5557
    %v5864 = vunpack.c.h.b16 %v5557
    %v5865 = vunpack.c.l.b16 %v5558
    %v5866 = vunpack.c.h.b16 %v5558
    %v5867 = vunpack.c.l.b16 %v5559
    %v5868 = vunpack.c.l.b16 %v5560
    %v5869 = vunpack.c.h.b16 %v5560
    %v5870 = vunpack.c.l.b16 %v5561
    %v5871 = vunpack.c.h.b16 %v5561
    %v5872 = vunpack.c.l.b16 %v5562
    %v5873 = vunpack.c.h.b16 %v5562
    %v5874 = vunpack.c.l.b16 %v5563
    %v5875 = vunpack.c.h.b16 %v5563
    %v5876 = vunpack.c.l.b16 %v5564
    %v5877 = vunpack.c.h.b16 %v5564
    %v5878 = vunpack.c.l.b16 %v5565
    %v5879 = vunpack.c.h.b16 %v5565
    %v5880 = vunpack.c.l.b16 %v5566
    %v5881 = vunpack.c.l.b16 %v5567
    %v5882 = vunpack.c.h.b16 %v5567
    %v5883 = vunpack.c.l.b16 %v5568
    %v5884 = vunpack.c.h.b16 %v5568
    %v5885 = vunpack.c.l.b16 %v5569
    %v5886 = vunpack.c.h.b16 %v5569
    %v5887 = vunpack.c.l.b16 %v5570
    %v5888 = vunpack.c.h.b16 %v5570
    %v5889 = vunpack.c.l.b16 %v5571
    %v5890 = vunpack.c.h.b16 %v5571
    %v5891 = vunpack.c.l.b16 %v5572
    %v5892 = vunpack.c.h.b16 %v5572
    %v5893 = vunpack.c.l.b16 %v5573
    %v5894 = vpack.c.b16 %v5699, %v5686
    %v5895 = vpack.c.b16 %v5700, %v5687
    %v5896 = vpack.c.b16 %v5701, %v5688
    %v5897 = vpack.c.b16 %v5702, %v5689
    %v5898 = vpack.c.b16 %v5703, %v5690
    %v5899 = vpack.c.b16 %v5704, %v5691
    %v5900 = vpack.c.b16 %v5705, %v5692
    %v5901 = vpack.c.b16 %v5706, %v5693
    %v5902 = vpack.c.b16 %v5707, %v5694
    %v5903 = vpack.c.b16 %v5708, %v5695
    %v5904 = vpack.c.b16 %v5709, %v5696
    %v5905 = vpack.c.b16 %v5710, %v5697
    %v5906 = vpack.c.b16 %v5711, %v5698
    %v5907 = vpack.c.b16 %v5725, %v5712
    %v5908 = vpack.c.b16 %v5726, %v5713
    %v5909 = vpack.c.b16 %v5727, %v5714
    %v5910 = vpack.c.b16 %v5728, %v5715
    %v5911 = vpack.c.b16 %v5729, %v5716
    %v5912 = vpack.c.b16 %v5730, %v5717
    %v5913 = vpack.c.b16 %v5731, %v5718
    %v5914 = vpack.c.b16 %v5732, %v5719
    %v5915 = vpack.c.b16 %v5733, %v5720
    %v5916 = vpack.c.b16 %v5734, %v5721
    %v5917 = vpack.c.b16 %v5735, %v5722
    %v5918 = vpack.c.b16 %v5736, %v5723
    %v5919 = vpack.c.b16 %v5737, %v5724
    %v5920 = vpack.c.b16 %v5751, %v5738
    %v5921 = vpack.c.b16 %v5752, %v5739
    %v5922 = vpack.c.b16 %v5753, %v5740
    %v5923 = vpack.c.b16 %v5754, %v5741
    %v5924 = vpack.c.b16 %v5755, %v5742
    %v5925 = vpack.c.b16 %v5756, %v5743
    %v5926 = vpack.c.b16 %v5757, %v5744
    %v5927 = vpack.c.b16 %v5758, %v5745
    %v5928 = vpack.c.b16 %v5759, %v5746
    %v5929 = vpack.c.b16 %v5760, %v5747
    %v5930 = vpack.c.b16 %v5761, %v5748
    %v5931 = vpack.c.b16 %v5762, %v5749
    %v5932 = vpack.c.b16 %v5763, %v5750
    %v5933 = vpack.c.b16 %v5777, %v5764
    %v5934 = vpack.c.b16 %v5778, %v5765
    %v5935 = vpack.c.b16 %v5779, %v5766
    %v5936 = vpack.c.b16 %v5780, %v5767
    %v5937 = vpack.c.b16 %v5781, %v5768
    %v5938 = vpack.c.b16 %v5782, %v5769
    %v5939 = vpack.c.b16 %v5783, %v5770
    %v5940 = vpack.c.b16 %v5784, %v5771
    %v5941 = vpack.c.b16 %v5785, %v5772
    %v5942 = vpack.c.b16 %v5786, %v5773
    %v5943 = vpack.c.b16 %v5787, %v5774
    %v5944 = vpack.c.b16 %v5788, %v5775
    %v5945 = vpack.c.b16 %v5789, %v5776
    %v5946 = vpack.c.b16 %v5803, %v5790
    %v5947 = vpack.c.b16 %v5804, %v5791
    %v5948 = vpack.c.b16 %v5805, %v5792
    %v5949 = vpack.c.b16 %v5806, %v5793
    %v5950 = vpack.c.b16 %v5807, %v5794
    %v5951 = vpack.c.b16 %v5808, %v5795
    %v5952 = vpack.c.b16 %v5809, %v5796
    %v5953 = vpack.c.b16 %v5810, %v5797
    %v5954 = vpack.c.b16 %v5811, %v5798
    %v5955 = vpack.c.b16 %v5812, %v5799
    %v5956 = vpack.c.b16 %v5813, %v5800
    %v5957 = vpack.c.b16 %v5814, %v5801
    %v5958 = vpack.c.b16 %v5815, %v5802
    %v5959 = vpack.c.b16 %v5829, %v5816
    %v5960 = vpack.c.b16 %v5830, %v5817
    %v5961 = vpack.c.b16 %v5831, %v5818
    %v5962 = vpack.c.b16 %v5832, %v5819
    %v5963 = vpack.c.b16 %v5833, %v5820
    %v5964 = vpack.c.b16 %v5834, %v5821
    %v5965 = vpack.c.b16 %v5835, %v5822
    %v5966 = vpack.c.b16 %v5836, %v5823
    %v5967 = vpack.c.b16 %v5837, %v5824
    %v5968 = vpack.c.b16 %v5838, %v5825
    %v5969 = vpack.c.b16 %v5839, %v5826
    %v5970 = vpack.c.b16 %v5840, %v5827
    %v5971 = vpack.c.b16 %v5841, %v5828
    %v5972 = vpack.c.b16 %v5855, %v5842
    %v5973 = vpack.c.b16 %v5856, %v5843
    %v5974 = vpack.c.b16 %v5857, %v5844
    %v5975 = vpack.c.b16 %v5858, %v5845
    %v5976 = vpack.c.b16 %v5859, %v5846
    %v5977 = vpack.c.b16 %v5860, %v5847
    %v5978 = vpack.c.b16 %v5861, %v5848
    %v5979 = vpack.c.b16 %v5862, %v5849
    %v5980 = vpack.c.b16 %v5863, %v5850
    %v5981 = vpack.c.b16 %v5864, %v5851
    %v5982 = vpack.c.b16 %v5865, %v5852
    %v5983 = vpack.c.b16 %v5866, %v5853
    %v5984 = vpack.c.b16 %v5867, %v5854
    %v5985 = vpack.c.b16 %v5881, %v5868
    %v5986 = vpack.c.b16 %v5882, %v5869
    %v5987 = vpack.c.b16 %v5883, %v5870
    %v5988 = vpack.c.b16 %v5884, %v5871
    %v5989 = vpack.c.b16 %v5885, %v5872
    %v5990 = vpack.c.b16 %v5886, %v5873
    %v5991 = vpack.c.b16 %v5887, %v5874
    %v5992 = vpack.c.b16 %v5888, %v5875
    %v5993 = vpack.c.b16 %v5889, %v5876
    %v5994 = vpack.c.b16 %v5890, %v5877
    %v5995 = vpack.c.b16 %v5891, %v5878
    %v5996 = vpack.c.b16 %v5892, %v5879
    %v5997 = vpack.c.b16 %v5893, %v5880
    %vm6094 = vcmask 261120
    %v6096 = vsel %vm6094, %v5906, 0
    %v6099 = vsel %vm6094, %v5919, 0
    %v6102 = vsel %vm6094, %v5932, 0
    %v6105 = vsel %vm6094, %v5945, 0
    %v6108 = vsel %vm6094, %v5958, 0
    %v6111 = vsel %vm6094, %v5971, 0
    %v6114 = vsel %vm6094, %v5984, 0
    %v6117 = vsel %vm6094, %v5997, 0
    %6119 = vmatprep.subr.bf16.mxu0 0
    %6120 = vmatpush1.bf16.msra.mxu0 %v5371
    %6121 = vmatprep.subr.bf16.mxu0 0
    %6122 = vmatpush1.bf16.msra.mxu0 %v5370
    %6123 = vmatprep.subr.bf16.mxu0 0
    %6124 = vmatpush1.bf16.msra.mxu0 %v5369
    %6125 = vmatprep.subr.bf16.mxu0 0
    %6126 = vmatpush1.bf16.msra.mxu0 %v5368
    %6127 = vmatprep.subr.bf16.mxu0 0
    %6128 = vmatpush1.bf16.msra.mxu0 %v5367
    %6129 = vmatprep.subr.bf16.mxu0 0
    %6130 = vmatpush1.bf16.msra.mxu0 %v5366
    %6131 = vmatprep.subr.bf16.mxu0 0
    %6132 = vmatpush1.bf16.msra.mxu0 %v5365
    %6133 = vmatprep.subr.bf16.mxu0 0
    %6134 = vmatpush1.bf16.msra.mxu0 %v5364
    %6135 = vmatprep.subr.bf16.mxu0 0
    %6136 = vmatpush2.bf16.msra.mxu0 %v5379
    %6137 = vmatprep.subr.bf16.mxu0 0
    %6138 = vmatpush2.bf16.msra.mxu0 %v5378
    %6139 = vmatprep.subr.bf16.mxu0 0
    %6140 = vmatpush2.bf16.msra.mxu0 %v5377
    %6141 = vmatprep.subr.bf16.mxu0 0
    %6142 = vmatpush2.bf16.msra.mxu0 %v5376
    %6143 = vmatprep.subr.bf16.mxu0 0
    %6144 = vmatpush2.bf16.msra.mxu0 %v5375
    %6145 = vmatprep.subr.bf16.mxu0 0
    %6146 = vmatpush2.bf16.msra.mxu0 %v5374
    %6147 = vmatprep.subr.bf16.mxu0 0
    %6148 = vmatpush2.bf16.msra.mxu0 %v5373
    %6149 = vmatprep.subr.bf16.mxu0 0
    %6150 = vmatpush2.bf16.msra.mxu0 %v5372
    %6151 = vmatprep.mubr.bf16.mxu0 %v5895
    %6152 = vmatmul.mubr.bf16.gmra.mxu0 %v5894
    %v6153 = vpop.f32.mrf.mxu0
    %v6154 = vadd.f32 0.0, %v6153
    %v6155 = vpop.f32.mrf.mxu0
    %v6156 = vpop.f32.mrf.mxu0
    %v6157 = vadd.f32 0.0, %v6156
    %v6158 = vpop.f32.mrf.mxu0
    %6159 = vmatprep.mubr.bf16.mxu0 %v5908
    %6160 = vmatmul.mubr.bf16.gmra.mxu0 %v5907
    %v6161 = vpop.f32.mrf.mxu0
    %v6162 = vadd.f32 0.0, %v6161
    %v6163 = vpop.f32.mrf.mxu0
    %v6164 = vpop.f32.mrf.mxu0
    %v6165 = vadd.f32 0.0, %v6164
    %v6166 = vpop.f32.mrf.mxu0
    %6167 = vmatprep.mubr.bf16.mxu0 %v5921
    %6168 = vmatmul.mubr.bf16.gmra.mxu0 %v5920
    %v6169 = vpop.f32.mrf.mxu0
    %v6170 = vadd.f32 0.0, %v6169
    %v6171 = vpop.f32.mrf.mxu0
    %v6172 = vpop.f32.mrf.mxu0
    %v6173 = vadd.f32 0.0, %v6172
    %v6174 = vpop.f32.mrf.mxu0
    %6175 = vmatprep.mubr.bf16.mxu0 %v5934
    %6176 = vmatmul.mubr.bf16.gmra.mxu0 %v5933
    %v6177 = vpop.f32.mrf.mxu0
    %v6178 = vadd.f32 0.0, %v6177
    %v6179 = vpop.f32.mrf.mxu0
    %v6180 = vpop.f32.mrf.mxu0
    %v6181 = vadd.f32 0.0, %v6180
    %v6182 = vpop.f32.mrf.mxu0
    %6183 = vmatprep.mubr.bf16.mxu0 %v5947
    %6184 = vmatmul.mubr.bf16.gmra.mxu0 %v5946
    %v6185 = vpop.f32.mrf.mxu0
    %v6186 = vadd.f32 0.0, %v6185
    %v6187 = vpop.f32.mrf.mxu0
    %v6188 = vpop.f32.mrf.mxu0
    %v6189 = vadd.f32 0.0, %v6188
    %v6190 = vpop.f32.mrf.mxu0
    %6191 = vmatprep.mubr.bf16.mxu0 %v5960
    %6192 = vmatmul.mubr.bf16.gmra.mxu0 %v5959
    %v6193 = vpop.f32.mrf.mxu0
    %v6194 = vadd.f32 0.0, %v6193
    %v6195 = vpop.f32.mrf.mxu0
    %v6196 = vpop.f32.mrf.mxu0
    %v6197 = vadd.f32 0.0, %v6196
    %v6198 = vpop.f32.mrf.mxu0
    %6199 = vmatprep.mubr.bf16.mxu0 %v5973
    %6200 = vmatmul.mubr.bf16.gmra.mxu0 %v5972
    %v6201 = vpop.f32.mrf.mxu0
    %v6202 = vadd.f32 0.0, %v6201
    %v6203 = vpop.f32.mrf.mxu0
    %v6204 = vpop.f32.mrf.mxu0
    %v6205 = vadd.f32 0.0, %v6204
    %v6206 = vpop.f32.mrf.mxu0
    %6207 = vmatprep.mubr.bf16.mxu0 %v5986
    %6208 = vmatmul.mubr.bf16.gmra.mxu0 %v5985
    %v6209 = vpop.f32.mrf.mxu0
    %v6210 = vadd.f32 0.0, %v6209
    %v6211 = vpop.f32.mrf.mxu0
    %v6212 = vpop.f32.mrf.mxu0
    %v6213 = vadd.f32 0.0, %v6212
    %v6214 = vpop.f32.mrf.mxu0
    %6215 = vdwg.mxu0
    %6216 = vmatprep.subr.bf16.mxu0 0
    %6217 = vmatpush1.bf16.msra.mxu0 %v5387
    %6218 = vmatprep.subr.bf16.mxu0 0
    %6219 = vmatpush1.bf16.msra.mxu0 %v5386
    %6220 = vmatprep.subr.bf16.mxu0 0
    %6221 = vmatpush1.bf16.msra.mxu0 %v5385
    %6222 = vmatprep.subr.bf16.mxu0 0
    %6223 = vmatpush1.bf16.msra.mxu0 %v5384
    %6224 = vmatprep.subr.bf16.mxu0 0
    %6225 = vmatpush1.bf16.msra.mxu0 %v5383
    %6226 = vmatprep.subr.bf16.mxu0 0
    %6227 = vmatpush1.bf16.msra.mxu0 %v5382
    %6228 = vmatprep.subr.bf16.mxu0 0
    %6229 = vmatpush1.bf16.msra.mxu0 %v5381
    %6230 = vmatprep.subr.bf16.mxu0 0
    %6231 = vmatpush1.bf16.msra.mxu0 %v5380
    %6232 = vmatprep.subr.bf16.mxu0 0
    %6233 = vmatpush2.bf16.msra.mxu0 %v5395
    %6234 = vmatprep.subr.bf16.mxu0 0
    %6235 = vmatpush2.bf16.msra.mxu0 %v5394
    %6236 = vmatprep.subr.bf16.mxu0 0
    %6237 = vmatpush2.bf16.msra.mxu0 %v5393
    %6238 = vmatprep.subr.bf16.mxu0 0
    %6239 = vmatpush2.bf16.msra.mxu0 %v5392
    %6240 = vmatprep.subr.bf16.mxu0 0
    %6241 = vmatpush2.bf16.msra.mxu0 %v5391
    %6242 = vmatprep.subr.bf16.mxu0 0
    %6243 = vmatpush2.bf16.msra.mxu0 %v5390
    %6244 = vmatprep.subr.bf16.mxu0 0
    %6245 = vmatpush2.bf16.msra.mxu0 %v5389
    %6246 = vmatprep.subr.bf16.mxu0 0
    %6247 = vmatpush2.bf16.msra.mxu0 %v5388
    %6248 = vmatprep.mubr.bf16.mxu0 %v5897
    %6249 = vmatmul.mubr.bf16.gmra.mxu0 %v5896
    %v6250 = vpop.f32.mrf.mxu0
    %v6251 = vadd.f32 %v6154, %v6250
    %v6252 = vpop.f32.mrf.mxu0
    %v6253 = vpop.f32.mrf.mxu0
    %v6254 = vadd.f32 %v6157, %v6253
    %v6255 = vpop.f32.mrf.mxu0
    %6256 = vmatprep.mubr.bf16.mxu0 %v5910
    %6257 = vmatmul.mubr.bf16.gmra.mxu0 %v5909
    %v6258 = vpop.f32.mrf.mxu0
    %v6259 = vadd.f32 %v6162, %v6258
    %v6260 = vpop.f32.mrf.mxu0
    %v6261 = vpop.f32.mrf.mxu0
    %v6262 = vadd.f32 %v6165, %v6261
    %v6263 = vpop.f32.mrf.mxu0
    %6264 = vmatprep.mubr.bf16.mxu0 %v5923
    %6265 = vmatmul.mubr.bf16.gmra.mxu0 %v5922
    %v6266 = vpop.f32.mrf.mxu0
    %v6267 = vadd.f32 %v6170, %v6266
    %v6268 = vpop.f32.mrf.mxu0
    %v6269 = vpop.f32.mrf.mxu0
    %v6270 = vadd.f32 %v6173, %v6269
    %v6271 = vpop.f32.mrf.mxu0
    %6272 = vmatprep.mubr.bf16.mxu0 %v5936
    %6273 = vmatmul.mubr.bf16.gmra.mxu0 %v5935
    %v6274 = vpop.f32.mrf.mxu0
    %v6275 = vadd.f32 %v6178, %v6274
    %v6276 = vpop.f32.mrf.mxu0
    %v6277 = vpop.f32.mrf.mxu0
    %v6278 = vadd.f32 %v6181, %v6277
    %v6279 = vpop.f32.mrf.mxu0
    %6280 = vmatprep.mubr.bf16.mxu0 %v5949
    %6281 = vmatmul.mubr.bf16.gmra.mxu0 %v5948
    %v6282 = vpop.f32.mrf.mxu0
    %v6283 = vadd.f32 %v6186, %v6282
    %v6284 = vpop.f32.mrf.mxu0
    %v6285 = vpop.f32.mrf.mxu0
    %v6286 = vadd.f32 %v6189, %v6285
    %v6287 = vpop.f32.mrf.mxu0
    %6288 = vmatprep.mubr.bf16.mxu0 %v5962
    %6289 = vmatmul.mubr.bf16.gmra.mxu0 %v5961
    %v6290 = vpop.f32.mrf.mxu0
    %v6291 = vadd.f32 %v6194, %v6290
    %v6292 = vpop.f32.mrf.mxu0
    %v6293 = vpop.f32.mrf.mxu0
    %v6294 = vadd.f32 %v6197, %v6293
    %v6295 = vpop.f32.mrf.mxu0
    %6296 = vmatprep.mubr.bf16.mxu0 %v5975
    %6297 = vmatmul.mubr.bf16.gmra.mxu0 %v5974
    %v6298 = vpop.f32.mrf.mxu0
    %v6299 = vadd.f32 %v6202, %v6298
    %v6300 = vpop.f32.mrf.mxu0
    %v6301 = vpop.f32.mrf.mxu0
    %v6302 = vadd.f32 %v6205, %v6301
    %v6303 = vpop.f32.mrf.mxu0
    %6304 = vmatprep.mubr.bf16.mxu0 %v5988
    %6305 = vmatmul.mubr.bf16.gmra.mxu0 %v5987
    %v6306 = vpop.f32.mrf.mxu0
    %v6307 = vadd.f32 %v6210, %v6306
    %v6308 = vpop.f32.mrf.mxu0
    %v6309 = vpop.f32.mrf.mxu0
    %v6310 = vadd.f32 %v6213, %v6309
    %v6311 = vpop.f32.mrf.mxu0
    %6312 = vdwg.mxu0
    %6313 = vmatprep.subr.bf16.mxu0 0
    %6314 = vmatpush1.bf16.msra.mxu0 %v5403
    %6315 = vmatprep.subr.bf16.mxu0 0
    %6316 = vmatpush1.bf16.msra.mxu0 %v5402
    %6317 = vmatprep.subr.bf16.mxu0 0
    %6318 = vmatpush1.bf16.msra.mxu0 %v5401
    %6319 = vmatprep.subr.bf16.mxu0 0
    %6320 = vmatpush1.bf16.msra.mxu0 %v5400
    %6321 = vmatprep.subr.bf16.mxu0 0
    %6322 = vmatpush1.bf16.msra.mxu0 %v5399
    %6323 = vmatprep.subr.bf16.mxu0 0
    %6324 = vmatpush1.bf16.msra.mxu0 %v5398
    %6325 = vmatprep.subr.bf16.mxu0 0
    %6326 = vmatpush1.bf16.msra.mxu0 %v5397
    %6327 = vmatprep.subr.bf16.mxu0 0
    %6328 = vmatpush1.bf16.msra.mxu0 %v5396
    %6329 = vmatprep.subr.bf16.mxu0 0
    %6330 = vmatpush2.bf16.msra.mxu0 %v5411
    %6331 = vmatprep.subr.bf16.mxu0 0
    %6332 = vmatpush2.bf16.msra.mxu0 %v5410
    %6333 = vmatprep.subr.bf16.mxu0 0
    %6334 = vmatpush2.bf16.msra.mxu0 %v5409
    %6335 = vmatprep.subr.bf16.mxu0 0
    %6336 = vmatpush2.bf16.msra.mxu0 %v5408
    %6337 = vmatprep.subr.bf16.mxu0 0
    %6338 = vmatpush2.bf16.msra.mxu0 %v5407
    %6339 = vmatprep.subr.bf16.mxu0 0
    %6340 = vmatpush2.bf16.msra.mxu0 %v5406
    %6341 = vmatprep.subr.bf16.mxu0 0
    %6342 = vmatpush2.bf16.msra.mxu0 %v5405
    %6343 = vmatprep.subr.bf16.mxu0 0
    %6344 = vmatpush2.bf16.msra.mxu0 %v5404
    %6345 = vmatprep.mubr.bf16.mxu0 %v5899
    %6346 = vmatmul.mubr.bf16.gmra.mxu0 %v5898
    %v6347 = vpop.f32.mrf.mxu0
    %v6348 = vadd.f32 %v6251, %v6347
    %v6349 = vpop.f32.mrf.mxu0
    %v6350 = vpop.f32.mrf.mxu0
    %v6351 = vadd.f32 %v6254, %v6350
    %v6352 = vpop.f32.mrf.mxu0
    %6353 = vmatprep.mubr.bf16.mxu0 %v5912
    %6354 = vmatmul.mubr.bf16.gmra.mxu0 %v5911
    %v6355 = vpop.f32.mrf.mxu0
    %v6356 = vadd.f32 %v6259, %v6355
    %v6357 = vpop.f32.mrf.mxu0
    %v6358 = vpop.f32.mrf.mxu0
    %v6359 = vadd.f32 %v6262, %v6358
    %v6360 = vpop.f32.mrf.mxu0
    %6361 = vmatprep.mubr.bf16.mxu0 %v5925
    %6362 = vmatmul.mubr.bf16.gmra.mxu0 %v5924
    %v6363 = vpop.f32.mrf.mxu0
    %v6364 = vadd.f32 %v6267, %v6363
    %v6365 = vpop.f32.mrf.mxu0
    %v6366 = vpop.f32.mrf.mxu0
    %v6367 = vadd.f32 %v6270, %v6366
    %v6368 = vpop.f32.mrf.mxu0
    %6369 = vmatprep.mubr.bf16.mxu0 %v5938
    %6370 = vmatmul.mubr.bf16.gmra.mxu0 %v5937
    %v6371 = vpop.f32.mrf.mxu0
    %v6372 = vadd.f32 %v6275, %v6371
    %v6373 = vpop.f32.mrf.mxu0
    %v6374 = vpop.f32.mrf.mxu0
    %v6375 = vadd.f32 %v6278, %v6374
    %v6376 = vpop.f32.mrf.mxu0
    %6377 = vmatprep.mubr.bf16.mxu0 %v5951
    %6378 = vmatmul.mubr.bf16.gmra.mxu0 %v5950
    %v6379 = vpop.f32.mrf.mxu0
    %v6380 = vadd.f32 %v6283, %v6379
    %v6381 = vpop.f32.mrf.mxu0
    %v6382 = vpop.f32.mrf.mxu0
    %v6383 = vadd.f32 %v6286, %v6382
    %v6384 = vpop.f32.mrf.mxu0
    %6385 = vmatprep.mubr.bf16.mxu0 %v5964
    %6386 = vmatmul.mubr.bf16.gmra.mxu0 %v5963
    %v6387 = vpop.f32.mrf.mxu0
    %v6388 = vadd.f32 %v6291, %v6387
    %v6389 = vpop.f32.mrf.mxu0
    %v6390 = vpop.f32.mrf.mxu0
    %v6391 = vadd.f32 %v6294, %v6390
    %v6392 = vpop.f32.mrf.mxu0
    %6393 = vmatprep.mubr.bf16.mxu0 %v5977
    %6394 = vmatmul.mubr.bf16.gmra.mxu0 %v5976
    %v6395 = vpop.f32.mrf.mxu0
    %v6396 = vadd.f32 %v6299, %v6395
    %v6397 = vpop.f32.mrf.mxu0
    %v6398 = vpop.f32.mrf.mxu0
    %v6399 = vadd.f32 %v6302, %v6398
    %v6400 = vpop.f32.mrf.mxu0
    %6401 = vmatprep.mubr.bf16.mxu0 %v5990
    %6402 = vmatmul.mubr.bf16.gmra.mxu0 %v5989
    %v6403 = vpop.f32.mrf.mxu0
    %v6404 = vadd.f32 %v6307, %v6403
    %v6405 = vpop.f32.mrf.mxu0
    %v6406 = vpop.f32.mrf.mxu0
    %v6407 = vadd.f32 %v6310, %v6406
    %v6408 = vpop.f32.mrf.mxu0
    %6409 = vdwg.mxu0
    %6410 = vmatprep.subr.bf16.mxu0 0
    %6411 = vmatpush1.bf16.msra.mxu0 %v5419
    %6412 = vmatprep.subr.bf16.mxu0 0
    %6413 = vmatpush1.bf16.msra.mxu0 %v5418
    %6414 = vmatprep.subr.bf16.mxu0 0
    %6415 = vmatpush1.bf16.msra.mxu0 %v5417
    %6416 = vmatprep.subr.bf16.mxu0 0
    %6417 = vmatpush1.bf16.msra.mxu0 %v5416
    %6418 = vmatprep.subr.bf16.mxu0 0
    %6419 = vmatpush1.bf16.msra.mxu0 %v5415
    %6420 = vmatprep.subr.bf16.mxu0 0
    %6421 = vmatpush1.bf16.msra.mxu0 %v5414
    %6422 = vmatprep.subr.bf16.mxu0 0
    %6423 = vmatpush1.bf16.msra.mxu0 %v5413
    %6424 = vmatprep.subr.bf16.mxu0 0
    %6425 = vmatpush1.bf16.msra.mxu0 %v5412
    %6426 = vmatprep.subr.bf16.mxu0 0
    %6427 = vmatpush2.bf16.msra.mxu0 %v5427
    %6428 = vmatprep.subr.bf16.mxu0 0
    %6429 = vmatpush2.bf16.msra.mxu0 %v5426
    %6430 = vmatprep.subr.bf16.mxu0 0
    %6431 = vmatpush2.bf16.msra.mxu0 %v5425
    %6432 = vmatprep.subr.bf16.mxu0 0
    %6433 = vmatpush2.bf16.msra.mxu0 %v5424
    %6434 = vmatprep.subr.bf16.mxu0 0
    %6435 = vmatpush2.bf16.msra.mxu0 %v5423
    %6436 = vmatprep.subr.bf16.mxu0 0
    %6437 = vmatpush2.bf16.msra.mxu0 %v5422
    %6438 = vmatprep.subr.bf16.mxu0 0
    %6439 = vmatpush2.bf16.msra.mxu0 %v5421
    %6440 = vmatprep.subr.bf16.mxu0 0
    %6441 = vmatpush2.bf16.msra.mxu0 %v5420
    %6442 = vmatprep.mubr.bf16.mxu0 %v5901
    %6443 = vmatmul.mubr.bf16.gmra.mxu0 %v5900
    %v6444 = vpop.f32.mrf.mxu0
    %v6445 = vadd.f32 %v6348, %v6444
    %v6446 = vpop.f32.mrf.mxu0
    %v6447 = vpop.f32.mrf.mxu0
    %v6448 = vadd.f32 %v6351, %v6447
    %v6449 = vpop.f32.mrf.mxu0
    %6450 = vmatprep.mubr.bf16.mxu0 %v5914
    %6451 = vmatmul.mubr.bf16.gmra.mxu0 %v5913
    %v6452 = vpop.f32.mrf.mxu0
    %v6453 = vadd.f32 %v6356, %v6452
    %v6454 = vpop.f32.mrf.mxu0
    %v6455 = vpop.f32.mrf.mxu0
    %v6456 = vadd.f32 %v6359, %v6455
    %v6457 = vpop.f32.mrf.mxu0
    %6458 = vmatprep.mubr.bf16.mxu0 %v5927
    %6459 = vmatmul.mubr.bf16.gmra.mxu0 %v5926
    %v6460 = vpop.f32.mrf.mxu0
    %v6461 = vadd.f32 %v6364, %v6460
    %v6462 = vpop.f32.mrf.mxu0
    %v6463 = vpop.f32.mrf.mxu0
    %v6464 = vadd.f32 %v6367, %v6463
    %v6465 = vpop.f32.mrf.mxu0
    %6466 = vmatprep.mubr.bf16.mxu0 %v5940
    %6467 = vmatmul.mubr.bf16.gmra.mxu0 %v5939
    %v6468 = vpop.f32.mrf.mxu0
    %v6469 = vadd.f32 %v6372, %v6468
    %v6470 = vpop.f32.mrf.mxu0
    %v6471 = vpop.f32.mrf.mxu0
    %v6472 = vadd.f32 %v6375, %v6471
    %v6473 = vpop.f32.mrf.mxu0
    %6474 = vmatprep.mubr.bf16.mxu0 %v5953
    %6475 = vmatmul.mubr.bf16.gmra.mxu0 %v5952
    %v6476 = vpop.f32.mrf.mxu0
    %v6477 = vadd.f32 %v6380, %v6476
    %v6478 = vpop.f32.mrf.mxu0
    %v6479 = vpop.f32.mrf.mxu0
    %v6480 = vadd.f32 %v6383, %v6479
    %v6481 = vpop.f32.mrf.mxu0
    %6482 = vmatprep.mubr.bf16.mxu0 %v5966
    %6483 = vmatmul.mubr.bf16.gmra.mxu0 %v5965
    %v6484 = vpop.f32.mrf.mxu0
    %v6485 = vadd.f32 %v6388, %v6484
    %v6486 = vpop.f32.mrf.mxu0
    %v6487 = vpop.f32.mrf.mxu0
    %v6488 = vadd.f32 %v6391, %v6487
    %v6489 = vpop.f32.mrf.mxu0
    %6490 = vmatprep.mubr.bf16.mxu0 %v5979
    %6491 = vmatmul.mubr.bf16.gmra.mxu0 %v5978
    %v6492 = vpop.f32.mrf.mxu0
    %v6493 = vadd.f32 %v6396, %v6492
    %v6494 = vpop.f32.mrf.mxu0
    %v6495 = vpop.f32.mrf.mxu0
    %v6496 = vadd.f32 %v6399, %v6495
    %v6497 = vpop.f32.mrf.mxu0
    %6498 = vmatprep.mubr.bf16.mxu0 %v5992
    %6499 = vmatmul.mubr.bf16.gmra.mxu0 %v5991
    %v6500 = vpop.f32.mrf.mxu0
    %v6501 = vadd.f32 %v6404, %v6500
    %v6502 = vpop.f32.mrf.mxu0
    %v6503 = vpop.f32.mrf.mxu0
    %v6504 = vadd.f32 %v6407, %v6503
    %v6505 = vpop.f32.mrf.mxu0
    %6506 = vdwg.mxu0
    %6507 = vmatprep.subr.bf16.mxu0 0
    %6508 = vmatpush1.bf16.msra.mxu0 %v5435
    %6509 = vmatprep.subr.bf16.mxu0 0
    %6510 = vmatpush1.bf16.msra.mxu0 %v5434
    %6511 = vmatprep.subr.bf16.mxu0 0
    %6512 = vmatpush1.bf16.msra.mxu0 %v5433
    %6513 = vmatprep.subr.bf16.mxu0 0
    %6514 = vmatpush1.bf16.msra.mxu0 %v5432
    %6515 = vmatprep.subr.bf16.mxu0 0
    %6516 = vmatpush1.bf16.msra.mxu0 %v5431
    %6517 = vmatprep.subr.bf16.mxu0 0
    %6518 = vmatpush1.bf16.msra.mxu0 %v5430
    %6519 = vmatprep.subr.bf16.mxu0 0
    %6520 = vmatpush1.bf16.msra.mxu0 %v5429
    %6521 = vmatprep.subr.bf16.mxu0 0
    %6522 = vmatpush1.bf16.msra.mxu0 %v5428
    %6523 = vmatprep.subr.bf16.mxu0 0
    %6524 = vmatpush2.bf16.msra.mxu0 %v5443
    %6525 = vmatprep.subr.bf16.mxu0 0
    %6526 = vmatpush2.bf16.msra.mxu0 %v5442
    %6527 = vmatprep.subr.bf16.mxu0 0
    %6528 = vmatpush2.bf16.msra.mxu0 %v5441
    %6529 = vmatprep.subr.bf16.mxu0 0
    %6530 = vmatpush2.bf16.msra.mxu0 %v5440
    %6531 = vmatprep.subr.bf16.mxu0 0
    %6532 = vmatpush2.bf16.msra.mxu0 %v5439
    %6533 = vmatprep.subr.bf16.mxu0 0
    %6534 = vmatpush2.bf16.msra.mxu0 %v5438
    %6535 = vmatprep.subr.bf16.mxu0 0
    %6536 = vmatpush2.bf16.msra.mxu0 %v5437
    %6537 = vmatprep.subr.bf16.mxu0 0
    %6538 = vmatpush2.bf16.msra.mxu0 %v5436
    %6539 = vmatprep.mubr.bf16.mxu0 %v5903
    %6540 = vmatmul.mubr.bf16.gmra.mxu0 %v5902
    %v6541 = vpop.f32.mrf.mxu0
    %v6542 = vadd.f32 %v6445, %v6541
    %v6543 = vpop.f32.mrf.mxu0
    %v6544 = vpop.f32.mrf.mxu0
    %v6545 = vadd.f32 %v6448, %v6544
    %v6546 = vpop.f32.mrf.mxu0
    %6547 = vmatprep.mubr.bf16.mxu0 %v5916
    %6548 = vmatmul.mubr.bf16.gmra.mxu0 %v5915
    %v6549 = vpop.f32.mrf.mxu0
    %v6550 = vadd.f32 %v6453, %v6549
    %v6551 = vpop.f32.mrf.mxu0
    %v6552 = vpop.f32.mrf.mxu0
    %v6553 = vadd.f32 %v6456, %v6552
    %v6554 = vpop.f32.mrf.mxu0
    %6555 = vmatprep.mubr.bf16.mxu0 %v5929
    %6556 = vmatmul.mubr.bf16.gmra.mxu0 %v5928
    %v6557 = vpop.f32.mrf.mxu0
    %v6558 = vadd.f32 %v6461, %v6557
    %v6559 = vpop.f32.mrf.mxu0
    %v6560 = vpop.f32.mrf.mxu0
    %v6561 = vadd.f32 %v6464, %v6560
    %v6562 = vpop.f32.mrf.mxu0
    %6563 = vmatprep.mubr.bf16.mxu0 %v5942
    %6564 = vmatmul.mubr.bf16.gmra.mxu0 %v5941
    %v6565 = vpop.f32.mrf.mxu0
    %v6566 = vadd.f32 %v6469, %v6565
    %v6567 = vpop.f32.mrf.mxu0
    %v6568 = vpop.f32.mrf.mxu0
    %v6569 = vadd.f32 %v6472, %v6568
    %v6570 = vpop.f32.mrf.mxu0
    %6571 = vmatprep.mubr.bf16.mxu0 %v5955
    %6572 = vmatmul.mubr.bf16.gmra.mxu0 %v5954
    %v6573 = vpop.f32.mrf.mxu0
    %v6574 = vadd.f32 %v6477, %v6573
    %v6575 = vpop.f32.mrf.mxu0
    %v6576 = vpop.f32.mrf.mxu0
    %v6577 = vadd.f32 %v6480, %v6576
    %v6578 = vpop.f32.mrf.mxu0
    %6579 = vmatprep.mubr.bf16.mxu0 %v5968
    %6580 = vmatmul.mubr.bf16.gmra.mxu0 %v5967
    %v6581 = vpop.f32.mrf.mxu0
    %v6582 = vadd.f32 %v6485, %v6581
    %v6583 = vpop.f32.mrf.mxu0
    %v6584 = vpop.f32.mrf.mxu0
    %v6585 = vadd.f32 %v6488, %v6584
    %v6586 = vpop.f32.mrf.mxu0
    %6587 = vmatprep.mubr.bf16.mxu0 %v5981
    %6588 = vmatmul.mubr.bf16.gmra.mxu0 %v5980
    %v6589 = vpop.f32.mrf.mxu0
    %v6590 = vadd.f32 %v6493, %v6589
    %v6591 = vpop.f32.mrf.mxu0
    %v6592 = vpop.f32.mrf.mxu0
    %v6593 = vadd.f32 %v6496, %v6592
    %v6594 = vpop.f32.mrf.mxu0
    %6595 = vmatprep.mubr.bf16.mxu0 %v5994
    %6596 = vmatmul.mubr.bf16.gmra.mxu0 %v5993
    %v6597 = vpop.f32.mrf.mxu0
    %v6598 = vadd.f32 %v6501, %v6597
    %v6599 = vpop.f32.mrf.mxu0
    %v6600 = vpop.f32.mrf.mxu0
    %v6601 = vadd.f32 %v6504, %v6600
    %v6602 = vpop.f32.mrf.mxu0
    %6603 = vdwg.mxu0
    %6604 = vmatprep.subr.bf16.mxu0 0
    %6605 = vmatpush1.bf16.msra.mxu0 %v5451
    %6606 = vmatprep.subr.bf16.mxu0 0
    %6607 = vmatpush1.bf16.msra.mxu0 %v5450
    %6608 = vmatprep.subr.bf16.mxu0 0
    %6609 = vmatpush1.bf16.msra.mxu0 %v5449
    %6610 = vmatprep.subr.bf16.mxu0 0
    %6611 = vmatpush1.bf16.msra.mxu0 %v5448
    %6612 = vmatprep.subr.bf16.mxu0 0
    %6613 = vmatpush1.bf16.msra.mxu0 %v5447
    %6614 = vmatprep.subr.bf16.mxu0 0
    %6615 = vmatpush1.bf16.msra.mxu0 %v5446
    %6616 = vmatprep.subr.bf16.mxu0 0
    %6617 = vmatpush1.bf16.msra.mxu0 %v5445
    %6618 = vmatprep.subr.bf16.mxu0 0
    %6619 = vmatpush1.bf16.msra.mxu0 %v5444
    %6620 = vmatprep.subr.bf16.mxu0 0
    %6621 = vmatpush2.bf16.msra.mxu0 %v5459
    %6622 = vmatprep.subr.bf16.mxu0 0
    %6623 = vmatpush2.bf16.msra.mxu0 %v5458
    %6624 = vmatprep.subr.bf16.mxu0 0
    %6625 = vmatpush2.bf16.msra.mxu0 %v5457
    %6626 = vmatprep.subr.bf16.mxu0 0
    %6627 = vmatpush2.bf16.msra.mxu0 %v5456
    %6628 = vmatprep.subr.bf16.mxu0 0
    %6629 = vmatpush2.bf16.msra.mxu0 %v5455
    %6630 = vmatprep.subr.bf16.mxu0 0
    %6631 = vmatpush2.bf16.msra.mxu0 %v5454
    %6632 = vmatprep.subr.bf16.mxu0 0
    %6633 = vmatpush2.bf16.msra.mxu0 %v5453
    %6634 = vmatprep.subr.bf16.mxu0 0
    %6635 = vmatpush2.bf16.msra.mxu0 %v5452
    %6636 = vmatprep.mubr.bf16.mxu0 %v5905
    %6637 = vmatmul.mubr.bf16.gmra.mxu0 %v5904
    %v6638 = vpop.f32.mrf.mxu0
    %v6639 = vadd.f32 %v6542, %v6638
    %v6640 = vpop.f32.mrf.mxu0
    %v6641 = vpop.f32.mrf.mxu0
    %v6642 = vadd.f32 %v6545, %v6641
    %v6643 = vpop.f32.mrf.mxu0
    %6644 = vmatprep.mubr.bf16.mxu0 %v5918
    %6645 = vmatmul.mubr.bf16.gmra.mxu0 %v5917
    %v6646 = vpop.f32.mrf.mxu0
    %v6647 = vadd.f32 %v6550, %v6646
    %v6648 = vpop.f32.mrf.mxu0
    %v6649 = vpop.f32.mrf.mxu0
    %v6650 = vadd.f32 %v6553, %v6649
    %v6651 = vpop.f32.mrf.mxu0
    %6652 = vmatprep.mubr.bf16.mxu0 %v5931
    %6653 = vmatmul.mubr.bf16.gmra.mxu0 %v5930
    %v6654 = vpop.f32.mrf.mxu0
    %v6655 = vadd.f32 %v6558, %v6654
    %v6656 = vpop.f32.mrf.mxu0
    %v6657 = vpop.f32.mrf.mxu0
    %v6658 = vadd.f32 %v6561, %v6657
    %v6659 = vpop.f32.mrf.mxu0
    %6660 = vmatprep.mubr.bf16.mxu0 %v5944
    %6661 = vmatmul.mubr.bf16.gmra.mxu0 %v5943
    %v6662 = vpop.f32.mrf.mxu0
    %v6663 = vadd.f32 %v6566, %v6662
    %v6664 = vpop.f32.mrf.mxu0
    %v6665 = vpop.f32.mrf.mxu0
    %v6666 = vadd.f32 %v6569, %v6665
    %v6667 = vpop.f32.mrf.mxu0
    %6668 = vmatprep.mubr.bf16.mxu0 %v5957
    %6669 = vmatmul.mubr.bf16.gmra.mxu0 %v5956
    %v6670 = vpop.f32.mrf.mxu0
    %v6671 = vadd.f32 %v6574, %v6670
    %v6672 = vpop.f32.mrf.mxu0
    %v6673 = vpop.f32.mrf.mxu0
    %v6674 = vadd.f32 %v6577, %v6673
    %v6675 = vpop.f32.mrf.mxu0
    %6676 = vmatprep.mubr.bf16.mxu0 %v5970
    %6677 = vmatmul.mubr.bf16.gmra.mxu0 %v5969
    %v6678 = vpop.f32.mrf.mxu0
    %v6679 = vadd.f32 %v6582, %v6678
    %v6680 = vpop.f32.mrf.mxu0
    %v6681 = vpop.f32.mrf.mxu0
    %v6682 = vadd.f32 %v6585, %v6681
    %v6683 = vpop.f32.mrf.mxu0
    %6684 = vmatprep.mubr.bf16.mxu0 %v5983
    %6685 = vmatmul.mubr.bf16.gmra.mxu0 %v5982
    %v6686 = vpop.f32.mrf.mxu0
    %v6687 = vadd.f32 %v6590, %v6686
    %v6688 = vpop.f32.mrf.mxu0
    %v6689 = vpop.f32.mrf.mxu0
    %v6690 = vadd.f32 %v6593, %v6689
    %v6691 = vpop.f32.mrf.mxu0
    %6692 = vmatprep.mubr.bf16.mxu0 %v5996
    %6693 = vmatmul.mubr.bf16.gmra.mxu0 %v5995
    %v6694 = vpop.f32.mrf.mxu0
    %v6695 = vadd.f32 %v6598, %v6694
    %v6696 = vpop.f32.mrf.mxu0
    %v6697 = vpop.f32.mrf.mxu0
    %v6698 = vadd.f32 %v6601, %v6697
    %v6699 = vpop.f32.mrf.mxu0
    %6700 = vdwg.mxu0
    %6701 = vmatprep.subr.bf16.mxu0 0
    %6702 = vmatpush1.bf16.msra.mxu0 0
    %6703 = vmatprep.subr.bf16.mxu0 0
    %6704 = vmatpush1.bf16.msra.mxu0 0
    %6705 = vmatprep.subr.bf16.mxu0 0
    %6706 = vmatpush1.bf16.msra.mxu0 0
    %6707 = vmatprep.subr.bf16.mxu0 0
    %6708 = vmatpush1.bf16.msra.mxu0 0
    %6709 = vmatprep.subr.bf16.mxu0 0
    %6710 = vmatpush1.bf16.msra.mxu0 0
    %6711 = vmatprep.subr.bf16.mxu0 0
    %6712 = vmatpush1.bf16.msra.mxu0 0
    %6713 = vmatprep.subr.bf16.mxu0 0
    %6714 = vmatpush1.bf16.msra.mxu0 %v5461
    %6715 = vmatprep.subr.bf16.mxu0 0
    %6716 = vmatpush1.bf16.msra.mxu0 %v5460
    %6717 = vmatprep.subr.bf16.mxu0 0
    %6718 = vmatpush2.bf16.msra.mxu0 0
    %6719 = vmatprep.subr.bf16.mxu0 0
    %6720 = vmatpush2.bf16.msra.mxu0 0
    %6721 = vmatprep.subr.bf16.mxu0 0
    %6722 = vmatpush2.bf16.msra.mxu0 0
    %6723 = vmatprep.subr.bf16.mxu0 0
    %6724 = vmatpush2.bf16.msra.mxu0 0
    %6725 = vmatprep.subr.bf16.mxu0 0
    %6726 = vmatpush2.bf16.msra.mxu0 0
    %6727 = vmatprep.subr.bf16.mxu0 0
    %6728 = vmatpush2.bf16.msra.mxu0 0
    %6729 = vmatprep.subr.bf16.mxu0 0
    %6730 = vmatpush2.bf16.msra.mxu0 0
    %6731 = vmatprep.subr.bf16.mxu0 0
    %6732 = vmatpush2.bf16.msra.mxu0 0
    %6733 = vmatprep.mubr.bf16.mxu0 0
    %6734 = vmatmul.mubr.bf16.gmra.mxu0 %v6096
    %v6735 = vpop.f32.mrf.mxu0
    %v6736 = vadd.f32 %v6639, %v6735
    %v6737 = vpop.f32.mrf.mxu0
    %v6738 = vpop.f32.mrf.mxu0
    %v6739 = vadd.f32 %v6642, %v6738
    %v6740 = vpop.f32.mrf.mxu0
    %6741 = vmatprep.mubr.bf16.mxu0 0
    %6742 = vmatmul.mubr.bf16.gmra.mxu0 %v6099
    %v6743 = vpop.f32.mrf.mxu0
    %v6744 = vadd.f32 %v6647, %v6743
    %v6745 = vpop.f32.mrf.mxu0
    %v6746 = vpop.f32.mrf.mxu0
    %v6747 = vadd.f32 %v6650, %v6746
    %v6748 = vpop.f32.mrf.mxu0
    %6749 = vmatprep.mubr.bf16.mxu0 0
    %6750 = vmatmul.mubr.bf16.gmra.mxu0 %v6102
    %v6751 = vpop.f32.mrf.mxu0
    %v6752 = vadd.f32 %v6655, %v6751
    %v6753 = vpop.f32.mrf.mxu0
    %v6754 = vpop.f32.mrf.mxu0
    %v6755 = vadd.f32 %v6658, %v6754
    %v6756 = vpop.f32.mrf.mxu0
    %6757 = vmatprep.mubr.bf16.mxu0 0
    %6758 = vmatmul.mubr.bf16.gmra.mxu0 %v6105
    %v6759 = vpop.f32.mrf.mxu0
    %v6760 = vadd.f32 %v6663, %v6759
    %v6761 = vpop.f32.mrf.mxu0
    %v6762 = vpop.f32.mrf.mxu0
    %v6763 = vadd.f32 %v6666, %v6762
    %v6764 = vpop.f32.mrf.mxu0
    %6765 = vmatprep.mubr.bf16.mxu0 0
    %6766 = vmatmul.mubr.bf16.gmra.mxu0 %v6108
    %v6767 = vpop.f32.mrf.mxu0
    %v6768 = vadd.f32 %v6671, %v6767
    %v6769 = vpop.f32.mrf.mxu0
    %v6770 = vpop.f32.mrf.mxu0
    %v6771 = vadd.f32 %v6674, %v6770
    %v6772 = vpop.f32.mrf.mxu0
    %6773 = vmatprep.mubr.bf16.mxu0 0
    %6774 = vmatmul.mubr.bf16.gmra.mxu0 %v6111
    %v6775 = vpop.f32.mrf.mxu0
    %v6776 = vadd.f32 %v6679, %v6775
    %v6777 = vpop.f32.mrf.mxu0
    %v6778 = vpop.f32.mrf.mxu0
    %v6779 = vadd.f32 %v6682, %v6778
    %v6780 = vpop.f32.mrf.mxu0
    %6781 = vmatprep.mubr.bf16.mxu0 0
    %6782 = vmatmul.mubr.bf16.gmra.mxu0 %v6114
    %v6783 = vpop.f32.mrf.mxu0
    %v6784 = vadd.f32 %v6687, %v6783
    %v6785 = vpop.f32.mrf.mxu0
    %v6786 = vpop.f32.mrf.mxu0
    %v6787 = vadd.f32 %v6690, %v6786
    %v6788 = vpop.f32.mrf.mxu0
    %6789 = vmatprep.mubr.bf16.mxu0 0
    %6790 = vmatmul.mubr.bf16.gmra.mxu0 %v6117
    %v6791 = vpop.f32.mrf.mxu0
    %v6792 = vadd.f32 %v6695, %v6791
    %v6793 = vpop.f32.mrf.mxu0
    %v6794 = vpop.f32.mrf.mxu0
    %v6795 = vadd.f32 %v6698, %v6794
    %v6796 = vpop.f32.mrf.mxu0
    %6797 = vdwg.mxu0
    %v6830 = vunpack.c.l.b16 %v66
    %v6831 = vunpack.c.h.b16 %v66
    %v6832 = vunpack.c.l.b16 %v67
    %v6833 = vunpack.c.l.b16 %v68
    %v6834 = vunpack.c.h.b16 %v68
    %v6835 = vunpack.c.l.b16 %v69
    %v6836 = vunpack.c.l.b16 %v70
    %v6837 = vunpack.c.h.b16 %v70
    %v6838 = vunpack.c.l.b16 %v71
    %v6839 = vunpack.c.l.b16 %v72
    %v6840 = vunpack.c.h.b16 %v72
    %v6841 = vunpack.c.l.b16 %v73
    %v6842 = vunpack.c.l.b16 %v74
    %v6843 = vunpack.c.h.b16 %v74
    %v6844 = vunpack.c.l.b16 %v75
    %v6845 = vunpack.c.l.b16 %v76
    %v6846 = vunpack.c.h.b16 %v76
    %v6847 = vunpack.c.l.b16 %v77
    %v6848 = vunpack.c.l.b16 %v78
    %v6849 = vunpack.c.h.b16 %v78
    %v6850 = vunpack.c.l.b16 %v79
    %v6851 = vunpack.c.l.b16 %v80
    %v6852 = vunpack.c.h.b16 %v80
    %v6853 = vunpack.c.l.b16 %v81
    %v6854 = vunpack.c.l.b16 %v82
    %v6855 = vunpack.c.h.b16 %v82
    %v6856 = vunpack.c.l.b16 %v83
    %v6857 = vunpack.c.l.b16 %v84
    %v6858 = vunpack.c.h.b16 %v84
    %v6859 = vunpack.c.l.b16 %v85
    %v6860 = vunpack.c.l.b16 %v86
    %v6861 = vunpack.c.h.b16 %v86
    %v6862 = vunpack.c.l.b16 %v87
    %v6863 = vunpack.c.l.b16 %v88
    %v6864 = vunpack.c.h.b16 %v88
    %v6865 = vunpack.c.l.b16 %v89
    %v6866 = vunpack.c.l.b16 %v90
    %v6867 = vunpack.c.h.b16 %v90
    %v6868 = vunpack.c.l.b16 %v91
    %v6869 = vunpack.c.l.b16 %v92
    %v6870 = vunpack.c.h.b16 %v92
    %v6871 = vunpack.c.l.b16 %v93
    %v6872 = vunpack.c.l.b16 %v94
    %v6873 = vunpack.c.h.b16 %v94
    %v6874 = vunpack.c.l.b16 %v95
    %v6875 = vunpack.c.l.b16 %v96
    %v6876 = vunpack.c.h.b16 %v96
    %v6877 = vunpack.c.l.b16 %v97
    %v6878 = vpack.c.b16 %v6833, %v6830
    %v6879 = vpack.c.b16 %v6834, %v6831
    %v6880 = vpack.c.b16 %v6835, %v6832
    %v6881 = vpack.c.b16 %v6839, %v6836
    %v6882 = vpack.c.b16 %v6840, %v6837
    %v6883 = vpack.c.b16 %v6841, %v6838
    %v6884 = vpack.c.b16 %v6845, %v6842
    %v6885 = vpack.c.b16 %v6846, %v6843
    %v6886 = vpack.c.b16 %v6847, %v6844
    %v6887 = vpack.c.b16 %v6851, %v6848
    %v6888 = vpack.c.b16 %v6852, %v6849
    %v6889 = vpack.c.b16 %v6853, %v6850
    %v6890 = vpack.c.b16 %v6857, %v6854
    %v6891 = vpack.c.b16 %v6858, %v6855
    %v6892 = vpack.c.b16 %v6859, %v6856
    %v6893 = vpack.c.b16 %v6863, %v6860
    %v6894 = vpack.c.b16 %v6864, %v6861
    %v6895 = vpack.c.b16 %v6865, %v6862
    %v6896 = vpack.c.b16 %v6869, %v6866
    %v6897 = vpack.c.b16 %v6870, %v6867
    %v6898 = vpack.c.b16 %v6871, %v6868
    %v6899 = vpack.c.b16 %v6875, %v6872
    %v6900 = vpack.c.b16 %v6876, %v6873
    %v6901 = vpack.c.b16 %v6877, %v6874
    %v6919 = vsel %vm3235, %v6880, 0
    %v6922 = vsel %vm3235, %v6883, 0
    %v6925 = vsel %vm3235, %v6886, 0
    %v6928 = vsel %vm3235, %v6889, 0
    %v6931 = vsel %vm3235, %v6892, 0
    %v6934 = vsel %vm3235, %v6895, 0
    %v6937 = vsel %vm3235, %v6898, 0
    %v6940 = vsel %vm3235, %v6901, 0
    %6942 = vmatprep.subr.bf16.mxu0 0
    %6943 = vmatpush1.bf16.msra.mxu0 %v3209
    %6944 = vmatprep.subr.bf16.mxu0 0
    %6945 = vmatpush1.bf16.msra.mxu0 %v3208
    %6946 = vmatprep.subr.bf16.mxu0 0
    %6947 = vmatpush1.bf16.msra.mxu0 %v3207
    %6948 = vmatprep.subr.bf16.mxu0 0
    %6949 = vmatpush1.bf16.msra.mxu0 %v3206
    %6950 = vmatprep.subr.bf16.mxu0 0
    %6951 = vmatpush1.bf16.msra.mxu0 %v3205
    %6952 = vmatprep.subr.bf16.mxu0 0
    %6953 = vmatpush1.bf16.msra.mxu0 %v3204
    %6954 = vmatprep.subr.bf16.mxu0 0
    %6955 = vmatpush1.bf16.msra.mxu0 %v3203
    %6956 = vmatprep.subr.bf16.mxu0 0
    %6957 = vmatpush1.bf16.msra.mxu0 %v3202
    %6958 = vmatprep.subr.bf16.mxu0 0
    %6959 = vmatpush2.bf16.msra.mxu0 %v3217
    %6960 = vmatprep.subr.bf16.mxu0 0
    %6961 = vmatpush2.bf16.msra.mxu0 %v3216
    %6962 = vmatprep.subr.bf16.mxu0 0
    %6963 = vmatpush2.bf16.msra.mxu0 %v3215
    %6964 = vmatprep.subr.bf16.mxu0 0
    %6965 = vmatpush2.bf16.msra.mxu0 %v3214
    %6966 = vmatprep.subr.bf16.mxu0 0
    %6967 = vmatpush2.bf16.msra.mxu0 %v3213
    %6968 = vmatprep.subr.bf16.mxu0 0
    %6969 = vmatpush2.bf16.msra.mxu0 %v3212
    %6970 = vmatprep.subr.bf16.mxu0 0
    %6971 = vmatpush2.bf16.msra.mxu0 %v3211
    %6972 = vmatprep.subr.bf16.mxu0 0
    %6973 = vmatpush2.bf16.msra.mxu0 %v3210
    %6974 = vmatprep.mubr.bf16.mxu0 %v6879
    %6975 = vmatmul.mubr.bf16.gmra.mxu0 %v6878
    %v6976 = vpop.f32.mrf.mxu0
    %v6977 = vadd.f32 %v6736, %v6976
    %v6978 = vpop.f32.mrf.mxu0
    %v6979 = vpop.f32.mrf.mxu0
    %v6980 = vadd.f32 %v6739, %v6979
    %v6981 = vpop.f32.mrf.mxu0
    %6982 = vmatprep.mubr.bf16.mxu0 %v6882
    %6983 = vmatmul.mubr.bf16.gmra.mxu0 %v6881
    %v6984 = vpop.f32.mrf.mxu0
    %v6985 = vadd.f32 %v6744, %v6984
    %v6986 = vpop.f32.mrf.mxu0
    %v6987 = vpop.f32.mrf.mxu0
    %v6988 = vadd.f32 %v6747, %v6987
    %v6989 = vpop.f32.mrf.mxu0
    %6990 = vmatprep.mubr.bf16.mxu0 %v6885
    %6991 = vmatmul.mubr.bf16.gmra.mxu0 %v6884
    %v6992 = vpop.f32.mrf.mxu0
    %v6993 = vadd.f32 %v6752, %v6992
    %v6994 = vpop.f32.mrf.mxu0
    %v6995 = vpop.f32.mrf.mxu0
    %v6996 = vadd.f32 %v6755, %v6995
    %v6997 = vpop.f32.mrf.mxu0
    %6998 = vmatprep.mubr.bf16.mxu0 %v6888
    %6999 = vmatmul.mubr.bf16.gmra.mxu0 %v6887
    %v7000 = vpop.f32.mrf.mxu0
    %v7001 = vadd.f32 %v6760, %v7000
    %v7002 = vpop.f32.mrf.mxu0
    %v7003 = vpop.f32.mrf.mxu0
    %v7004 = vadd.f32 %v6763, %v7003
    %v7005 = vpop.f32.mrf.mxu0
    %7006 = vmatprep.mubr.bf16.mxu0 %v6891
    %7007 = vmatmul.mubr.bf16.gmra.mxu0 %v6890
    %v7008 = vpop.f32.mrf.mxu0
    %v7009 = vadd.f32 %v6768, %v7008
    %v7010 = vpop.f32.mrf.mxu0
    %v7011 = vpop.f32.mrf.mxu0
    %v7012 = vadd.f32 %v6771, %v7011
    %v7013 = vpop.f32.mrf.mxu0
    %7014 = vmatprep.mubr.bf16.mxu0 %v6894
    %7015 = vmatmul.mubr.bf16.gmra.mxu0 %v6893
    %v7016 = vpop.f32.mrf.mxu0
    %v7017 = vadd.f32 %v6776, %v7016
    %v7018 = vpop.f32.mrf.mxu0
    %v7019 = vpop.f32.mrf.mxu0
    %v7020 = vadd.f32 %v6779, %v7019
    %v7021 = vpop.f32.mrf.mxu0
    %7022 = vmatprep.mubr.bf16.mxu0 %v6897
    %7023 = vmatmul.mubr.bf16.gmra.mxu0 %v6896
    %v7024 = vpop.f32.mrf.mxu0
    %v7025 = vadd.f32 %v6784, %v7024
    %v7026 = vpop.f32.mrf.mxu0
    %v7027 = vpop.f32.mrf.mxu0
    %v7028 = vadd.f32 %v6787, %v7027
    %v7029 = vpop.f32.mrf.mxu0
    %7030 = vmatprep.mubr.bf16.mxu0 %v6900
    %7031 = vmatmul.mubr.bf16.gmra.mxu0 %v6899
    %v7032 = vpop.f32.mrf.mxu0
    %v7033 = vadd.f32 %v6792, %v7032
    %v7034 = vpop.f32.mrf.mxu0
    %v7035 = vpop.f32.mrf.mxu0
    %v7036 = vadd.f32 %v6795, %v7035
    %v7037 = vpop.f32.mrf.mxu0
    %7038 = vdwg.mxu0
    %7039 = vmatprep.subr.bf16.mxu0 0
    %7040 = vmatpush1.bf16.msra.mxu0 0
    %7041 = vmatprep.subr.bf16.mxu0 0
    %7042 = vmatpush1.bf16.msra.mxu0 0
    %7043 = vmatprep.subr.bf16.mxu0 0
    %7044 = vmatpush1.bf16.msra.mxu0 0
    %7045 = vmatprep.subr.bf16.mxu0 0
    %7046 = vmatpush1.bf16.msra.mxu0 0
    %7047 = vmatprep.subr.bf16.mxu0 0
    %7048 = vmatpush1.bf16.msra.mxu0 0
    %7049 = vmatprep.subr.bf16.mxu0 0
    %7050 = vmatpush1.bf16.msra.mxu0 0
    %7051 = vmatprep.subr.bf16.mxu0 0
    %7052 = vmatpush1.bf16.msra.mxu0 0
    %7053 = vmatprep.subr.bf16.mxu0 0
    %7054 = vmatpush1.bf16.msra.mxu0 %v3532
    %7055 = vmatprep.subr.bf16.mxu0 0
    %7056 = vmatpush2.bf16.msra.mxu0 0
    %7057 = vmatprep.subr.bf16.mxu0 0
    %7058 = vmatpush2.bf16.msra.mxu0 0
    %7059 = vmatprep.subr.bf16.mxu0 0
    %7060 = vmatpush2.bf16.msra.mxu0 0
    %7061 = vmatprep.subr.bf16.mxu0 0
    %7062 = vmatpush2.bf16.msra.mxu0 0
    %7063 = vmatprep.subr.bf16.mxu0 0
    %7064 = vmatpush2.bf16.msra.mxu0 0
    %7065 = vmatprep.subr.bf16.mxu0 0
    %7066 = vmatpush2.bf16.msra.mxu0 0
    %7067 = vmatprep.subr.bf16.mxu0 0
    %7068 = vmatpush2.bf16.msra.mxu0 0
    %7069 = vmatprep.subr.bf16.mxu0 0
    %7070 = vmatpush2.bf16.msra.mxu0 0
    %7071 = vmatprep.mubr.bf16.mxu0 0
    %7072 = vmatmul.mubr.bf16.gmra.mxu0 %v6919
    %v7073 = vpop.f32.mrf.mxu0
    %v7074 = vadd.f32 %v6977, %v7073
    %v7075 = vpop.f32.mrf.mxu0
    %v7076 = vpop.f32.mrf.mxu0
    %v7077 = vadd.f32 %v6980, %v7076
    %v7078 = vpop.f32.mrf.mxu0
    %7079 = vmatprep.mubr.bf16.mxu0 0
    %7080 = vmatmul.mubr.bf16.gmra.mxu0 %v6922
    %v7081 = vpop.f32.mrf.mxu0
    %v7082 = vadd.f32 %v6985, %v7081
    %v7083 = vpop.f32.mrf.mxu0
    %v7084 = vpop.f32.mrf.mxu0
    %v7085 = vadd.f32 %v6988, %v7084
    %v7086 = vpop.f32.mrf.mxu0
    %7087 = vmatprep.mubr.bf16.mxu0 0
    %7088 = vmatmul.mubr.bf16.gmra.mxu0 %v6925
    %v7089 = vpop.f32.mrf.mxu0
    %v7090 = vadd.f32 %v6993, %v7089
    %v7091 = vpop.f32.mrf.mxu0
    %v7092 = vpop.f32.mrf.mxu0
    %v7093 = vadd.f32 %v6996, %v7092
    %v7094 = vpop.f32.mrf.mxu0
    %7095 = vmatprep.mubr.bf16.mxu0 0
    %7096 = vmatmul.mubr.bf16.gmra.mxu0 %v6928
    %v7097 = vpop.f32.mrf.mxu0
    %v7098 = vadd.f32 %v7001, %v7097
    %v7099 = vpop.f32.mrf.mxu0
    %v7100 = vpop.f32.mrf.mxu0
    %v7101 = vadd.f32 %v7004, %v7100
    %v7102 = vpop.f32.mrf.mxu0
    %7103 = vmatprep.mubr.bf16.mxu0 0
    %7104 = vmatmul.mubr.bf16.gmra.mxu0 %v6931
    %v7105 = vpop.f32.mrf.mxu0
    %v7106 = vadd.f32 %v7009, %v7105
    %v7107 = vpop.f32.mrf.mxu0
    %v7108 = vpop.f32.mrf.mxu0
    %v7109 = vadd.f32 %v7012, %v7108
    %v7110 = vpop.f32.mrf.mxu0
    %7111 = vmatprep.mubr.bf16.mxu0 0
    %7112 = vmatmul.mubr.bf16.gmra.mxu0 %v6934
    %v7113 = vpop.f32.mrf.mxu0
    %v7114 = vadd.f32 %v7017, %v7113
    %v7115 = vpop.f32.mrf.mxu0
    %v7116 = vpop.f32.mrf.mxu0
    %v7117 = vadd.f32 %v7020, %v7116
    %v7118 = vpop.f32.mrf.mxu0
    %7119 = vmatprep.mubr.bf16.mxu0 0
    %7120 = vmatmul.mubr.bf16.gmra.mxu0 %v6937
    %v7121 = vpop.f32.mrf.mxu0
    %v7122 = vadd.f32 %v7025, %v7121
    %v7123 = vpop.f32.mrf.mxu0
    %v7124 = vpop.f32.mrf.mxu0
    %v7125 = vadd.f32 %v7028, %v7124
    %v7126 = vpop.f32.mrf.mxu0
    %7127 = vmatprep.mubr.bf16.mxu0 0
    %7128 = vmatmul.mubr.bf16.gmra.mxu0 %v6940
    %v7129 = vpop.f32.mrf.mxu0
    %v7130 = vadd.f32 %v7033, %v7129
    %v7131 = vpop.f32.mrf.mxu0
    %v7132 = vpop.f32.mrf.mxu0
    %v7133 = vadd.f32 %v7036, %v7132
    %v7134 = vpop.f32.mrf.mxu0
    %7135 = vdwg.mxu0
    %v7136 = vld [vmem:[%s5] sm:$0xff]
    %v7137 = vld [vmem:[%s5 + $0x8] sm:$0xff]
    %v7138 = vld [vmem:[%s5 + $0x10] sm:$0xff]
    %v7139 = vld [vmem:[%s5 + $0x18] sm:$0xff]
    %v7140 = vld [vmem:[%s5 + $0x20] sm:$0xff]
    %v7141 = vld [vmem:[%s5 + $0x28] sm:$0xff]
    %v7142 = vld [vmem:[%s5 + $0x30] sm:$0xff]
    %v7143 = vld [vmem:[%s5 + $0x38] sm:$0xff]
    %v7144 = vld [vmem:[%s5 + $0x40] sm:$0xff]
    %v7145 = vld [vmem:[%s5 + $0x48] sm:$0xff]
    %v7146 = vld [vmem:[%s5 + $0x50] sm:$0xff]
    %v7147 = vld [vmem:[%s5 + $0x58] sm:$0xff]
    %v7148 = vld [vmem:[%s5 + $0x60] sm:$0xff]
    %v7149 = vld [vmem:[%s5 + $0x68] sm:$0xff]
    %v7150 = vld [vmem:[%s5 + $0x70] sm:$0xff]
    %v7151 = vld [vmem:[%s5 + $0x78] sm:$0xff]
    %7153 = vset.pattern.permute.xlu0 0
    %7154 = vperm.xlu0 %7153, %v7136
    %v7155 = vpop.permute.xlu0 %7154
    %7158 = vset.pattern.permute.xlu0 0
    %7159 = vperm.xlu0 %7158, %v7137
    %v7160 = vpop.permute.xlu0 %7159
    %7163 = vset.pattern.permute.xlu0 0
    %7164 = vperm.xlu0 %7163, %v7138
    %v7165 = vpop.permute.xlu0 %7164
    %7168 = vset.pattern.permute.xlu0 0
    %7169 = vperm.xlu0 %7168, %v7139
    %v7170 = vpop.permute.xlu0 %7169
    %7173 = vset.pattern.permute.xlu0 0
    %7174 = vperm.xlu0 %7173, %v7140
    %v7175 = vpop.permute.xlu0 %7174
    %7178 = vset.pattern.permute.xlu0 0
    %7179 = vperm.xlu0 %7178, %v7141
    %v7180 = vpop.permute.xlu0 %7179
    %7183 = vset.pattern.permute.xlu0 0
    %7184 = vperm.xlu0 %7183, %v7142
    %v7185 = vpop.permute.xlu0 %7184
    %7188 = vset.pattern.permute.xlu0 0
    %7189 = vperm.xlu0 %7188, %v7143
    %v7190 = vpop.permute.xlu0 %7189
    %7193 = vset.pattern.permute.xlu0 0
    %7194 = vperm.xlu0 %7193, %v7144
    %v7195 = vpop.permute.xlu0 %7194
    %7198 = vset.pattern.permute.xlu0 0
    %7199 = vperm.xlu0 %7198, %v7145
    %v7200 = vpop.permute.xlu0 %7199
    %7203 = vset.pattern.permute.xlu0 0
    %7204 = vperm.xlu0 %7203, %v7146
    %v7205 = vpop.permute.xlu0 %7204
    %7208 = vset.pattern.permute.xlu0 0
    %7209 = vperm.xlu0 %7208, %v7147
    %v7210 = vpop.permute.xlu0 %7209
    %7213 = vset.pattern.permute.xlu0 0
    %7214 = vperm.xlu0 %7213, %v7148
    %v7215 = vpop.permute.xlu0 %7214
    %7218 = vset.pattern.permute.xlu0 0
    %7219 = vperm.xlu0 %7218, %v7149
    %v7220 = vpop.permute.xlu0 %7219
    %7223 = vset.pattern.permute.xlu0 0
    %7224 = vperm.xlu0 %7223, %v7150
    %v7225 = vpop.permute.xlu0 %7224
    %7228 = vset.pattern.permute.xlu0 0
    %7229 = vperm.xlu0 %7228, %v7151
    %v7230 = vpop.permute.xlu0 %7229
    %v7232 = vadd.f32 %v7074, %v7155
    %v7233 = vadd.f32 %v7077, %v7160
    %v7234 = vadd.f32 %v7082, %v7165
    %v7235 = vadd.f32 %v7085, %v7170
    %v7236 = vadd.f32 %v7090, %v7175
    %v7237 = vadd.f32 %v7093, %v7180
    %v7238 = vadd.f32 %v7098, %v7185
    %v7239 = vadd.f32 %v7101, %v7190
    %v7240 = vadd.f32 %v7106, %v7195
    %v7241 = vadd.f32 %v7109, %v7200
    %v7242 = vadd.f32 %v7114, %v7205
    %v7243 = vadd.f32 %v7117, %v7210
    %v7244 = vadd.f32 %v7122, %v7215
    %v7245 = vadd.f32 %v7125, %v7220
    %v7246 = vadd.f32 %v7130, %v7225
    %v7247 = vadd.f32 %v7133, %v7230
    %v7248 = vmax.f32 %v7232, 0.0
    %v7249 = vmax.f32 %v7233, 0.0
    %v7250 = vmax.f32 %v7234, 0.0
    %v7251 = vmax.f32 %v7235, 0.0
    %v7252 = vmax.f32 %v7236, 0.0
    %v7253 = vmax.f32 %v7237, 0.0
    %v7254 = vmax.f32 %v7238, 0.0
    %v7255 = vmax.f32 %v7239, 0.0
    %v7256 = vmax.f32 %v7240, 0.0
    %v7257 = vmax.f32 %v7241, 0.0
    %v7258 = vmax.f32 %v7242, 0.0
    %v7259 = vmax.f32 %v7243, 0.0
    %v7260 = vmax.f32 %v7244, 0.0
    %v7261 = vmax.f32 %v7245, 0.0
    %v7262 = vmax.f32 %v7246, 0.0
    %v7263 = vmax.f32 %v7247, 0.0
    %v7264 = vld [vmem:[%s6] sm:$0xff]
    %v7265 = vld [vmem:[%s6 + $0x8] sm:$0xff]
    %v7266 = vld [vmem:[%s6 + $0x10] sm:$0xff]
    %v7267 = vld [vmem:[%s6 + $0x18] sm:$0xff]
    %v7268 = vld [vmem:[%s6 + $0x20] sm:$0xff]
    %v7269 = vld [vmem:[%s6 + $0x28] sm:$0xff]
    %v7270 = vld [vmem:[%s6 + $0x30] sm:$0xff]
    %v7271 = vld [vmem:[%s6 + $0x38] sm:$0xff]
    %v7272 = vld [vmem:[%s6 + $0x40] sm:$0xff]
    %v7273 = vld [vmem:[%s6 + $0x48] sm:$0xff]
    %v7274 = vld [vmem:[%s6 + $0x50] sm:$0xff]
    %v7275 = vld [vmem:[%s6 + $0x58] sm:$0xff]
    %v7276 = vld [vmem:[%s6 + $0x60] sm:$0xff]
    %v7277 = vld [vmem:[%s6 + $0x68] sm:$0xff]
    %v7278 = vld [vmem:[%s6 + $0x70] sm:$0xff]
    %v7279 = vld [vmem:[%s6 + $0x78] sm:$0xff]
    %7281 = vset.pattern.permute.xlu0 0
    %7282 = vperm.xlu0 %7281, %v7264
    %v7283 = vpop.permute.xlu0 %7282
    %7286 = vset.pattern.permute.xlu0 0
    %7287 = vperm.xlu0 %7286, %v7265
    %v7288 = vpop.permute.xlu0 %7287
    %7291 = vset.pattern.permute.xlu0 0
    %7292 = vperm.xlu0 %7291, %v7266
    %v7293 = vpop.permute.xlu0 %7292
    %7296 = vset.pattern.permute.xlu0 0
    %7297 = vperm.xlu0 %7296, %v7267
    %v7298 = vpop.permute.xlu0 %7297
    %7301 = vset.pattern.permute.xlu0 0
    %7302 = vperm.xlu0 %7301, %v7268
    %v7303 = vpop.permute.xlu0 %7302
    %7306 = vset.pattern.permute.xlu0 0
    %7307 = vperm.xlu0 %7306, %v7269
    %v7308 = vpop.permute.xlu0 %7307
    %7311 = vset.pattern.permute.xlu0 0
    %7312 = vperm.xlu0 %7311, %v7270
    %v7313 = vpop.permute.xlu0 %7312
    %7316 = vset.pattern.permute.xlu0 0
    %7317 = vperm.xlu0 %7316, %v7271
    %v7318 = vpop.permute.xlu0 %7317
    %7321 = vset.pattern.permute.xlu0 0
    %7322 = vperm.xlu0 %7321, %v7272
    %v7323 = vpop.permute.xlu0 %7322
    %7326 = vset.pattern.permute.xlu0 0
    %7327 = vperm.xlu0 %7326, %v7273
    %v7328 = vpop.permute.xlu0 %7327
    %7331 = vset.pattern.permute.xlu0 0
    %7332 = vperm.xlu0 %7331, %v7274
    %v7333 = vpop.permute.xlu0 %7332
    %7336 = vset.pattern.permute.xlu0 0
    %7337 = vperm.xlu0 %7336, %v7275
    %v7338 = vpop.permute.xlu0 %7337
    %7341 = vset.pattern.permute.xlu0 0
    %7342 = vperm.xlu0 %7341, %v7276
    %v7343 = vpop.permute.xlu0 %7342
    %7346 = vset.pattern.permute.xlu0 0
    %7347 = vperm.xlu0 %7346, %v7277
    %v7348 = vpop.permute.xlu0 %7347
    %7351 = vset.pattern.permute.xlu0 0
    %7352 = vperm.xlu0 %7351, %v7278
    %v7353 = vpop.permute.xlu0 %7352
    %7356 = vset.pattern.permute.xlu0 0
    %7357 = vperm.xlu0 %7356, %v7279
    %v7358 = vpop.permute.xlu0 %7357
    %v7360 = vmul.f32 %v7248, %v7283
    %v7361 = vmul.f32 %v7249, %v7288
    %v7362 = vmul.f32 %v7250, %v7293
    %v7363 = vmul.f32 %v7251, %v7298
    %v7364 = vmul.f32 %v7252, %v7303
    %v7365 = vmul.f32 %v7253, %v7308
    %v7366 = vmul.f32 %v7254, %v7313
    %v7367 = vmul.f32 %v7255, %v7318
    %v7368 = vmul.f32 %v7256, %v7323
    %v7369 = vmul.f32 %v7257, %v7328
    %v7370 = vmul.f32 %v7258, %v7333
    %v7371 = vmul.f32 %v7259, %v7338
    %v7372 = vmul.f32 %v7260, %v7343
    %v7373 = vmul.f32 %v7261, %v7348
    %v7374 = vmul.f32 %v7262, %v7353
    %v7375 = vmul.f32 %v7263, %v7358
    %v7376 = vadd.f32 %v7360, %v7361
    %v7377 = vadd.f32 %v7376, %v7362
    %v7378 = vadd.f32 %v7377, %v7363
    %v7379 = vadd.f32 %v7378, %v7364
    %v7380 = vadd.f32 %v7379, %v7365
    %v7381 = vadd.f32 %v7380, %v7366
    %v7382 = vadd.f32 %v7381, %v7367
    %v7383 = vadd.f32 %v7382, %v7368
    %v7384 = vadd.f32 %v7383, %v7369
    %v7385 = vadd.f32 %v7384, %v7370
    %v7386 = vadd.f32 %v7385, %v7371
    %v7387 = vadd.f32 %v7386, %v7372
    %v7388 = vadd.f32 %v7387, %v7373
    %v7389 = vadd.f32 %v7388, %v7374
    %v7390 = vadd.f32 %v7389, %v7375
    %v7391 = vrot.slane %v7390, 4
    %v7392 = vadd.f32 %v7390, %v7391
    %v7393 = vrot.slane %v7392, 2
    %v7394 = vadd.f32 %v7392, %v7393
    %v7395 = vrot.slane %v7394, 1
    %v7396 = vadd.f32 %v7394, %v7395
    %v7397 = vld [vmem:[#allocation2] sm:$0x1]
    %7399 = vset.pattern.permute.xlu0 0
    %7400 = vperm.xlu0 %7399, %v7397
    %v7401 = vpop.permute.xlu0 %7400
    %v7403 = vlaneseq
    %v7404 = vshrl.u32 %v7403, 7
    %v7405 = vsub.s32 0, %v7404
    %v7406 = vrot.slane %v7401, %v7405
    %v7407 = vadd.f32 %v7396, %v7406
    %7408 = vst [vmem:[#allocation3] sm:$0x1] %v7407
    // Predicated region
    $region34: #{tpu_custom_call.1} parent=1 // pred_check
      _
    $region35: #{tpu_custom_call.1} parent=1 // pred_check_branch
      %7410 = sbr.rel (0) target = $region37
    $region36: #{tpu_custom_call.1} parent=1 // pred_region
      %s7412 = ssub.s32 16, 16
      %7413 = vsyncadd [#allocation4], %s7412
      %s7415 = sshll.u32 [#allocation3], 4
      %s7416 = int_to_ptr.vmem [resolvable:$true] %s7415
      %7418 = dma.vmem_to_hbm [thread:$0]  %s7416, 16, %s8, [#allocation4]
    $region37: #{tpu_custom_call.1} parent=1 // pred_fallthru
      _
    // Predicated region
    $region38: #{tpu_custom_call.1} parent=1 // pred_check
      _
    $region39: #{tpu_custom_call.1} parent=1 // pred_check_branch
      %7420 = sbr.rel (0) target = $region41
    $region40: #{tpu_custom_call.1} parent=1 // pred_region
      %7421 = dma.done [#allocation4], 16
    $region41: #{tpu_custom_call.1} parent=1 // pred_fallthru
      _
    %7422 = vsyncpa [#allocation4], 1

</llo_original>
